<compile_context>
chip_gen: v5e
topology: v5e:2x2
jax: 0.10.0
libtpu: 0.0.40
codegen_flags: <defaults>
</compile_context>

<pallas_src>
import functools

import jax
import jax.numpy as jnp
from jax import lax
from jax.experimental import pallas as pl
from jax.experimental.pallas import tpu as pltpu


# ---------------------------------------------------------------------------
# Kernel: fused double_conv = (3x3 conv -> BN(folded) -> ReLU) x 2
# ---------------------------------------------------------------------------
def _double_conv_kernel(x_ref, w1_ref, b1_ref, b2_ref, w2_hbm, out_ref,
                        w2_vmem, p2_ref, sem,
                        *, H, NH, KH, ph, PT, L0, WCo, K2, WCoh):
    """One conv2 output-lane half per grid step; batch folded into M = N*H.

    x_ref  : (NH, KH*K1)        bf16  pre-shifted conv1 input (taps folded in K)
    w1_ref : (KH*K1, WCo)       bf16  block-banded conv1 weight (BN1 folded)
    b1_ref : (1, WCo)           f32   conv1 bias (BN1 folded), tiled over w
    b2_ref : (1, WCoh)          f32   conv2 bias half
    w2_hbm : (NS, KH, K2, WCoh) bf16  banded conv2 weight halves, left in HBM
    out_ref: (NH, WCoh)         f32   lane-dense output half
    w2_vmem: (KH, K2, WCoh)     bf16  VMEM landing buffer for this step's half
    p2_ref : (PT+NH+ph, K2)     f32   zero-padded conv2 input scratch
    """
    # ---- kick off this half's conv2 weight fetch; it overlaps all of conv1 ---
    j = pl.program_id(0)
    w2_copy = pltpu.make_async_copy(w2_hbm.at[j], w2_vmem, sem.at[0])
    w2_copy.start()

    # ---- conv1 + BN1 + ReLU : ONE long-K MXU matmul -------------------------
    # K folds vertical taps, horizontal taps and input channels; M = N*H.
    y1 = jnp.dot(x_ref[...], w1_ref[...], preferred_element_type=jnp.float32)
    y1 = jnp.maximum(y1 + b1_ref[...], 0.0)                 # (NH, WCo) f32

    # ---- stage y1 into the conv2 scratch ------------------------------------
    # Zero only the pad stripes conv2 reads (top/bottom ph rows, left/right
    # horizontal-pad lanes); the interior is fully rewritten each step.
    p2_ref[PT - ph:PT, :] = jnp.zeros((ph, K2), jnp.float32)
    p2_ref[PT + NH:PT + NH + ph, :] = jnp.zeros((ph, K2), jnp.float32)
    p2_ref[PT:PT + NH, 0:L0] = jnp.zeros((NH, L0), jnp.float32)
    p2_ref[PT:PT + NH, L0 + WCo:K2] = jnp.zeros((NH, K2 - L0 - WCo), jnp.float32)
    p2_ref[PT:PT + NH, L0:L0 + WCo] = y1                    # (8,128)-aligned

    # Batch boundaries inside the flattened M = N*H dimension must behave like
    # conv zero padding for the off-centre vertical taps -> row-validity masks.
    row = lax.broadcasted_iota(jnp.int32, (NH, K2), 0) % H

    # ---- conv2 + BN2 + ReLU : wait for the weight half, then KH banded dots --
    w2_copy.wait()
    acc = jnp.zeros((NH, WCoh), jnp.float32)
    for dy in range(KH):                                     # static unroll
        lhs = p2_ref[PT - ph + dy:PT - ph + dy + NH, :]      # (NH, K2) f32
        off = dy - ph
        if off != 0:
            valid = jnp.logical_and(row >= -off, row < H - off)
            lhs = jnp.where(valid, lhs, 0.0)
        acc += jnp.dot(lhs.astype(jnp.bfloat16), w2_vmem[dy],
                       preferred_element_type=jnp.float32)
    out_ref[...] = jnp.maximum(acc + b2_ref[...], 0.0)


# ---------------------------------------------------------------------------
# Wrapper-side parameter preparation (tiny, one-off)
# ---------------------------------------------------------------------------
def _fold_bn(w, b, gamma, beta, mean, var, eps):
    """Fold an inference-mode BatchNorm into the preceding conv's weight/bias."""
    s = gamma / jnp.sqrt(var + eps)
    return w * s[:, None, None, None], s * (b - mean) + beta


def _banded_weight(w_oihw, n_cols, col_offset, out_w):
    """Block-banded matrix M with
       M[dy, b*Ci + ci, w*Co + co] = w[co, ci, dy, b - w - col_offset]
    whenever 0 <= b - w - col_offset < KW, else 0.  Shape (KH, n_cols*Ci, out_w*Co).
    """
    Co, Ci, KH, KW = w_oihw.shape
    wt = jnp.transpose(w_oihw, (2, 3, 1, 0))                # (KH, KW, Ci, Co)
    b_idx = jnp.arange(n_cols)[:, None]
    w_idx = jnp.arange(out_w)[None, :]
    dx = b_idx - w_idx - col_offset                         # (n_cols, out_w)
    valid = (dx >= 0) & (dx < KW)
    m = wt[:, jnp.clip(dx, 0, KW - 1)]                      # (KH, n_cols, out_w, Ci, Co)
    m = jnp.where(valid[None, :, :, None, None], m, 0.0)
    m = jnp.transpose(m, (0, 1, 3, 2, 4))                   # (KH, n_cols, Ci, out_w, Co)
    return m.reshape(KH, n_cols * Ci, out_w * Co)


@jax.jit
def inconv_forward(x_nchw, params, *, eps=1e-5):
    """inconv.forward (== double_conv) on NCHW input.  Returns NCHW f32."""
    # TODO(synk): training-mode BatchNorm (batch statistics + running-stat
    # updates) is not implemented; BN is applied in inference mode, folded
    # into the conv weights/biases (mathematically exact for eval()).
    (w1, b1, g1, be1, m1, v1), (w2, b2, g2, be2, m2, v2) = params
    N, C1, H, W = x_nchw.shape
    C2, _, KH, KW = w1.shape
    ph, pw = KH // 2, KW // 2
    WCo = W * C2
    NH = N * H

    assert WCo % 128 == 0, "W * out_ch must be a multiple of 128 lanes"
    assert H % 8 == 0
    NSPLIT = 2 if WCo % 256 == 0 else 1     # lane split keeps both v7x TCs busy
    WCoh = WCo // NSPLIT

    L0 = -(-(pw * C2) // 128) * 128         # interior lane offset (128-aligned)
    assert L0 % C2 == 0
    PLC = L0 // C2                          # left pad, in spatial columns
    PT = 8                                  # top pad (one f32 sublane tile)

    # Fold BN (inference) into the conv weights / biases.
    w1f, b1f = _fold_bn(w1, b1, g1, be1, m1, v1, eps)
    w2f, b2f = _fold_bn(w2, b2, g2, be2, m2, v2, eps)

    n_cols1 = W + 2 * pw
    n_cols2 = PLC + W + pw
    K1 = n_cols1 * C1
    K2 = n_cols2 * C2
    KHK1 = KH * K1

    # Banded weights: conv1 taps concatenated along K (one long-K matmul);
    # conv2 pre-split per output-lane half so each half is a contiguous DMA.
    wb1 = _banded_weight(w1f, n_cols1, 0, W).reshape(KHK1, WCo).astype(jnp.bfloat16)
    wb2 = _banded_weight(w2f, n_cols2, PLC - pw, W).astype(jnp.bfloat16)
    wb2s = wb2.reshape(KH, K2, NSPLIT, WCoh).transpose(2, 0, 1, 3)  # (NS,KH,K2,WCoh)
    bb1 = jnp.tile(b1f, W).reshape(1, WCo).astype(jnp.float32)
    bb2 = jnp.tile(b2f, W).reshape(1, WCo).astype(jnp.float32)

    # Input glue: NCHW -> NHWC, zero-pad, pre-shift the KH vertical taps into
    # K (tile-aligned in-kernel reads) and fold the batch into M = N*H.
    x_nhwc = jnp.transpose(x_nchw, (0, 2, 3, 1)).astype(jnp.float32)
    xpad = jnp.pad(x_nhwc, ((0, 0), (ph, ph), (pw, pw), (0, 0)))
    slabs = [xpad[:, dy:dy + H].reshape(N, H, K1) for dy in range(KH)]
    xcat = jnp.concatenate(slabs, axis=-1).reshape(NH, KHK1).astype(jnp.bfloat16)

    kernel = functools.partial(_double_conv_kernel, H=H, NH=NH, KH=KH, ph=ph,
                               PT=PT, L0=L0, WCo=WCo, K2=K2, WCoh=WCoh)

    out_flat = pl.pallas_call(
        kernel,
        out_shape=jax.ShapeDtypeStruct((NH, WCo), jnp.float32),
        grid=(NSPLIT,),
        in_specs=[
            pl.BlockSpec((NH, KHK1), lambda j: (0, 0)),      # pre-shifted input
            pl.BlockSpec((KHK1, WCo), lambda j: (0, 0)),     # banded w1 (long K)
            pl.BlockSpec((1, WCo), lambda j: (0, 0)),        # b1
            pl.BlockSpec((1, WCoh), lambda j: (0, j)),       # b2 half
            pl.BlockSpec(memory_space=pl.ANY),               # banded w2 halves (HBM)
        ],
        out_specs=pl.BlockSpec((NH, WCoh), lambda j: (0, j)),
        scratch_shapes=[
            pltpu.VMEM((KH, K2, WCoh), jnp.bfloat16),        # w2 half landing buf
            pltpu.VMEM((PT + NH + ph, K2), jnp.float32),     # conv2 padded input
            pltpu.SemaphoreType.DMA((1,)),
        ],
        compiler_params=pltpu.CompilerParams(
            dimension_semantics=("parallel",)),
    )(xcat, wb1, bb1, bb2, wb2s)

    # Output glue: (N*H, W*C2) -> NCHW.
    return jnp.transpose(out_flat.reshape(N, H, W, C2), (0, 3, 1, 2))


# ---------------------------------------------------------------------------
# Pure-JAX reference (f32, NCHW) replicating the PyTorch module in eval mode.
# ---------------------------------------------------------------------------
def _reference_forward(x, params, eps=1e-5):
    def stage(x, w, b, gamma, beta, mean, var):
        y = lax.conv_general_dilated(
            x, w, window_strides=(1, 1), padding=[(1, 1), (1, 1)],
            dimension_numbers=("NCHW", "OIHW", "NCHW"))
        y = y + b.reshape(1, -1, 1, 1)
        y = (y - mean.reshape(1, -1, 1, 1)) / jnp.sqrt(
            var.reshape(1, -1, 1, 1) + eps)
        y = gamma.reshape(1, -1, 1, 1) * y + beta.reshape(1, -1, 1, 1)
        return jnp.maximum(y, 0.0)

    for p in params:
        x = stage(x, *p)
    return x


if __name__ == "__main__":
    # inconv(in_ch=4, out_ch=32) on a (2, 4, 16, 16) input.
    N, IN_CH, OUT_CH, H, W = 2, 4, 32, 16, 16
    KS = 3

    key = jax.random.PRNGKey(0)
    k = jax.random.split(key, 13)

    x = jax.random.normal(k[0], (N, IN_CH, H, W), jnp.float32)

    def conv_init(kw, kb, ci, co):
        bound = 1.0 / jnp.sqrt(ci * KS * KS)
        w = jax.random.uniform(kw, (co, ci, KS, KS), jnp.float32, -bound, bound)
        b = jax.random.uniform(kb, (co,), jnp.float32, -bound, bound)
        return w, b

    def bn_init(kg, kb, km, kv, c):
        gamma = jax.random.uniform(kg, (c,), jnp.float32, 0.5, 1.5)
        beta = jax.random.uniform(kb, (c,), jnp.float32, -0.5, 0.5)
        mean = 0.1 * jax.random.normal(km, (c,), jnp.float32)
        var = jax.random.uniform(kv, (c,), jnp.float32, 0.5, 1.5)
        return gamma, beta, mean, var

    w1, b1 = conv_init(k[1], k[2], IN_CH, OUT_CH)
    g1, be1, m1, v1 = bn_init(k[3], k[4], k[5], k[6], OUT_CH)
    w2, b2 = conv_init(k[7], k[8], OUT_CH, OUT_CH)
    g2, be2, m2, v2 = bn_init(k[9], k[10], k[11], k[12], OUT_CH)

    params = ((w1, b1, g1, be1, m1, v1), (w2, b2, g2, be2, m2, v2))

    out = inconv_forward(x, params)
    jax.block_until_ready(out)

    ref = _reference_forward(x, params)
    assert out.shape == (N, OUT_CH, H, W)
    max_err = jnp.max(jnp.abs(out - ref))
    assert jnp.allclose(out, ref, atol=5e-2, rtol=5e-2), f"max abs err {max_err}"

    print("KERNEL_OK")
</pallas_src>

<mosaic_0001>
module attributes {stable_mosaic.version = 11 : i64} {
  func.func @_double_conv_kernel(%arg0: i32, %arg1: memref<32x216xbf16, #tpu.memory_space<vmem>>, %arg2: memref<216x512xbf16, #tpu.memory_space<vmem>>, %arg3: memref<1x512xf32, #tpu.memory_space<vmem>>, %arg4: memref<1x256xf32, #tpu.memory_space<vmem>>, %arg5: memref<2x3x672x256xbf16, #tpu.memory_space<any>>, %arg6: memref<32x256xf32, #tpu.memory_space<vmem>>, %arg7: memref<3x672x256xbf16, #tpu.memory_space<vmem>>, %arg8: memref<41x672xf32, #tpu.memory_space<vmem>>, %arg9: memref<1x!tpu.dma_semaphore, #tpu.memory_space<semaphore_mem>>) attributes {dimension_semantics = [#tpu.dimension_semantics<parallel>], iteration_bounds = array<i64: 2>, scalar_prefetch = 0 : i64, scratch_operands = 3 : i64, tpu.core_type = #tpu.core_type<tc>, window_params = [{pipeline_mode = #tpu.pipeline_mode<synchronous>, transform_indices = @transform_0, window_bounds = array<i64: 32, 216>}, {pipeline_mode = #tpu.pipeline_mode<synchronous>, transform_indices = @transform_1, window_bounds = array<i64: 216, 512>}, {pipeline_mode = #tpu.pipeline_mode<synchronous>, transform_indices = @transform_2, window_bounds = array<i64: 1, 512>}, {transform_indices = @transform_3, window_bounds = array<i64: 1, 256>}, {}, {transform_indices = @transform_5, window_bounds = array<i64: 32, 256>}]} {
    %c0_i32 = arith.constant 0 : i32
    %c0_i32_0 = arith.constant 0 : i32
    %c0_i32_1 = arith.constant 0 : i32
    %c0_i32_2 = arith.constant 0 : i32
    %0 = tpu.memref_slice %arg5[%arg0, %c0_i32_0, %c0_i32_1, %c0_i32_2] : memref<2x3x672x256xbf16, #tpu.memory_space<any>> -> memref<1x3x672x256xbf16, #tpu.memory_space<any>>
    %1 = tpu.memref_squeeze %0 : memref<1x3x672x256xbf16, #tpu.memory_space<any>> -> memref<3x672x256xbf16, #tpu.memory_space<any>>
    %2 = tpu.memref_slice %arg9[%c0_i32] : memref<1x!tpu.dma_semaphore, #tpu.memory_space<semaphore_mem>> -> memref<1x!tpu.dma_semaphore, #tpu.memory_space<semaphore_mem>>
    %3 = tpu.memref_squeeze %2 : memref<1x!tpu.dma_semaphore, #tpu.memory_space<semaphore_mem>> -> memref<!tpu.dma_semaphore, #tpu.memory_space<semaphore_mem>>
    tpu.enqueue_dma source(%1 : memref<3x672x256xbf16, #tpu.memory_space<any>>) target(%arg7 : memref<3x672x256xbf16, #tpu.memory_space<vmem>>) target_semaphore(%3 : memref<!tpu.dma_semaphore, #tpu.memory_space<semaphore_mem>>)
    %c0 = arith.constant 0 : index
    %c0_3 = arith.constant 0 : index
    %4 = vector.load %arg1[%c0, %c0_3] : memref<32x216xbf16, #tpu.memory_space<vmem>>, vector<32x216xbf16>
    %c0_4 = arith.constant 0 : index
    %c0_5 = arith.constant 0 : index
    %5 = vector.load %arg2[%c0_4, %c0_5] : memref<216x512xbf16, #tpu.memory_space<vmem>>, vector<216x512xbf16>
    %cst = arith.constant dense<0.000000e+00> : vector<32x512xf32>
    %6 = tpu.matmul %4, %5, %cst {dimension_numbers = #tpu.dot_dimension_numbers<[1], [0], [0], [1], [0, 0, 1, 1], [], []>} : vector<32x216xbf16>, vector<216x512xbf16>, vector<32x512xf32> -> vector<32x512xf32>
    %c0_6 = arith.constant 0 : index
    %c0_7 = arith.constant 0 : index
    %7 = vector.load %arg3[%c0_6, %c0_7] : memref<1x512xf32, #tpu.memory_space<vmem>>, vector<1x512xf32>
    %8 = vector.broadcast %7 : vector<1x512xf32> to vector<32x512xf32>
    %9 = arith.addf %6, %8 : vector<32x512xf32>
    %cst_8 = arith.constant 0.000000e+00 : f32
    %10 = vector.broadcast %cst_8 : f32 to vector<32x512xf32>
    %11 = arith.maximumf %9, %10 : vector<32x512xf32>
    %cst_9 = arith.constant 0.000000e+00 : f32
    %12 = vector.broadcast %cst_9 : f32 to vector<1x672xf32>
    %c7 = arith.constant 7 : index
    %c0_10 = arith.constant 0 : index
    %13 = vector.load %arg8[%c7, %c0_10] : memref<41x672xf32, #tpu.memory_space<vmem>>, vector<1x672xf32>
    tpu.vector_store %arg8[%c7, %c0_10], %12 {strides = array<i32>} : memref<41x672xf32, #tpu.memory_space<vmem>>, vector<1x672xf32>,
    %cst_11 = arith.constant 0.000000e+00 : f32
    %14 = vector.broadcast %cst_11 : f32 to vector<1x672xf32>
    %c40 = arith.constant 40 : index
    %c0_12 = arith.constant 0 : index
    %15 = vector.load %arg8[%c40, %c0_12] : memref<41x672xf32, #tpu.memory_space<vmem>>, vector<1x672xf32>
    tpu.vector_store %arg8[%c40, %c0_12], %14 {strides = array<i32>} : memref<41x672xf32, #tpu.memory_space<vmem>>, vector<1x672xf32>,
    %cst_13 = arith.constant 0.000000e+00 : f32
    %16 = vector.broadcast %cst_13 : f32 to vector<32x128xf32>
    %c8 = arith.constant 8 : index
    %c0_14 = arith.constant 0 : index
    %17 = vector.load %arg8[%c8, %c0_14] : memref<41x672xf32, #tpu.memory_space<vmem>>, vector<32x128xf32>
    tpu.vector_store %arg8[%c8, %c0_14], %16 {strides = array<i32>} : memref<41x672xf32, #tpu.memory_space<vmem>>, vector<32x128xf32>,
    %cst_15 = arith.constant 0.000000e+00 : f32
    %18 = vector.broadcast %cst_15 : f32 to vector<32x32xf32>
    %c8_16 = arith.constant 8 : index
    %c640 = arith.constant 640 : index
    %19 = vector.load %arg8[%c8_16, %c640] : memref<41x672xf32, #tpu.memory_space<vmem>>, vector<32x32xf32>
    tpu.vector_store %arg8[%c8_16, %c640], %18 {strides = array<i32>} : memref<41x672xf32, #tpu.memory_space<vmem>>, vector<32x32xf32>,
    %c8_17 = arith.constant 8 : index
    %c128 = arith.constant 128 : index
    %20 = vector.load %arg8[%c8_17, %c128] : memref<41x672xf32, #tpu.memory_space<vmem>>, vector<32x512xf32>
    tpu.vector_store %arg8[%c8_17, %c128], %11 {strides = array<i32>} : memref<41x672xf32, #tpu.memory_space<vmem>>, vector<32x512xf32>,
    %21 = tpu.iota {dimensions = array<i32: 0>} : vector<32x672xi32>
    %c16_i32 = arith.constant 16 : i32
    %c0_i32_18 = arith.constant 0 : i32
    %22 = arith.cmpi eq, %c16_i32, %c0_i32_18 : i32
    %c1_i32 = arith.constant 1 : i32
    %23 = arith.select %22, %c1_i32, %c16_i32 : i32
    %24 = vector.broadcast %23 : i32 to vector<32x672xi32>
    %25 = arith.remsi %21, %24 : vector<32x672xi32>
    %c0_i32_19 = arith.constant 0 : i32
    %26 = vector.broadcast %c0_i32_19 : i32 to vector<32x672xi32>
    %27 = arith.cmpi ne, %25, %26 : vector<32x672xi32>
    %c0_i32_20 = arith.constant 0 : i32
    %28 = vector.broadcast %c0_i32_20 : i32 to vector<32x672xi32>
    %29 = arith.cmpi slt, %25, %28 : vector<32x672xi32>
    %c0_i32_21 = arith.constant 0 : i32
    %30 = arith.cmpi slt, %23, %c0_i32_21 : i32
    %31 = vector.broadcast %30 : i1 to vector<32x672xi1>
    %32 = vector.broadcast %31 : vector<32x672xi1> to vector<32x672xi1>
    %33 = arith.xori %29, %32 : vector<32x672xi1>
    %34 = arith.andi %33, %27 : vector<32x672xi1>
    %35 = vector.broadcast %23 : i32 to vector<32x672xi32>
    %36 = arith.addi %25, %35 : vector<32x672xi32>
    %37 = arith.select %34, %36, %25 : vector<32x672xi1>, vector<32x672xi32>
    %c0_i32_22 = arith.constant 0 : i32
    %c0_i32_23 = arith.constant 0 : i32
    %c0_i32_24 = arith.constant 0 : i32
    %c0_i32_25 = arith.constant 0 : i32
    %38 = tpu.memref_slice %arg5[%arg0, %c0_i32_23, %c0_i32_24, %c0_i32_25] : memref<2x3x672x256xbf16, #tpu.memory_space<any>> -> memref<1x3x672x256xbf16, #tpu.memory_space<any>>
    %39 = tpu.memref_squeeze %38 : memref<1x3x672x256xbf16, #tpu.memory_space<any>> -> memref<3x672x256xbf16, #tpu.memory_space<any>>
    %40 = tpu.memref_slice %arg9[%c0_i32_22] : memref<1x!tpu.dma_semaphore, #tpu.memory_space<semaphore_mem>> -> memref<1x!tpu.dma_semaphore, #tpu.memory_space<semaphore_mem>>
    %41 = tpu.memref_squeeze %40 : memref<1x!tpu.dma_semaphore, #tpu.memory_space<semaphore_mem>> -> memref<!tpu.dma_semaphore, #tpu.memory_space<semaphore_mem>>
    tpu.wait_dma2 semaphore(%41 : memref<!tpu.dma_semaphore, #tpu.memory_space<semaphore_mem>>) src(%39 : memref<3x672x256xbf16, #tpu.memory_space<any>>) dst(%arg7 : memref<3x672x256xbf16, #tpu.memory_space<vmem>>)
    %cst_26 = arith.constant 0.000000e+00 : f32
    %42 = vector.broadcast %cst_26 : f32 to vector<32x256xf32>
    %c7_27 = arith.constant 7 : index
    %c0_28 = arith.constant 0 : index
    %43 = vector.load %arg8[%c7_27, %c0_28] : memref<41x672xf32, #tpu.memory_space<vmem>>, vector<32x672xf32>
    %c1_i32_29 = arith.constant 1 : i32
    %44 = vector.broadcast %c1_i32_29 : i32 to vector<32x672xi32>
    %45 = arith.cmpi sge, %37, %44 : vector<32x672xi32>
    %c17_i32 = arith.constant 17 : i32
    %46 = vector.broadcast %c17_i32 : i32 to vector<32x672xi32>
    %47 = arith.cmpi slt, %37, %46 : vector<32x672xi32>
    %48 = arith.andi %45, %47 : vector<32x672xi1>
    %cst_30 = arith.constant 0.000000e+00 : f32
    %49 = vector.broadcast %cst_30 : f32 to vector<32x672xf32>
    %50 = arith.select %48, %43, %49 : vector<32x672xi1>, vector<32x672xf32>
    %51 = arith.truncf %50 : vector<32x672xf32> to vector<32x672xbf16>
    %c0_31 = arith.constant 0 : index
    %c0_32 = arith.constant 0 : index
    %c0_33 = arith.constant 0 : index
    %52 = vector.load %arg7[%c0_31, %c0_32, %c0_33] : memref<3x672x256xbf16, #tpu.memory_space<vmem>>, vector<1x672x256xbf16>
    %53 = vector.shape_cast %52 : vector<1x672x256xbf16> to vector<672x256xbf16>
    %cst_34 = arith.constant dense<0.000000e+00> : vector<32x256xf32>
    %54 = tpu.matmul %51, %53, %cst_34 {dimension_numbers = #tpu.dot_dimension_numbers<[1], [0], [0], [1], [0, 0, 1, 1], [], []>} : vector<32x672xbf16>, vector<672x256xbf16>, vector<32x256xf32> -> vector<32x256xf32>
    %55 = arith.addf %42, %54 : vector<32x256xf32>
    %c8_35 = arith.constant 8 : index
    %c0_36 = arith.constant 0 : index
    %56 = vector.load %arg8[%c8_35, %c0_36] : memref<41x672xf32, #tpu.memory_space<vmem>>, vector<32x672xf32>
    %57 = arith.truncf %56 : vector<32x672xf32> to vector<32x672xbf16>
    %c1 = arith.constant 1 : index
    %c0_37 = arith.constant 0 : index
    %c0_38 = arith.constant 0 : index
    %58 = vector.load %arg7[%c1, %c0_37, %c0_38] : memref<3x672x256xbf16, #tpu.memory_space<vmem>>, vector<1x672x256xbf16>
    %59 = vector.shape_cast %58 : vector<1x672x256xbf16> to vector<672x256xbf16>
    %cst_39 = arith.constant dense<0.000000e+00> : vector<32x256xf32>
    %60 = tpu.matmul %57, %59, %cst_39 {dimension_numbers = #tpu.dot_dimension_numbers<[1], [0], [0], [1], [0, 0, 1, 1], [], []>} : vector<32x672xbf16>, vector<672x256xbf16>, vector<32x256xf32> -> vector<32x256xf32>
    %61 = arith.addf %55, %60 : vector<32x256xf32>
    %c9 = arith.constant 9 : index
    %c0_40 = arith.constant 0 : index
    %62 = vector.load %arg8[%c9, %c0_40] : memref<41x672xf32, #tpu.memory_space<vmem>>, vector<32x672xf32>
    %c-1_i32 = arith.constant -1 : i32
    %63 = vector.broadcast %c-1_i32 : i32 to vector<32x672xi32>
    %64 = arith.cmpi sge, %37, %63 : vector<32x672xi32>
    %c15_i32 = arith.constant 15 : i32
    %65 = vector.broadcast %c15_i32 : i32 to vector<32x672xi32>
    %66 = arith.cmpi slt, %37, %65 : vector<32x672xi32>
    %67 = arith.andi %64, %66 : vector<32x672xi1>
    %cst_41 = arith.constant 0.000000e+00 : f32
    %68 = vector.broadcast %cst_41 : f32 to vector<32x672xf32>
    %69 = arith.select %67, %62, %68 : vector<32x672xi1>, vector<32x672xf32>
    %70 = arith.truncf %69 : vector<32x672xf32> to vector<32x672xbf16>
    %c2 = arith.constant 2 : index
    %c0_42 = arith.constant 0 : index
    %c0_43 = arith.constant 0 : index
    %71 = vector.load %arg7[%c2, %c0_42, %c0_43] : memref<3x672x256xbf16, #tpu.memory_space<vmem>>, vector<1x672x256xbf16>
    %72 = vector.shape_cast %71 : vector<1x672x256xbf16> to vector<672x256xbf16>
    %cst_44 = arith.constant dense<0.000000e+00> : vector<32x256xf32>
    %73 = tpu.matmul %70, %72, %cst_44 {dimension_numbers = #tpu.dot_dimension_numbers<[1], [0], [0], [1], [0, 0, 1, 1], [], []>} : vector<32x672xbf16>, vector<672x256xbf16>, vector<32x256xf32> -> vector<32x256xf32>
    %74 = arith.addf %61, %73 : vector<32x256xf32>
    %c0_45 = arith.constant 0 : index
    %c0_46 = arith.constant 0 : index
    %75 = vector.load %arg4[%c0_45, %c0_46] : memref<1x256xf32, #tpu.memory_space<vmem>>, vector<1x256xf32>
    %76 = vector.broadcast %75 : vector<1x256xf32> to vector<32x256xf32>
    %77 = arith.addf %74, %76 : vector<32x256xf32>
    %cst_47 = arith.constant 0.000000e+00 : f32
    %78 = vector.broadcast %cst_47 : f32 to vector<32x256xf32>
    %79 = arith.maximumf %77, %78 : vector<32x256xf32>
    %c0_48 = arith.constant 0 : index
    %c0_49 = arith.constant 0 : index
    %80 = vector.load %arg6[%c0_48, %c0_49] : memref<32x256xf32, #tpu.memory_space<vmem>>, vector<32x256xf32>
    tpu.vector_store %arg6[%c0_48, %c0_49], %79 {strides = array<i32>} : memref<32x256xf32, #tpu.memory_space<vmem>>, vector<32x256xf32>,
    return
  }
  func.func @transform_0(%arg0: i32) -> (i32, i32) {
    %c0_i32 = arith.constant 0 : i32
    %c0_i32_0 = arith.constant 0 : i32
    %c0_i32_1 = arith.constant 0 : i32
    return %c0_i32, %c0_i32_0 : i32, i32
  }
  func.func @transform_1(%arg0: i32) -> (i32, i32) {
    %c0_i32 = arith.constant 0 : i32
    %c0_i32_0 = arith.constant 0 : i32
    %c0_i32_1 = arith.constant 0 : i32
    return %c0_i32, %c0_i32_0 : i32, i32
  }
  func.func @transform_2(%arg0: i32) -> (i32, i32) {
    %c0_i32 = arith.constant 0 : i32
    %c0_i32_0 = arith.constant 0 : i32
    %c0_i32_1 = arith.constant 0 : i32
    return %c0_i32, %c0_i32_0 : i32, i32
  }
  func.func @transform_3(%arg0: i32) -> (i32, i32) {
    %c0_i32 = arith.constant 0 : i32
    %c0_i32_0 = arith.constant 0 : i32
    return %c0_i32, %arg0 : i32, i32
  }
  func.func @transform_5(%arg0: i32) -> (i32, i32) {
    %c0_i32 = arith.constant 0 : i32
    %c0_i32_0 = arith.constant 0 : i32
    return %c0_i32, %arg0 : i32, i32
  }
}

</mosaic_0001>

<llo_original>
// kernel: tile.13
$region0: #{tile.13}
  #allocation0 [shape = 's32[1]{0}', space=sflag, size = 0x4, scoped, tag = 'scoped memory for tile.13']
  %s0 = inlined_call_operand.vmem [shape: f32[32], index: 0, kind: input, shape index: {}]
  %s1 = inlined_call_operand.vmem [shape: f32[16,32], index: 1, kind: output, shape index: {}]
  // Predicated region
  $region2: #{tile.13} parent=0 // pred_check
    _
  $region3: #{tile.13} parent=0 // pred_check_branch
    %3 = sbr.rel (0) target = $region5
  $region4: #{tile.13} parent=0 // pred_region
    _
  $region5: #{tile.13} parent=0 // pred_fallthru
    _
  %v4 = vld [vmem:[%s0] ss:$0 sm:$0xff]
  %5 = vst [vmem:[%s1] sm:$0xff] %v4
  %s6 = scalar_lea.vmem %s1, 8
  %7 = vst [vmem:[%s6] sm:$0xff] %v4

// kernel: tile.14
$region0: #{tile.14}
  %s0 = inlined_call_operand.vmem [shape: f32[16,32], index: 0, kind: input, shape index: {}]
  %s1 = inlined_call_operand.vmem [shape: f32[1,512], index: 1, kind: output, shape index: {}]
  $region1: #{tile.14} parent=0
    #allocation0 [shape = 'u8[16384]{0}', space=vmem, size = 0x4000, scoped, tag = 'scoped mem for output reshape']
    %v2 = vld [vmem:[%s0] ss:$4 sm:$0xf]
    %vm3 = vcmask 261120
    %4 = vst.msk [vmem:[#allocation0] ss:$8 sm:$0xf] %vm3, %v2
    %s5 = scalar_lea.vmem %s0, 3
    %v6 = vld [vmem:[%s5] ss:$4 sm:$0xf]
    %7 = vrot.lane.b32.xlu0 %v6, 96
    %v8 = vpop.permute.xlu0 %7
    %vm9 = vcmask 1048320
    %10 = vst.msk [vmem:[#allocation0] ss:$8 sm:$0xf] %vm9, %v8
    %s11 = scalar_lea.vmem %s0, 2
    %v12 = vld [vmem:[%s11] ss:$4 sm:$0xf]
    %13 = vrot.lane.b32.xlu0 %v12, 64
    %v14 = vpop.permute.xlu0 %13
    %vm15 = vcmask 785920
    %16 = vst.msk [vmem:[#allocation0] ss:$8 sm:$0xf] %vm15, %v14
    %s17 = scalar_lea.vmem %s0, 1
    %v18 = vld [vmem:[%s17] ss:$4 sm:$0xf]
    %19 = vrot.lane.b32.xlu0 %v18, 32
    %v20 = vpop.permute.xlu0 %19
    %vm21 = vcmask 523520
    %22 = vst.msk [vmem:[#allocation0] ss:$8 sm:$0xf] %vm21, %v20
    %s24 = ssub.s32 2, 1
    %v25 = vld [vmem:[#allocation0] sm:%s24]
    %s27 = ssub.s32 2, 1
    %28 = vst [vmem:[%s1] sm:%s27] %v25
    %s29 = scalar_lea.vmem [#allocation0], 8
    %v30 = vld [vmem:[%s29] sm:%s24]
    %s32 = ssub.s32 2, 1
    %s33 = scalar_lea.vmem %s1, 1
    %34 = vst [vmem:[%s33] sm:%s32] %v30
    %s35 = scalar_lea.vmem [#allocation0], 16
    %v36 = vld [vmem:[%s35] sm:%s24]
    %s38 = ssub.s32 2, 1
    %s39 = scalar_lea.vmem %s1, 2
    %40 = vst [vmem:[%s39] sm:%s38] %v36
    %s41 = scalar_lea.vmem [#allocation0], 24
    %v42 = vld [vmem:[%s41] sm:%s24]
    %s44 = ssub.s32 2, 1
    %s45 = scalar_lea.vmem %s1, 3
    %46 = vst [vmem:[%s45] sm:%s44] %v42

// kernel: inconv_forward.1
$region0: #{inconv_forward.1}
  #allocation0 [shape = 'u32[]', space=smem, size = 0x4, offset = 0x4, fixed_abs, tag = 'smem constant byte address 0x4 - core index']
  #allocation1 [shape = 'u32[72,128]{1,0:T(1,128)}', space=vmem, size = 0x9000, scoped, tag = 'internal scratch']
  #allocation2 [shape = 'bf16[3,672,256]{2,1,0:T(8,128)(2,1)}', space=vmem, size = 0xfc000, scoped, tag = 'scratch operand']
  #allocation3 [shape = 'f32[41,672]{1,0:T(8,128)}', space=vmem, size = 0x24000, scoped, tag = 'scratch operand']
  #allocation4 [shape = 's32[1]{0}', space=sflag, size = 0x4, scoped, tag = 'scratch operand']
  #allocation6 [shape = 's32[]', space=sflag, size = 0x4, offset = 0, fixed_abs, tag = 'sflag constant byte address 0x0 - dummy sync flag']
  %s0 = inlined_call_operand.vmem [shape: bf16[32,216], index: 0, kind: input, shape index: {}]
  %s1 = inlined_call_operand.vmem [shape: bf16[216,512], index: 1, kind: input, shape index: {}]
  %s2 = inlined_call_operand.vmem [shape: f32[1,512], index: 2, kind: input, shape index: {}]
  %s3 = inlined_call_operand.vmem [shape: f32[1,512], index: 3, kind: input, shape index: {}]
  %s4 = inlined_call_operand.vmem [shape: bf16[2,3,672,256], index: 4, kind: input, shape index: {}]
  %s5 = inlined_call_operand.vmem [shape: f32[32,512], index: 5, kind: output, shape index: {}]
  %s6 = sld [smem:[#allocation0]]
  $region87: #{inconv_forward.1} parent=0
    _
  %s8 = ssub.s32 1, %s6
  %s9 = scalar_select 0, %s8, %s6
  $region1: #{inconv_forward.1} parent=0
    #allocation5 [shape = 'u8[65536]{0}', space=vmem, size = 0x10000, scoped, tag = 'output window, operand 0']
    loop: start=0, step=1, limit=4
    $region2: #{inconv_forward.1} parent=1 // loop_pre_header
      _
    $region3: #{inconv_forward.1} parent=1 // loop_header
      %s11 = sphi 0, %s15
      %p12 = scmp.ge.s32.totalorder %s11, 4
      %s19 = sphi 0, %s19
      %s21 = sphi 0, %s19
      %s22 = sphi 0, %s21
      %s36 = sphi 0, %s22
      %s40 = sphi 0, %s40
      %s42 = sphi 0, %s40
      %s43 = sphi 0, %s42
      %s57 = sphi 0, %s43
      %s61 = sphi 0, %s61
      %s63 = sphi 0, %s61
      %s64 = sphi 0, %s63
      %s78 = sphi 0, %s64
      %s84 = sphi 0, %s86
      %s87 = sphi 0, %s84
      %s88 = sphi 0, %s87
      %s104 = sphi 0, %s88
      %s110 = sphi 0, %s112
      %s113 = sphi 0, %s110
      %s114 = sphi 0, %s113
      %s130 = sphi 0, %s114
    $region4: #{inconv_forward.1} parent=1 // loop_header_branch
      %14 = sbr.rel (%p12) target = $region8
    $region5: #{inconv_forward.1} parent=1 // loop_body
      %s16 = ssub.s32 %s11, 1
      %s17 = ssub.s32 %s11, 2
      %s18 = sadd.s32 %s11, 1
      %s20 = sadd.s32 %s19, 1
      %p23 = scmp.eq.s32.totalorder %s11, 1
      %p24 = scmp.ne.s32.totalorder %s19, %s21
      %p25 = scmp.eq.s32.totalorder %s11, 0
      %p26 = por %p24, %p25
      %p27 = scmp.ne.s32.totalorder %s19, %s21
      %p28 = scmp.eq.s32.totalorder %s16, 1
      %p29 = por %p27, %p28
      %p30 = scmp.ne.s32.totalorder %s21, %s22
      %p31 = scmp.eq.s32.totalorder %s16, 0
      %p32 = por %p30, %p31
      %p33 = scmp.ne.s32.totalorder %s21, %s22
      %p34 = scmp.eq.s32.totalorder %s17, 1
      %p35 = por %p33, %p34
      %p37 = scmp.ne.s32.totalorder %s22, %s36
      %p38 = scmp.eq.s32.totalorder %s17, 0
      %p39 = por %p37, %p38
      %s41 = sadd.s32 %s40, 1
      %p44 = scmp.eq.s32.totalorder %s11, 1
      %p45 = scmp.ne.s32.totalorder %s40, %s42
      %p46 = scmp.eq.s32.totalorder %s11, 0
      %p47 = por %p45, %p46
      %p48 = scmp.ne.s32.totalorder %s40, %s42
      %p49 = scmp.eq.s32.totalorder %s16, 1
      %p50 = por %p48, %p49
      %p51 = scmp.ne.s32.totalorder %s42, %s43
      %p52 = scmp.eq.s32.totalorder %s16, 0
      %p53 = por %p51, %p52
      %p54 = scmp.ne.s32.totalorder %s42, %s43
      %p55 = scmp.eq.s32.totalorder %s17, 1
      %p56 = por %p54, %p55
      %p58 = scmp.ne.s32.totalorder %s43, %s57
      %p59 = scmp.eq.s32.totalorder %s17, 0
      %p60 = por %p58, %p59
      %s62 = sadd.s32 %s61, 1
      %p65 = scmp.eq.s32.totalorder %s11, 1
      %p66 = scmp.ne.s32.totalorder %s61, %s63
      %p67 = scmp.eq.s32.totalorder %s11, 0
      %p68 = por %p66, %p67
      %p69 = scmp.ne.s32.totalorder %s61, %s63
      %p70 = scmp.eq.s32.totalorder %s16, 1
      %p71 = por %p69, %p70
      %p72 = scmp.ne.s32.totalorder %s63, %s64
      %p73 = scmp.eq.s32.totalorder %s16, 0
      %p74 = por %p72, %p73
      %p75 = scmp.ne.s32.totalorder %s63, %s64
      %p76 = scmp.eq.s32.totalorder %s17, 1
      %p77 = por %p75, %p76
      %p79 = scmp.ne.s32.totalorder %s64, %s78
      %p80 = scmp.eq.s32.totalorder %s17, 0
      %p81 = por %p79, %p80
      %s82 = ssub.s32 %s11, %s18
      %p83 = scmp.eq.s32.totalorder %s82, 0
      %s85 = sadd.s32 %s84, 1
      %s86 = scalar_select %p83, %s84, %s85
      %p89 = pneg %p83
      %p90 = scmp.eq.s32.totalorder %s11, 1
      %p91 = por %p89, %p90
      %p92 = scmp.ne.s32.totalorder %s84, %s87
      %p93 = scmp.eq.s32.totalorder %s11, 0
      %p94 = por %p92, %p93
      %p95 = scmp.ne.s32.totalorder %s84, %s87
      %p96 = scmp.eq.s32.totalorder %s16, 1
      %p97 = por %p95, %p96
      %p98 = scmp.ne.s32.totalorder %s87, %s88
      %p99 = scmp.eq.s32.totalorder %s16, 0
      %p100 = por %p98, %p99
      %p101 = scmp.ne.s32.totalorder %s87, %s88
      %p102 = scmp.eq.s32.totalorder %s17, 1
      %p103 = por %p101, %p102
      %p105 = scmp.ne.s32.totalorder %s88, %s104
      %p106 = scmp.eq.s32.totalorder %s17, 0
      %p107 = por %p105, %p106
      %s108 = ssub.s32 %s11, %s18
      %p109 = scmp.eq.s32.totalorder %s108, 0
      %s111 = sadd.s32 %s110, 1
      %s112 = scalar_select %p109, %s110, %s111
      %p115 = pneg %p109
      %p116 = scmp.eq.s32.totalorder %s11, 1
      %p117 = por %p115, %p116
      %p118 = scmp.ne.s32.totalorder %s110, %s113
      %p119 = scmp.eq.s32.totalorder %s11, 0
      %p120 = por %p118, %p119
      %p121 = scmp.ne.s32.totalorder %s110, %s113
      %p122 = scmp.eq.s32.totalorder %s16, 1
      %p123 = por %p121, %p122
      %p124 = scmp.ne.s32.totalorder %s113, %s114
      %p125 = scmp.eq.s32.totalorder %s16, 0
      %p126 = por %p124, %p125
      %p127 = scmp.ne.s32.totalorder %s113, %s114
      %p128 = scmp.eq.s32.totalorder %s17, 1
      %p129 = por %p127, %p128
      %p131 = scmp.ne.s32.totalorder %s114, %s130
      %p132 = scmp.eq.s32.totalorder %s17, 0
      %p133 = por %p131, %p132
      %p134 = scmp.le.s32.totalorder 1, %s11
      %p135 = scmp.lt.s32.totalorder %s11, 3
      %p136 = pnand %p134, %p135
      %p137 = pneg %p136
      // Predicated region
      $region9: #{inconv_forward.1} parent=5 // pred_check
        _
      $region10: #{inconv_forward.1} parent=5 // pred_check_branch
        %139 = sbr.rel (%p136) target = $region12
      $region11: #{inconv_forward.1} parent=5 // pred_region
        %s140 = ssub.s32 %s11, 1
        // Predicated region
        $region13: #{inconv_forward.1} parent=11 // pred_check
          %p141 = pneg %p32
        $region14: #{inconv_forward.1} parent=11 // pred_check_branch
          %143 = sbr.rel (%p141) target = $region16
        $region15: #{inconv_forward.1} parent=11 // pred_region
          _
        $region16: #{inconv_forward.1} parent=11 // pred_fallthru
          _
        // Predicated region
        $region17: #{inconv_forward.1} parent=11 // pred_check
          %p144 = pneg %p53
        $region18: #{inconv_forward.1} parent=11 // pred_check_branch
          %146 = sbr.rel (%p144) target = $region20
        $region19: #{inconv_forward.1} parent=11 // pred_region
          _
        $region20: #{inconv_forward.1} parent=11 // pred_fallthru
          _
        // Predicated region
        $region21: #{inconv_forward.1} parent=11 // pred_check
          %p147 = pneg %p74
        $region22: #{inconv_forward.1} parent=11 // pred_check_branch
          %149 = sbr.rel (%p147) target = $region24
        $region23: #{inconv_forward.1} parent=11 // pred_region
          _
        $region24: #{inconv_forward.1} parent=11 // pred_fallthru
          _
      $region12: #{inconv_forward.1} parent=5 // pred_fallthru
        _
      %p150 = scmp.lt.s32.totalorder %s11, 2
      // Predicated region
      $region25: #{inconv_forward.1} parent=5 // pred_check
        %p151 = pneg %p150
      $region26: #{inconv_forward.1} parent=5 // pred_check_branch
        %153 = sbr.rel (%p151) target = $region28
      $region27: #{inconv_forward.1} parent=5 // pred_region
        // Predicated region
        $region29: #{inconv_forward.1} parent=27 // pred_check
          %p154 = pneg %p94
        $region30: #{inconv_forward.1} parent=27 // pred_check_branch
          %156 = sbr.rel (%p154) target = $region32
        $region31: #{inconv_forward.1} parent=27 // pred_region
          %s157 = smul.u32 2, %s11
          %p158 = scmp.lt.s32.totalorder %s157, 3
          %s159 = scalar_select %p158, %s157, 3
          %s160 = scalar_lea.vmem %s3, %s159
          %s161 = smul.u32 2, %s11
        $region32: #{inconv_forward.1} parent=27 // pred_fallthru
          _
      $region28: #{inconv_forward.1} parent=5 // pred_fallthru
        _
      %p162 = scmp.le.s32.totalorder 1, %s11
      %p163 = scmp.lt.s32.totalorder %s11, 3
      %p164 = pnand %p162, %p163
      %p165 = pneg %p164
      // Predicated region
      $region33: #{inconv_forward.1} parent=5 // pred_check
        _
      $region34: #{inconv_forward.1} parent=5 // pred_check_branch
        %167 = sbr.rel (%p164) target = $region36
      $region35: #{inconv_forward.1} parent=5 // pred_region
        %s168 = ssub.s32 %s11, 1
        %p169 = pneg %p32
        %p170 = pneg %p29
        %p171 = pneg %p53
        %p172 = pneg %p50
        %p173 = pneg %p74
        %p174 = pneg %p71
        %s175 = smul.u32 2, %s16
        %p176 = scmp.lt.s32.totalorder %s175, 3
        %s177 = scalar_select %p176, %s175, 3
        %s178 = scalar_lea.vmem %s3, %s177
        %p179 = pneg %p100
        %p180 = pneg %p97
        %p181 = pneg %p126
        %p182 = pneg %p123
        %s183 = sand.u32 %s113, 1
        %s184 = sand.u32 %s113, 1
        %s185 = smul.addr %s184, 64
        %s186 = scalar_lea.vmem [#allocation5], %s185
        %s187 = smul.u32 2, %s16
        %p188 = scmp.lt.s32.totalorder %s187, 3
        %s189 = scalar_select %p188, %s187, 3
        %s190 = scalar_lea.vmem %s3, %s189
        %s191 = smul.u32 2, %s16
        %s192 = smul.u32 2, %s16
        %s194 = smul.u32 %s16, 504
        %s195 = smul.addr %s194, 4
        %s196 = scalar_lea.vmem %s4, %s195
        // Predicated region
        $region37: #{inconv_forward.1} parent=35 // pred_check
          _
        $region38: #{inconv_forward.1} parent=35 // pred_check_branch
          %198 = sbr.rel (0) target = $region40
        $region39: #{inconv_forward.1} parent=35 // pred_region
          loop: start=0, step=1, limit=1
          $region41: #{inconv_forward.1} parent=39 // loop_pre_header
            _
          $region42: #{inconv_forward.1} parent=39 // loop_header
            %s200 = sphi 0, %s204
            %p201 = scmp.ge.s32.totalorder %s200, 1
            %s205 = sphi %s196, %s196
            %s206 = sphi [#allocation2], [#allocation2]
          $region43: #{inconv_forward.1} parent=39 // loop_header_branch
            %203 = sbr.rel (%p201) target = $region47
          $region44: #{inconv_forward.1} parent=39 // loop_body
            %v207 = vld [vmem:[%s205] sm:$0xff]
            %208 = vst [vmem:[%s206] sm:$0xff] %v207
            %v209 = vld [vmem:[%s205 + $0x8] sm:$0xff]
            %210 = vst [vmem:[%s206 + $0x8] sm:$0xff] %v209
            %v211 = vld [vmem:[%s205 + $0x10] sm:$0xff]
            %212 = vst [vmem:[%s206 + $0x10] sm:$0xff] %v211
            %v213 = vld [vmem:[%s205 + $0x18] sm:$0xff]
            %214 = vst [vmem:[%s206 + $0x18] sm:$0xff] %v213
            %v215 = vld [vmem:[%s205 + $0x20] sm:$0xff]
            %216 = vst [vmem:[%s206 + $0x20] sm:$0xff] %v215
            %v217 = vld [vmem:[%s205 + $0x28] sm:$0xff]
            %218 = vst [vmem:[%s206 + $0x28] sm:$0xff] %v217
            %v219 = vld [vmem:[%s205 + $0x30] sm:$0xff]
            %220 = vst [vmem:[%s206 + $0x30] sm:$0xff] %v219
            %v221 = vld [vmem:[%s205 + $0x38] sm:$0xff]
            %222 = vst [vmem:[%s206 + $0x38] sm:$0xff] %v221
            %v223 = vld [vmem:[%s205 + $0x40] sm:$0xff]
            %224 = vst [vmem:[%s206 + $0x40] sm:$0xff] %v223
            %v225 = vld [vmem:[%s205 + $0x48] sm:$0xff]
            %226 = vst [vmem:[%s206 + $0x48] sm:$0xff] %v225
            %v227 = vld [vmem:[%s205 + $0x50] sm:$0xff]
            %228 = vst [vmem:[%s206 + $0x50] sm:$0xff] %v227
            %v229 = vld [vmem:[%s205 + $0x58] sm:$0xff]
            %230 = vst [vmem:[%s206 + $0x58] sm:$0xff] %v229
            %v231 = vld [vmem:[%s205 + $0x60] sm:$0xff]
            %232 = vst [vmem:[%s206 + $0x60] sm:$0xff] %v231
            %v233 = vld [vmem:[%s205 + $0x68] sm:$0xff]
            %234 = vst [vmem:[%s206 + $0x68] sm:$0xff] %v233
            %v235 = vld [vmem:[%s205 + $0x70] sm:$0xff]
            %236 = vst [vmem:[%s206 + $0x70] sm:$0xff] %v235
            %v237 = vld [vmem:[%s205 + $0x78] sm:$0xff]
            %238 = vst [vmem:[%s206 + $0x78] sm:$0xff] %v237
            %v239 = vld [vmem:[%s205 + $0x80] sm:$0xff]
            %240 = vst [vmem:[%s206 + $0x80] sm:$0xff] %v239
            %v241 = vld [vmem:[%s205 + $0x88] sm:$0xff]
            %242 = vst [vmem:[%s206 + $0x88] sm:$0xff] %v241
            %v243 = vld [vmem:[%s205 + $0x90] sm:$0xff]
            %244 = vst [vmem:[%s206 + $0x90] sm:$0xff] %v243
            %v245 = vld [vmem:[%s205 + $0x98] sm:$0xff]
            %246 = vst [vmem:[%s206 + $0x98] sm:$0xff] %v245
            %v247 = vld [vmem:[%s205 + $0xa0] sm:$0xff]
            %248 = vst [vmem:[%s206 + $0xa0] sm:$0xff] %v247
            %v249 = vld [vmem:[%s205 + $0xa8] sm:$0xff]
            %250 = vst [vmem:[%s206 + $0xa8] sm:$0xff] %v249
            %v251 = vld [vmem:[%s205 + $0xb0] sm:$0xff]
            %252 = vst [vmem:[%s206 + $0xb0] sm:$0xff] %v251
            %v253 = vld [vmem:[%s205 + $0xb8] sm:$0xff]
            %254 = vst [vmem:[%s206 + $0xb8] sm:$0xff] %v253
            %v255 = vld [vmem:[%s205 + $0xc0] sm:$0xff]
            %256 = vst [vmem:[%s206 + $0xc0] sm:$0xff] %v255
            %v257 = vld [vmem:[%s205 + $0xc8] sm:$0xff]
            %258 = vst [vmem:[%s206 + $0xc8] sm:$0xff] %v257
            %v259 = vld [vmem:[%s205 + $0xd0] sm:$0xff]
            %260 = vst [vmem:[%s206 + $0xd0] sm:$0xff] %v259
            %v261 = vld [vmem:[%s205 + $0xd8] sm:$0xff]
            %262 = vst [vmem:[%s206 + $0xd8] sm:$0xff] %v261
            %v263 = vld [vmem:[%s205 + $0xe0] sm:$0xff]
            %264 = vst [vmem:[%s206 + $0xe0] sm:$0xff] %v263
            %v265 = vld [vmem:[%s205 + $0xe8] sm:$0xff]
            %266 = vst [vmem:[%s206 + $0xe8] sm:$0xff] %v265
            %v267 = vld [vmem:[%s205 + $0xf0] sm:$0xff]
            %268 = vst [vmem:[%s206 + $0xf0] sm:$0xff] %v267
            %v269 = vld [vmem:[%s205 + $0xf8] sm:$0xff]
            %270 = vst [vmem:[%s206 + $0xf8] sm:$0xff] %v269
            %v271 = vld [vmem:[%s205 + $0x100] sm:$0xff]
            %272 = vst [vmem:[%s206 + $0x100] sm:$0xff] %v271
            %v273 = vld [vmem:[%s205 + $0x108] sm:$0xff]
            %274 = vst [vmem:[%s206 + $0x108] sm:$0xff] %v273
            %v275 = vld [vmem:[%s205 + $0x110] sm:$0xff]
            %276 = vst [vmem:[%s206 + $0x110] sm:$0xff] %v275
            %v277 = vld [vmem:[%s205 + $0x118] sm:$0xff]
            %278 = vst [vmem:[%s206 + $0x118] sm:$0xff] %v277
            %v279 = vld [vmem:[%s205 + $0x120] sm:$0xff]
            %280 = vst [vmem:[%s206 + $0x120] sm:$0xff] %v279
            %v281 = vld [vmem:[%s205 + $0x128] sm:$0xff]
            %282 = vst [vmem:[%s206 + $0x128] sm:$0xff] %v281
            %v283 = vld [vmem:[%s205 + $0x130] sm:$0xff]
            %284 = vst [vmem:[%s206 + $0x130] sm:$0xff] %v283
            %v285 = vld [vmem:[%s205 + $0x138] sm:$0xff]
            %286 = vst [vmem:[%s206 + $0x138] sm:$0xff] %v285
            %v287 = vld [vmem:[%s205 + $0x140] sm:$0xff]
            %288 = vst [vmem:[%s206 + $0x140] sm:$0xff] %v287
            %v289 = vld [vmem:[%s205 + $0x148] sm:$0xff]
            %290 = vst [vmem:[%s206 + $0x148] sm:$0xff] %v289
            %v291 = vld [vmem:[%s205 + $0x150] sm:$0xff]
            %292 = vst [vmem:[%s206 + $0x150] sm:$0xff] %v291
            %v293 = vld [vmem:[%s205 + $0x158] sm:$0xff]
            %294 = vst [vmem:[%s206 + $0x158] sm:$0xff] %v293
            %v295 = vld [vmem:[%s205 + $0x160] sm:$0xff]
            %296 = vst [vmem:[%s206 + $0x160] sm:$0xff] %v295
            %v297 = vld [vmem:[%s205 + $0x168] sm:$0xff]
            %298 = vst [vmem:[%s206 + $0x168] sm:$0xff] %v297
            %v299 = vld [vmem:[%s205 + $0x170] sm:$0xff]
            %300 = vst [vmem:[%s206 + $0x170] sm:$0xff] %v299
            %v301 = vld [vmem:[%s205 + $0x178] sm:$0xff]
            %302 = vst [vmem:[%s206 + $0x178] sm:$0xff] %v301
            %v303 = vld [vmem:[%s205 + $0x180] sm:$0xff]
            %304 = vst [vmem:[%s206 + $0x180] sm:$0xff] %v303
            %v305 = vld [vmem:[%s205 + $0x188] sm:$0xff]
            %306 = vst [vmem:[%s206 + $0x188] sm:$0xff] %v305
            %v307 = vld [vmem:[%s205 + $0x190] sm:$0xff]
            %308 = vst [vmem:[%s206 + $0x190] sm:$0xff] %v307
            %v309 = vld [vmem:[%s205 + $0x198] sm:$0xff]
            %310 = vst [vmem:[%s206 + $0x198] sm:$0xff] %v309
            %v311 = vld [vmem:[%s205 + $0x1a0] sm:$0xff]
            %312 = vst [vmem:[%s206 + $0x1a0] sm:$0xff] %v311
            %v313 = vld [vmem:[%s205 + $0x1a8] sm:$0xff]
            %314 = vst [vmem:[%s206 + $0x1a8] sm:$0xff] %v313
            %v315 = vld [vmem:[%s205 + $0x1b0] sm:$0xff]
            %316 = vst [vmem:[%s206 + $0x1b0] sm:$0xff] %v315
            %v317 = vld [vmem:[%s205 + $0x1b8] sm:$0xff]
            %318 = vst [vmem:[%s206 + $0x1b8] sm:$0xff] %v317
            %v319 = vld [vmem:[%s205 + $0x1c0] sm:$0xff]
            %320 = vst [vmem:[%s206 + $0x1c0] sm:$0xff] %v319
            %v321 = vld [vmem:[%s205 + $0x1c8] sm:$0xff]
            %322 = vst [vmem:[%s206 + $0x1c8] sm:$0xff] %v321
            %v323 = vld [vmem:[%s205 + $0x1d0] sm:$0xff]
            %324 = vst [vmem:[%s206 + $0x1d0] sm:$0xff] %v323
            %v325 = vld [vmem:[%s205 + $0x1d8] sm:$0xff]
            %326 = vst [vmem:[%s206 + $0x1d8] sm:$0xff] %v325
            %v327 = vld [vmem:[%s205 + $0x1e0] sm:$0xff]
            %328 = vst [vmem:[%s206 + $0x1e0] sm:$0xff] %v327
            %v329 = vld [vmem:[%s205 + $0x1e8] sm:$0xff]
            %330 = vst [vmem:[%s206 + $0x1e8] sm:$0xff] %v329
            %v331 = vld [vmem:[%s205 + $0x1f0] sm:$0xff]
            %332 = vst [vmem:[%s206 + $0x1f0] sm:$0xff] %v331
            %v333 = vld [vmem:[%s205 + $0x1f8] sm:$0xff]
            %334 = vst [vmem:[%s206 + $0x1f8] sm:$0xff] %v333
            %v335 = vld [vmem:[%s205 + $0x200] sm:$0xff]
            %336 = vst [vmem:[%s206 + $0x200] sm:$0xff] %v335
            %v337 = vld [vmem:[%s205 + $0x208] sm:$0xff]
            %338 = vst [vmem:[%s206 + $0x208] sm:$0xff] %v337
            %v339 = vld [vmem:[%s205 + $0x210] sm:$0xff]
            %340 = vst [vmem:[%s206 + $0x210] sm:$0xff] %v339
            %v341 = vld [vmem:[%s205 + $0x218] sm:$0xff]
            %342 = vst [vmem:[%s206 + $0x218] sm:$0xff] %v341
            %v343 = vld [vmem:[%s205 + $0x220] sm:$0xff]
            %344 = vst [vmem:[%s206 + $0x220] sm:$0xff] %v343
            %v345 = vld [vmem:[%s205 + $0x228] sm:$0xff]
            %346 = vst [vmem:[%s206 + $0x228] sm:$0xff] %v345
            %v347 = vld [vmem:[%s205 + $0x230] sm:$0xff]
            %348 = vst [vmem:[%s206 + $0x230] sm:$0xff] %v347
            %v349 = vld [vmem:[%s205 + $0x238] sm:$0xff]
            %350 = vst [vmem:[%s206 + $0x238] sm:$0xff] %v349
            %v351 = vld [vmem:[%s205 + $0x240] sm:$0xff]
            %352 = vst [vmem:[%s206 + $0x240] sm:$0xff] %v351
            %v353 = vld [vmem:[%s205 + $0x248] sm:$0xff]
            %354 = vst [vmem:[%s206 + $0x248] sm:$0xff] %v353
            %v355 = vld [vmem:[%s205 + $0x250] sm:$0xff]
            %356 = vst [vmem:[%s206 + $0x250] sm:$0xff] %v355
            %v357 = vld [vmem:[%s205 + $0x258] sm:$0xff]
            %358 = vst [vmem:[%s206 + $0x258] sm:$0xff] %v357
            %v359 = vld [vmem:[%s205 + $0x260] sm:$0xff]
            %360 = vst [vmem:[%s206 + $0x260] sm:$0xff] %v359
            %v361 = vld [vmem:[%s205 + $0x268] sm:$0xff]
            %362 = vst [vmem:[%s206 + $0x268] sm:$0xff] %v361
            %v363 = vld [vmem:[%s205 + $0x270] sm:$0xff]
            %364 = vst [vmem:[%s206 + $0x270] sm:$0xff] %v363
            %v365 = vld [vmem:[%s205 + $0x278] sm:$0xff]
            %366 = vst [vmem:[%s206 + $0x278] sm:$0xff] %v365
            %v367 = vld [vmem:[%s205 + $0x280] sm:$0xff]
            %368 = vst [vmem:[%s206 + $0x280] sm:$0xff] %v367
            %v369 = vld [vmem:[%s205 + $0x288] sm:$0xff]
            %370 = vst [vmem:[%s206 + $0x288] sm:$0xff] %v369
            %v371 = vld [vmem:[%s205 + $0x290] sm:$0xff]
            %372 = vst [vmem:[%s206 + $0x290] sm:$0xff] %v371
            %v373 = vld [vmem:[%s205 + $0x298] sm:$0xff]
            %374 = vst [vmem:[%s206 + $0x298] sm:$0xff] %v373
            %v375 = vld [vmem:[%s205 + $0x2a0] sm:$0xff]
            %376 = vst [vmem:[%s206 + $0x2a0] sm:$0xff] %v375
            %v377 = vld [vmem:[%s205 + $0x2a8] sm:$0xff]
            %378 = vst [vmem:[%s206 + $0x2a8] sm:$0xff] %v377
            %v379 = vld [vmem:[%s205 + $0x2b0] sm:$0xff]
            %380 = vst [vmem:[%s206 + $0x2b0] sm:$0xff] %v379
            %v381 = vld [vmem:[%s205 + $0x2b8] sm:$0xff]
            %382 = vst [vmem:[%s206 + $0x2b8] sm:$0xff] %v381
            %v383 = vld [vmem:[%s205 + $0x2c0] sm:$0xff]
            %384 = vst [vmem:[%s206 + $0x2c0] sm:$0xff] %v383
            %v385 = vld [vmem:[%s205 + $0x2c8] sm:$0xff]
            %386 = vst [vmem:[%s206 + $0x2c8] sm:$0xff] %v385
            %v387 = vld [vmem:[%s205 + $0x2d0] sm:$0xff]
            %388 = vst [vmem:[%s206 + $0x2d0] sm:$0xff] %v387
            %v389 = vld [vmem:[%s205 + $0x2d8] sm:$0xff]
            %390 = vst [vmem:[%s206 + $0x2d8] sm:$0xff] %v389
            %v391 = vld [vmem:[%s205 + $0x2e0] sm:$0xff]
            %392 = vst [vmem:[%s206 + $0x2e0] sm:$0xff] %v391
            %v393 = vld [vmem:[%s205 + $0x2e8] sm:$0xff]
            %394 = vst [vmem:[%s206 + $0x2e8] sm:$0xff] %v393
            %v395 = vld [vmem:[%s205 + $0x2f0] sm:$0xff]
            %396 = vst [vmem:[%s206 + $0x2f0] sm:$0xff] %v395
            %v397 = vld [vmem:[%s205 + $0x2f8] sm:$0xff]
            %398 = vst [vmem:[%s206 + $0x2f8] sm:$0xff] %v397
            %v399 = vld [vmem:[%s205 + $0x300] sm:$0xff]
            %400 = vst [vmem:[%s206 + $0x300] sm:$0xff] %v399
            %v401 = vld [vmem:[%s205 + $0x308] sm:$0xff]
            %402 = vst [vmem:[%s206 + $0x308] sm:$0xff] %v401
            %v403 = vld [vmem:[%s205 + $0x310] sm:$0xff]
            %404 = vst [vmem:[%s206 + $0x310] sm:$0xff] %v403
            %v405 = vld [vmem:[%s205 + $0x318] sm:$0xff]
            %406 = vst [vmem:[%s206 + $0x318] sm:$0xff] %v405
            %v407 = vld [vmem:[%s205 + $0x320] sm:$0xff]
            %408 = vst [vmem:[%s206 + $0x320] sm:$0xff] %v407
            %v409 = vld [vmem:[%s205 + $0x328] sm:$0xff]
            %410 = vst [vmem:[%s206 + $0x328] sm:$0xff] %v409
            %v411 = vld [vmem:[%s205 + $0x330] sm:$0xff]
            %412 = vst [vmem:[%s206 + $0x330] sm:$0xff] %v411
            %v413 = vld [vmem:[%s205 + $0x338] sm:$0xff]
            %414 = vst [vmem:[%s206 + $0x338] sm:$0xff] %v413
            %v415 = vld [vmem:[%s205 + $0x340] sm:$0xff]
            %416 = vst [vmem:[%s206 + $0x340] sm:$0xff] %v415
            %v417 = vld [vmem:[%s205 + $0x348] sm:$0xff]
            %418 = vst [vmem:[%s206 + $0x348] sm:$0xff] %v417
            %v419 = vld [vmem:[%s205 + $0x350] sm:$0xff]
            %420 = vst [vmem:[%s206 + $0x350] sm:$0xff] %v419
            %v421 = vld [vmem:[%s205 + $0x358] sm:$0xff]
            %422 = vst [vmem:[%s206 + $0x358] sm:$0xff] %v421
            %v423 = vld [vmem:[%s205 + $0x360] sm:$0xff]
            %424 = vst [vmem:[%s206 + $0x360] sm:$0xff] %v423
            %v425 = vld [vmem:[%s205 + $0x368] sm:$0xff]
            %426 = vst [vmem:[%s206 + $0x368] sm:$0xff] %v425
            %v427 = vld [vmem:[%s205 + $0x370] sm:$0xff]
            %428 = vst [vmem:[%s206 + $0x370] sm:$0xff] %v427
            %v429 = vld [vmem:[%s205 + $0x378] sm:$0xff]
            %430 = vst [vmem:[%s206 + $0x378] sm:$0xff] %v429
            %v431 = vld [vmem:[%s205 + $0x380] sm:$0xff]
            %432 = vst [vmem:[%s206 + $0x380] sm:$0xff] %v431
            %v433 = vld [vmem:[%s205 + $0x388] sm:$0xff]
            %434 = vst [vmem:[%s206 + $0x388] sm:$0xff] %v433
            %v435 = vld [vmem:[%s205 + $0x390] sm:$0xff]
            %436 = vst [vmem:[%s206 + $0x390] sm:$0xff] %v435
            %v437 = vld [vmem:[%s205 + $0x398] sm:$0xff]
            %438 = vst [vmem:[%s206 + $0x398] sm:$0xff] %v437
            %v439 = vld [vmem:[%s205 + $0x3a0] sm:$0xff]
            %440 = vst [vmem:[%s206 + $0x3a0] sm:$0xff] %v439
            %v441 = vld [vmem:[%s205 + $0x3a8] sm:$0xff]
            %442 = vst [vmem:[%s206 + $0x3a8] sm:$0xff] %v441
            %v443 = vld [vmem:[%s205 + $0x3b0] sm:$0xff]
            %444 = vst [vmem:[%s206 + $0x3b0] sm:$0xff] %v443
            %v445 = vld [vmem:[%s205 + $0x3b8] sm:$0xff]
            %446 = vst [vmem:[%s206 + $0x3b8] sm:$0xff] %v445
            %v447 = vld [vmem:[%s205 + $0x3c0] sm:$0xff]
            %448 = vst [vmem:[%s206 + $0x3c0] sm:$0xff] %v447
            %v449 = vld [vmem:[%s205 + $0x3c8] sm:$0xff]
            %450 = vst [vmem:[%s206 + $0x3c8] sm:$0xff] %v449
            %v451 = vld [vmem:[%s205 + $0x3d0] sm:$0xff]
            %452 = vst [vmem:[%s206 + $0x3d0] sm:$0xff] %v451
            %v453 = vld [vmem:[%s205 + $0x3d8] sm:$0xff]
            %454 = vst [vmem:[%s206 + $0x3d8] sm:$0xff] %v453
            %v455 = vld [vmem:[%s205 + $0x3e0] sm:$0xff]
            %456 = vst [vmem:[%s206 + $0x3e0] sm:$0xff] %v455
            %v457 = vld [vmem:[%s205 + $0x3e8] sm:$0xff]
            %458 = vst [vmem:[%s206 + $0x3e8] sm:$0xff] %v457
            %v459 = vld [vmem:[%s205 + $0x3f0] sm:$0xff]
            %460 = vst [vmem:[%s206 + $0x3f0] sm:$0xff] %v459
            %v461 = vld [vmem:[%s205 + $0x3f8] sm:$0xff]
            %462 = vst [vmem:[%s206 + $0x3f8] sm:$0xff] %v461
            %v463 = vld [vmem:[%s205 + $0x400] sm:$0xff]
            %464 = vst [vmem:[%s206 + $0x400] sm:$0xff] %v463
            %v465 = vld [vmem:[%s205 + $0x408] sm:$0xff]
            %466 = vst [vmem:[%s206 + $0x408] sm:$0xff] %v465
            %v467 = vld [vmem:[%s205 + $0x410] sm:$0xff]
            %468 = vst [vmem:[%s206 + $0x410] sm:$0xff] %v467
            %v469 = vld [vmem:[%s205 + $0x418] sm:$0xff]
            %470 = vst [vmem:[%s206 + $0x418] sm:$0xff] %v469
            %v471 = vld [vmem:[%s205 + $0x420] sm:$0xff]
            %472 = vst [vmem:[%s206 + $0x420] sm:$0xff] %v471
            %v473 = vld [vmem:[%s205 + $0x428] sm:$0xff]
            %474 = vst [vmem:[%s206 + $0x428] sm:$0xff] %v473
            %v475 = vld [vmem:[%s205 + $0x430] sm:$0xff]
            %476 = vst [vmem:[%s206 + $0x430] sm:$0xff] %v475
            %v477 = vld [vmem:[%s205 + $0x438] sm:$0xff]
            %478 = vst [vmem:[%s206 + $0x438] sm:$0xff] %v477
            %v479 = vld [vmem:[%s205 + $0x440] sm:$0xff]
            %480 = vst [vmem:[%s206 + $0x440] sm:$0xff] %v479
            %v481 = vld [vmem:[%s205 + $0x448] sm:$0xff]
            %482 = vst [vmem:[%s206 + $0x448] sm:$0xff] %v481
            %v483 = vld [vmem:[%s205 + $0x450] sm:$0xff]
            %484 = vst [vmem:[%s206 + $0x450] sm:$0xff] %v483
            %v485 = vld [vmem:[%s205 + $0x458] sm:$0xff]
            %486 = vst [vmem:[%s206 + $0x458] sm:$0xff] %v485
            %v487 = vld [vmem:[%s205 + $0x460] sm:$0xff]
            %488 = vst [vmem:[%s206 + $0x460] sm:$0xff] %v487
            %v489 = vld [vmem:[%s205 + $0x468] sm:$0xff]
            %490 = vst [vmem:[%s206 + $0x468] sm:$0xff] %v489
            %v491 = vld [vmem:[%s205 + $0x470] sm:$0xff]
            %492 = vst [vmem:[%s206 + $0x470] sm:$0xff] %v491
            %v493 = vld [vmem:[%s205 + $0x478] sm:$0xff]
            %494 = vst [vmem:[%s206 + $0x478] sm:$0xff] %v493
            %v495 = vld [vmem:[%s205 + $0x480] sm:$0xff]
            %496 = vst [vmem:[%s206 + $0x480] sm:$0xff] %v495
            %v497 = vld [vmem:[%s205 + $0x488] sm:$0xff]
            %498 = vst [vmem:[%s206 + $0x488] sm:$0xff] %v497
            %v499 = vld [vmem:[%s205 + $0x490] sm:$0xff]
            %500 = vst [vmem:[%s206 + $0x490] sm:$0xff] %v499
            %v501 = vld [vmem:[%s205 + $0x498] sm:$0xff]
            %502 = vst [vmem:[%s206 + $0x498] sm:$0xff] %v501
            %v503 = vld [vmem:[%s205 + $0x4a0] sm:$0xff]
            %504 = vst [vmem:[%s206 + $0x4a0] sm:$0xff] %v503
            %v505 = vld [vmem:[%s205 + $0x4a8] sm:$0xff]
            %506 = vst [vmem:[%s206 + $0x4a8] sm:$0xff] %v505
            %v507 = vld [vmem:[%s205 + $0x4b0] sm:$0xff]
            %508 = vst [vmem:[%s206 + $0x4b0] sm:$0xff] %v507
            %v509 = vld [vmem:[%s205 + $0x4b8] sm:$0xff]
            %510 = vst [vmem:[%s206 + $0x4b8] sm:$0xff] %v509
            %v511 = vld [vmem:[%s205 + $0x4c0] sm:$0xff]
            %512 = vst [vmem:[%s206 + $0x4c0] sm:$0xff] %v511
            %v513 = vld [vmem:[%s205 + $0x4c8] sm:$0xff]
            %514 = vst [vmem:[%s206 + $0x4c8] sm:$0xff] %v513
            %v515 = vld [vmem:[%s205 + $0x4d0] sm:$0xff]
            %516 = vst [vmem:[%s206 + $0x4d0] sm:$0xff] %v515
            %v517 = vld [vmem:[%s205 + $0x4d8] sm:$0xff]
            %518 = vst [vmem:[%s206 + $0x4d8] sm:$0xff] %v517
            %v519 = vld [vmem:[%s205 + $0x4e0] sm:$0xff]
            %520 = vst [vmem:[%s206 + $0x4e0] sm:$0xff] %v519
            %v521 = vld [vmem:[%s205 + $0x4e8] sm:$0xff]
            %522 = vst [vmem:[%s206 + $0x4e8] sm:$0xff] %v521
            %v523 = vld [vmem:[%s205 + $0x4f0] sm:$0xff]
            %524 = vst [vmem:[%s206 + $0x4f0] sm:$0xff] %v523
            %v525 = vld [vmem:[%s205 + $0x4f8] sm:$0xff]
            %526 = vst [vmem:[%s206 + $0x4f8] sm:$0xff] %v525
            %v527 = vld [vmem:[%s205 + $0x500] sm:$0xff]
            %528 = vst [vmem:[%s206 + $0x500] sm:$0xff] %v527
            %v529 = vld [vmem:[%s205 + $0x508] sm:$0xff]
            %530 = vst [vmem:[%s206 + $0x508] sm:$0xff] %v529
            %v531 = vld [vmem:[%s205 + $0x510] sm:$0xff]
            %532 = vst [vmem:[%s206 + $0x510] sm:$0xff] %v531
            %v533 = vld [vmem:[%s205 + $0x518] sm:$0xff]
            %534 = vst [vmem:[%s206 + $0x518] sm:$0xff] %v533
            %v535 = vld [vmem:[%s205 + $0x520] sm:$0xff]
            %536 = vst [vmem:[%s206 + $0x520] sm:$0xff] %v535
            %v537 = vld [vmem:[%s205 + $0x528] sm:$0xff]
            %538 = vst [vmem:[%s206 + $0x528] sm:$0xff] %v537
            %v539 = vld [vmem:[%s205 + $0x530] sm:$0xff]
            %540 = vst [vmem:[%s206 + $0x530] sm:$0xff] %v539
            %v541 = vld [vmem:[%s205 + $0x538] sm:$0xff]
            %542 = vst [vmem:[%s206 + $0x538] sm:$0xff] %v541
            %v543 = vld [vmem:[%s205 + $0x540] sm:$0xff]
            %544 = vst [vmem:[%s206 + $0x540] sm:$0xff] %v543
            %v545 = vld [vmem:[%s205 + $0x548] sm:$0xff]
            %546 = vst [vmem:[%s206 + $0x548] sm:$0xff] %v545
            %v547 = vld [vmem:[%s205 + $0x550] sm:$0xff]
            %548 = vst [vmem:[%s206 + $0x550] sm:$0xff] %v547
            %v549 = vld [vmem:[%s205 + $0x558] sm:$0xff]
            %550 = vst [vmem:[%s206 + $0x558] sm:$0xff] %v549
            %v551 = vld [vmem:[%s205 + $0x560] sm:$0xff]
            %552 = vst [vmem:[%s206 + $0x560] sm:$0xff] %v551
            %v553 = vld [vmem:[%s205 + $0x568] sm:$0xff]
            %554 = vst [vmem:[%s206 + $0x568] sm:$0xff] %v553
            %v555 = vld [vmem:[%s205 + $0x570] sm:$0xff]
            %556 = vst [vmem:[%s206 + $0x570] sm:$0xff] %v555
            %v557 = vld [vmem:[%s205 + $0x578] sm:$0xff]
            %558 = vst [vmem:[%s206 + $0x578] sm:$0xff] %v557
            %v559 = vld [vmem:[%s205 + $0x580] sm:$0xff]
            %560 = vst [vmem:[%s206 + $0x580] sm:$0xff] %v559
            %v561 = vld [vmem:[%s205 + $0x588] sm:$0xff]
            %562 = vst [vmem:[%s206 + $0x588] sm:$0xff] %v561
            %v563 = vld [vmem:[%s205 + $0x590] sm:$0xff]
            %564 = vst [vmem:[%s206 + $0x590] sm:$0xff] %v563
            %v565 = vld [vmem:[%s205 + $0x598] sm:$0xff]
            %566 = vst [vmem:[%s206 + $0x598] sm:$0xff] %v565
            %v567 = vld [vmem:[%s205 + $0x5a0] sm:$0xff]
            %568 = vst [vmem:[%s206 + $0x5a0] sm:$0xff] %v567
            %v569 = vld [vmem:[%s205 + $0x5a8] sm:$0xff]
            %570 = vst [vmem:[%s206 + $0x5a8] sm:$0xff] %v569
            %v571 = vld [vmem:[%s205 + $0x5b0] sm:$0xff]
            %572 = vst [vmem:[%s206 + $0x5b0] sm:$0xff] %v571
            %v573 = vld [vmem:[%s205 + $0x5b8] sm:$0xff]
            %574 = vst [vmem:[%s206 + $0x5b8] sm:$0xff] %v573
            %v575 = vld [vmem:[%s205 + $0x5c0] sm:$0xff]
            %576 = vst [vmem:[%s206 + $0x5c0] sm:$0xff] %v575
            %v577 = vld [vmem:[%s205 + $0x5c8] sm:$0xff]
            %578 = vst [vmem:[%s206 + $0x5c8] sm:$0xff] %v577
            %v579 = vld [vmem:[%s205 + $0x5d0] sm:$0xff]
            %580 = vst [vmem:[%s206 + $0x5d0] sm:$0xff] %v579
            %v581 = vld [vmem:[%s205 + $0x5d8] sm:$0xff]
            %582 = vst [vmem:[%s206 + $0x5d8] sm:$0xff] %v581
            %v583 = vld [vmem:[%s205 + $0x5e0] sm:$0xff]
            %584 = vst [vmem:[%s206 + $0x5e0] sm:$0xff] %v583
            %v585 = vld [vmem:[%s205 + $0x5e8] sm:$0xff]
            %586 = vst [vmem:[%s206 + $0x5e8] sm:$0xff] %v585
            %v587 = vld [vmem:[%s205 + $0x5f0] sm:$0xff]
            %588 = vst [vmem:[%s206 + $0x5f0] sm:$0xff] %v587
            %v589 = vld [vmem:[%s205 + $0x5f8] sm:$0xff]
            %590 = vst [vmem:[%s206 + $0x5f8] sm:$0xff] %v589
            %v591 = vld [vmem:[%s205 + $0x600] sm:$0xff]
            %592 = vst [vmem:[%s206 + $0x600] sm:$0xff] %v591
            %v593 = vld [vmem:[%s205 + $0x608] sm:$0xff]
            %594 = vst [vmem:[%s206 + $0x608] sm:$0xff] %v593
            %v595 = vld [vmem:[%s205 + $0x610] sm:$0xff]
            %596 = vst [vmem:[%s206 + $0x610] sm:$0xff] %v595
            %v597 = vld [vmem:[%s205 + $0x618] sm:$0xff]
            %598 = vst [vmem:[%s206 + $0x618] sm:$0xff] %v597
            %v599 = vld [vmem:[%s205 + $0x620] sm:$0xff]
            %600 = vst [vmem:[%s206 + $0x620] sm:$0xff] %v599
            %v601 = vld [vmem:[%s205 + $0x628] sm:$0xff]
            %602 = vst [vmem:[%s206 + $0x628] sm:$0xff] %v601
            %v603 = vld [vmem:[%s205 + $0x630] sm:$0xff]
            %604 = vst [vmem:[%s206 + $0x630] sm:$0xff] %v603
            %v605 = vld [vmem:[%s205 + $0x638] sm:$0xff]
            %606 = vst [vmem:[%s206 + $0x638] sm:$0xff] %v605
            %v607 = vld [vmem:[%s205 + $0x640] sm:$0xff]
            %608 = vst [vmem:[%s206 + $0x640] sm:$0xff] %v607
            %v609 = vld [vmem:[%s205 + $0x648] sm:$0xff]
            %610 = vst [vmem:[%s206 + $0x648] sm:$0xff] %v609
            %v611 = vld [vmem:[%s205 + $0x650] sm:$0xff]
            %612 = vst [vmem:[%s206 + $0x650] sm:$0xff] %v611
            %v613 = vld [vmem:[%s205 + $0x658] sm:$0xff]
            %614 = vst [vmem:[%s206 + $0x658] sm:$0xff] %v613
            %v615 = vld [vmem:[%s205 + $0x660] sm:$0xff]
            %616 = vst [vmem:[%s206 + $0x660] sm:$0xff] %v615
            %v617 = vld [vmem:[%s205 + $0x668] sm:$0xff]
            %618 = vst [vmem:[%s206 + $0x668] sm:$0xff] %v617
            %v619 = vld [vmem:[%s205 + $0x670] sm:$0xff]
            %620 = vst [vmem:[%s206 + $0x670] sm:$0xff] %v619
            %v621 = vld [vmem:[%s205 + $0x678] sm:$0xff]
            %622 = vst [vmem:[%s206 + $0x678] sm:$0xff] %v621
            %v623 = vld [vmem:[%s205 + $0x680] sm:$0xff]
            %624 = vst [vmem:[%s206 + $0x680] sm:$0xff] %v623
            %v625 = vld [vmem:[%s205 + $0x688] sm:$0xff]
            %626 = vst [vmem:[%s206 + $0x688] sm:$0xff] %v625
            %v627 = vld [vmem:[%s205 + $0x690] sm:$0xff]
            %628 = vst [vmem:[%s206 + $0x690] sm:$0xff] %v627
            %v629 = vld [vmem:[%s205 + $0x698] sm:$0xff]
            %630 = vst [vmem:[%s206 + $0x698] sm:$0xff] %v629
            %v631 = vld [vmem:[%s205 + $0x6a0] sm:$0xff]
            %632 = vst [vmem:[%s206 + $0x6a0] sm:$0xff] %v631
            %v633 = vld [vmem:[%s205 + $0x6a8] sm:$0xff]
            %634 = vst [vmem:[%s206 + $0x6a8] sm:$0xff] %v633
            %v635 = vld [vmem:[%s205 + $0x6b0] sm:$0xff]
            %636 = vst [vmem:[%s206 + $0x6b0] sm:$0xff] %v635
            %v637 = vld [vmem:[%s205 + $0x6b8] sm:$0xff]
            %638 = vst [vmem:[%s206 + $0x6b8] sm:$0xff] %v637
            %v639 = vld [vmem:[%s205 + $0x6c0] sm:$0xff]
            %640 = vst [vmem:[%s206 + $0x6c0] sm:$0xff] %v639
            %v641 = vld [vmem:[%s205 + $0x6c8] sm:$0xff]
            %642 = vst [vmem:[%s206 + $0x6c8] sm:$0xff] %v641
            %v643 = vld [vmem:[%s205 + $0x6d0] sm:$0xff]
            %644 = vst [vmem:[%s206 + $0x6d0] sm:$0xff] %v643
            %v645 = vld [vmem:[%s205 + $0x6d8] sm:$0xff]
            %646 = vst [vmem:[%s206 + $0x6d8] sm:$0xff] %v645
            %v647 = vld [vmem:[%s205 + $0x6e0] sm:$0xff]
            %648 = vst [vmem:[%s206 + $0x6e0] sm:$0xff] %v647
            %v649 = vld [vmem:[%s205 + $0x6e8] sm:$0xff]
            %650 = vst [vmem:[%s206 + $0x6e8] sm:$0xff] %v649
            %v651 = vld [vmem:[%s205 + $0x6f0] sm:$0xff]
            %652 = vst [vmem:[%s206 + $0x6f0] sm:$0xff] %v651
            %v653 = vld [vmem:[%s205 + $0x6f8] sm:$0xff]
            %654 = vst [vmem:[%s206 + $0x6f8] sm:$0xff] %v653
            %v655 = vld [vmem:[%s205 + $0x700] sm:$0xff]
            %656 = vst [vmem:[%s206 + $0x700] sm:$0xff] %v655
            %v657 = vld [vmem:[%s205 + $0x708] sm:$0xff]
            %658 = vst [vmem:[%s206 + $0x708] sm:$0xff] %v657
            %v659 = vld [vmem:[%s205 + $0x710] sm:$0xff]
            %660 = vst [vmem:[%s206 + $0x710] sm:$0xff] %v659
            %v661 = vld [vmem:[%s205 + $0x718] sm:$0xff]
            %662 = vst [vmem:[%s206 + $0x718] sm:$0xff] %v661
            %v663 = vld [vmem:[%s205 + $0x720] sm:$0xff]
            %664 = vst [vmem:[%s206 + $0x720] sm:$0xff] %v663
            %v665 = vld [vmem:[%s205 + $0x728] sm:$0xff]
            %666 = vst [vmem:[%s206 + $0x728] sm:$0xff] %v665
            %v667 = vld [vmem:[%s205 + $0x730] sm:$0xff]
            %668 = vst [vmem:[%s206 + $0x730] sm:$0xff] %v667
            %v669 = vld [vmem:[%s205 + $0x738] sm:$0xff]
            %670 = vst [vmem:[%s206 + $0x738] sm:$0xff] %v669
            %v671 = vld [vmem:[%s205 + $0x740] sm:$0xff]
            %672 = vst [vmem:[%s206 + $0x740] sm:$0xff] %v671
            %v673 = vld [vmem:[%s205 + $0x748] sm:$0xff]
            %674 = vst [vmem:[%s206 + $0x748] sm:$0xff] %v673
            %v675 = vld [vmem:[%s205 + $0x750] sm:$0xff]
            %676 = vst [vmem:[%s206 + $0x750] sm:$0xff] %v675
            %v677 = vld [vmem:[%s205 + $0x758] sm:$0xff]
            %678 = vst [vmem:[%s206 + $0x758] sm:$0xff] %v677
            %v679 = vld [vmem:[%s205 + $0x760] sm:$0xff]
            %680 = vst [vmem:[%s206 + $0x760] sm:$0xff] %v679
            %v681 = vld [vmem:[%s205 + $0x768] sm:$0xff]
            %682 = vst [vmem:[%s206 + $0x768] sm:$0xff] %v681
            %v683 = vld [vmem:[%s205 + $0x770] sm:$0xff]
            %684 = vst [vmem:[%s206 + $0x770] sm:$0xff] %v683
            %v685 = vld [vmem:[%s205 + $0x778] sm:$0xff]
            %686 = vst [vmem:[%s206 + $0x778] sm:$0xff] %v685
            %v687 = vld [vmem:[%s205 + $0x780] sm:$0xff]
            %688 = vst [vmem:[%s206 + $0x780] sm:$0xff] %v687
            %v689 = vld [vmem:[%s205 + $0x788] sm:$0xff]
            %690 = vst [vmem:[%s206 + $0x788] sm:$0xff] %v689
            %v691 = vld [vmem:[%s205 + $0x790] sm:$0xff]
            %692 = vst [vmem:[%s206 + $0x790] sm:$0xff] %v691
            %v693 = vld [vmem:[%s205 + $0x798] sm:$0xff]
            %694 = vst [vmem:[%s206 + $0x798] sm:$0xff] %v693
            %v695 = vld [vmem:[%s205 + $0x7a0] sm:$0xff]
            %696 = vst [vmem:[%s206 + $0x7a0] sm:$0xff] %v695
            %v697 = vld [vmem:[%s205 + $0x7a8] sm:$0xff]
            %698 = vst [vmem:[%s206 + $0x7a8] sm:$0xff] %v697
            %v699 = vld [vmem:[%s205 + $0x7b0] sm:$0xff]
            %700 = vst [vmem:[%s206 + $0x7b0] sm:$0xff] %v699
            %v701 = vld [vmem:[%s205 + $0x7b8] sm:$0xff]
            %702 = vst [vmem:[%s206 + $0x7b8] sm:$0xff] %v701
            %v703 = vld [vmem:[%s205 + $0x7c0] sm:$0xff]
            %704 = vst [vmem:[%s206 + $0x7c0] sm:$0xff] %v703
            %v705 = vld [vmem:[%s205 + $0x7c8] sm:$0xff]
            %706 = vst [vmem:[%s206 + $0x7c8] sm:$0xff] %v705
            %v707 = vld [vmem:[%s205 + $0x7d0] sm:$0xff]
            %708 = vst [vmem:[%s206 + $0x7d0] sm:$0xff] %v707
            %v709 = vld [vmem:[%s205 + $0x7d8] sm:$0xff]
            %710 = vst [vmem:[%s206 + $0x7d8] sm:$0xff] %v709
          $region45: #{inconv_forward.1} parent=39 // loop_footer
            %s204 = sadd.s32 1, %s200
          $region46: #{inconv_forward.1} parent=39 // loop_footer_branch
            %199 = sbr.rel target = $region42
          $region47: #{inconv_forward.1} parent=39 // loop_exit
            _
        $region40: #{inconv_forward.1} parent=35 // pred_fallthru
          _
        // Predicated region
        $region48: #{inconv_forward.1} parent=35 // pred_check
          _
        $region49: #{inconv_forward.1} parent=35 // pred_check_branch
          %712 = sbr.rel target = $region51
        $region50: #{inconv_forward.1} parent=35 // pred_region
          _
        $region51: #{inconv_forward.1} parent=35 // pred_fallthru
          _
        // Predicated region
        $region52: #{inconv_forward.1} parent=35 // pred_check
          _
        $region53: #{inconv_forward.1} parent=35 // pred_check_branch
          %715 = sbr.rel (0) target = $region55
        $region54: #{inconv_forward.1} parent=35 // pred_region
          %716 = vsyncadd [#allocation4], 32256
        $region55: #{inconv_forward.1} parent=35 // pred_fallthru
          _
        %v717 = vld [vmem:[%s0] sm:$0xff]
        %v718 = vld [vmem:[%s0 + $0x8] sm:$0xff]
        %v719 = vld [vmem:[%s0 + $0x10] sm:$0xff]
        %v720 = vld [vmem:[%s0 + $0x18] sm:$0xff]
        %v721 = vld [vmem:[%s1] sm:$0xff]
        %v722 = vld [vmem:[%s1 + $0x8] sm:$0xff]
        %v723 = vld [vmem:[%s1 + $0x10] sm:$0xff]
        %v724 = vld [vmem:[%s1 + $0x18] sm:$0xff]
        %v725 = vld [vmem:[%s1 + $0x20] sm:$0xff]
        %v726 = vld [vmem:[%s1 + $0x28] sm:$0xff]
        %v727 = vld [vmem:[%s1 + $0x30] sm:$0xff]
        %v728 = vld [vmem:[%s1 + $0x38] sm:$0xff]
        %v729 = vld [vmem:[%s1 + $0x40] sm:$0xff]
        %v730 = vld [vmem:[%s1 + $0x48] sm:$0xff]
        %v731 = vld [vmem:[%s1 + $0x50] sm:$0xff]
        %v732 = vld [vmem:[%s1 + $0x58] sm:$0xff]
        %v733 = vld [vmem:[%s1 + $0x60] sm:$0xff]
        %v734 = vld [vmem:[%s1 + $0x68] sm:$0xff]
        %v735 = vld [vmem:[%s1 + $0x70] sm:$0xff]
        %v736 = vld [vmem:[%s1 + $0x78] sm:$0xff]
        %v737 = vld [vmem:[%s1 + $0x80] sm:$0xff]
        %v738 = vld [vmem:[%s1 + $0x88] sm:$0xff]
        %v739 = vld [vmem:[%s1 + $0x90] sm:$0xff]
        %v740 = vld [vmem:[%s1 + $0x98] sm:$0xff]
        %v741 = vld [vmem:[%s1 + $0xa0] sm:$0xff]
        %v742 = vld [vmem:[%s1 + $0xa8] sm:$0xff]
        %v743 = vld [vmem:[%s1 + $0xb0] sm:$0xff]
        %v744 = vld [vmem:[%s1 + $0xb8] sm:$0xff]
        %v745 = vld [vmem:[%s1 + $0xc0] sm:$0xff]
        %v746 = vld [vmem:[%s1 + $0xc8] sm:$0xff]
        %v747 = vld [vmem:[%s1 + $0xd0] sm:$0xff]
        %v748 = vld [vmem:[%s1 + $0xd8] sm:$0xff]
        %v749 = vld [vmem:[%s1 + $0xe0] sm:$0xff]
        %v750 = vld [vmem:[%s1 + $0xe8] sm:$0xff]
        %v751 = vld [vmem:[%s1 + $0xf0] sm:$0xff]
        %v752 = vld [vmem:[%s1 + $0xf8] sm:$0xff]
        %v753 = vld [vmem:[%s1 + $0x100] sm:$0xff]
        %v754 = vld [vmem:[%s1 + $0x108] sm:$0xff]
        %v755 = vld [vmem:[%s1 + $0x110] sm:$0xff]
        %v756 = vld [vmem:[%s1 + $0x118] sm:$0xff]
        %v757 = vld [vmem:[%s1 + $0x120] sm:$0xff]
        %v758 = vld [vmem:[%s1 + $0x128] sm:$0xff]
        %v759 = vld [vmem:[%s1 + $0x130] sm:$0xff]
        %v760 = vld [vmem:[%s1 + $0x138] sm:$0xff]
        %v761 = vld [vmem:[%s1 + $0x140] sm:$0xff]
        %v762 = vld [vmem:[%s1 + $0x148] sm:$0xff]
        %v763 = vld [vmem:[%s1 + $0x150] sm:$0xff]
        %v764 = vld [vmem:[%s1 + $0x158] sm:$0xff]
        %v765 = vld [vmem:[%s1 + $0x160] sm:$0xff]
        %v766 = vld [vmem:[%s1 + $0x168] sm:$0xff]
        %v767 = vld [vmem:[%s1 + $0x170] sm:$0xff]
        %v768 = vld [vmem:[%s1 + $0x178] sm:$0xff]
        %v769 = vld [vmem:[%s1 + $0x180] sm:$0xff]
        %v770 = vld [vmem:[%s1 + $0x188] sm:$0xff]
        %v771 = vld [vmem:[%s1 + $0x190] sm:$0xff]
        %v772 = vld [vmem:[%s1 + $0x198] sm:$0xff]
        %v773 = vld [vmem:[%s1 + $0x1a0] sm:$0xff]
        %v774 = vld [vmem:[%s1 + $0x1a8] sm:$0xff]
        %v775 = vld [vmem:[%s2] sm:$0xf]
        %v777 = vperm.slane %v775, 0
        %v778 = vperm.slane %v775, 1
        %v779 = vperm.slane %v775, 2
        %v780 = vperm.slane %v775, 3
        %v789 = vunpack.c.l.b16 %v717
        %v790 = vunpack.c.h.b16 %v717
        %v791 = vunpack.c.l.b16 %v718
        %v792 = vunpack.c.h.b16 %v718
        %v793 = vunpack.c.l.b16 %v719
        %v794 = vunpack.c.h.b16 %v719
        %v795 = vunpack.c.l.b16 %v720
        %v796 = vunpack.c.h.b16 %v720
        %v797 = vpack.c.b16 %v791, %v789
        %v798 = vpack.c.b16 %v792, %v790
        %v799 = vpack.c.b16 %v795, %v793
        %v800 = vpack.c.b16 %v796, %v794
        %v857 = vunpack.c.l.b16 %v721
        %v858 = vunpack.c.h.b16 %v721
        %v859 = vunpack.c.l.b16 %v722
        %v860 = vunpack.c.h.b16 %v722
        %v861 = vunpack.c.l.b16 %v723
        %v862 = vunpack.c.h.b16 %v723
        %v863 = vunpack.c.l.b16 %v724
        %v864 = vunpack.c.h.b16 %v724
        %v865 = vunpack.c.l.b16 %v725
        %v866 = vunpack.c.h.b16 %v725
        %v867 = vunpack.c.l.b16 %v726
        %v868 = vunpack.c.h.b16 %v726
        %v869 = vunpack.c.l.b16 %v727
        %v870 = vunpack.c.h.b16 %v727
        %v871 = vunpack.c.l.b16 %v728
        %v872 = vunpack.c.h.b16 %v728
        %v873 = vunpack.c.l.b16 %v729
        %v874 = vunpack.c.h.b16 %v729
        %v875 = vunpack.c.l.b16 %v730
        %v876 = vunpack.c.h.b16 %v730
        %v877 = vunpack.c.l.b16 %v731
        %v878 = vunpack.c.h.b16 %v731
        %v879 = vunpack.c.l.b16 %v732
        %v880 = vunpack.c.h.b16 %v732
        %v881 = vunpack.c.l.b16 %v733
        %v882 = vunpack.c.h.b16 %v733
        %v883 = vunpack.c.l.b16 %v734
        %v884 = vunpack.c.h.b16 %v734
        %v885 = vunpack.c.l.b16 %v735
        %v886 = vunpack.c.h.b16 %v735
        %v887 = vunpack.c.l.b16 %v736
        %v888 = vunpack.c.h.b16 %v736
        %v889 = vunpack.c.l.b16 %v737
        %v890 = vunpack.c.h.b16 %v737
        %v891 = vunpack.c.l.b16 %v738
        %v892 = vunpack.c.h.b16 %v738
        %v893 = vunpack.c.l.b16 %v739
        %v894 = vunpack.c.h.b16 %v739
        %v895 = vunpack.c.l.b16 %v740
        %v896 = vunpack.c.h.b16 %v740
        %v897 = vunpack.c.l.b16 %v741
        %v898 = vunpack.c.h.b16 %v741
        %v899 = vunpack.c.l.b16 %v742
        %v900 = vunpack.c.h.b16 %v742
        %v901 = vunpack.c.l.b16 %v743
        %v902 = vunpack.c.h.b16 %v743
        %v903 = vunpack.c.l.b16 %v744
        %v904 = vunpack.c.h.b16 %v744
        %v905 = vunpack.c.l.b16 %v745
        %v906 = vunpack.c.h.b16 %v745
        %v907 = vunpack.c.l.b16 %v746
        %v908 = vunpack.c.h.b16 %v746
        %v909 = vunpack.c.l.b16 %v747
        %v910 = vunpack.c.h.b16 %v747
        %v911 = vunpack.c.l.b16 %v748
        %v912 = vunpack.c.h.b16 %v748
        %v913 = vunpack.c.l.b16 %v749
        %v914 = vunpack.c.h.b16 %v749
        %v915 = vunpack.c.l.b16 %v750
        %v916 = vunpack.c.h.b16 %v750
        %v917 = vunpack.c.l.b16 %v751
        %v918 = vunpack.c.h.b16 %v751
        %v919 = vunpack.c.l.b16 %v752
        %v920 = vunpack.c.h.b16 %v752
        %v921 = vunpack.c.l.b16 %v753
        %v922 = vunpack.c.h.b16 %v753
        %v923 = vunpack.c.l.b16 %v754
        %v924 = vunpack.c.h.b16 %v754
        %v925 = vunpack.c.l.b16 %v755
        %v926 = vunpack.c.h.b16 %v755
        %v927 = vunpack.c.l.b16 %v756
        %v928 = vunpack.c.h.b16 %v756
        %v929 = vunpack.c.l.b16 %v757
        %v930 = vunpack.c.h.b16 %v757
        %v931 = vunpack.c.l.b16 %v758
        %v932 = vunpack.c.h.b16 %v758
        %v933 = vunpack.c.l.b16 %v759
        %v934 = vunpack.c.h.b16 %v759
        %v935 = vunpack.c.l.b16 %v760
        %v936 = vunpack.c.h.b16 %v760
        %v937 = vunpack.c.l.b16 %v761
        %v938 = vunpack.c.h.b16 %v761
        %v939 = vunpack.c.l.b16 %v762
        %v940 = vunpack.c.h.b16 %v762
        %v941 = vunpack.c.l.b16 %v763
        %v942 = vunpack.c.h.b16 %v763
        %v943 = vunpack.c.l.b16 %v764
        %v944 = vunpack.c.h.b16 %v764
        %v945 = vunpack.c.l.b16 %v765
        %v946 = vunpack.c.h.b16 %v765
        %v947 = vunpack.c.l.b16 %v766
        %v948 = vunpack.c.h.b16 %v766
        %v949 = vunpack.c.l.b16 %v767
        %v950 = vunpack.c.h.b16 %v767
        %v951 = vunpack.c.l.b16 %v768
        %v952 = vunpack.c.h.b16 %v768
        %v953 = vunpack.c.l.b16 %v769
        %v954 = vunpack.c.h.b16 %v769
        %v955 = vunpack.c.l.b16 %v770
        %v956 = vunpack.c.h.b16 %v770
        %v957 = vunpack.c.l.b16 %v771
        %v958 = vunpack.c.h.b16 %v771
        %v959 = vunpack.c.l.b16 %v772
        %v960 = vunpack.c.h.b16 %v772
        %v961 = vunpack.c.l.b16 %v773
        %v962 = vunpack.c.h.b16 %v773
        %v963 = vunpack.c.l.b16 %v774
        %v964 = vunpack.c.h.b16 %v774
        %v965 = vpack.c.b16 %v861, %v857
        %v966 = vpack.c.b16 %v862, %v858
        %v967 = vpack.c.b16 %v863, %v859
        %v968 = vpack.c.b16 %v864, %v860
        %v969 = vpack.c.b16 %v869, %v865
        %v970 = vpack.c.b16 %v870, %v866
        %v971 = vpack.c.b16 %v871, %v867
        %v972 = vpack.c.b16 %v872, %v868
        %v973 = vpack.c.b16 %v877, %v873
        %v974 = vpack.c.b16 %v878, %v874
        %v975 = vpack.c.b16 %v879, %v875
        %v976 = vpack.c.b16 %v880, %v876
        %v977 = vpack.c.b16 %v885, %v881
        %v978 = vpack.c.b16 %v886, %v882
        %v979 = vpack.c.b16 %v887, %v883
        %v980 = vpack.c.b16 %v888, %v884
        %v981 = vpack.c.b16 %v893, %v889
        %v982 = vpack.c.b16 %v894, %v890
        %v983 = vpack.c.b16 %v895, %v891
        %v984 = vpack.c.b16 %v896, %v892
        %v985 = vpack.c.b16 %v901, %v897
        %v986 = vpack.c.b16 %v902, %v898
        %v987 = vpack.c.b16 %v903, %v899
        %v988 = vpack.c.b16 %v904, %v900
        %v989 = vpack.c.b16 %v909, %v905
        %v990 = vpack.c.b16 %v910, %v906
        %v991 = vpack.c.b16 %v911, %v907
        %v992 = vpack.c.b16 %v912, %v908
        %v993 = vpack.c.b16 %v917, %v913
        %v994 = vpack.c.b16 %v918, %v914
        %v995 = vpack.c.b16 %v919, %v915
        %v996 = vpack.c.b16 %v920, %v916
        %v997 = vpack.c.b16 %v925, %v921
        %v998 = vpack.c.b16 %v926, %v922
        %v999 = vpack.c.b16 %v927, %v923
        %v1000 = vpack.c.b16 %v928, %v924
        %v1001 = vpack.c.b16 %v933, %v929
        %v1002 = vpack.c.b16 %v934, %v930
        %v1003 = vpack.c.b16 %v935, %v931
        %v1004 = vpack.c.b16 %v936, %v932
        %v1005 = vpack.c.b16 %v941, %v937
        %v1006 = vpack.c.b16 %v942, %v938
        %v1007 = vpack.c.b16 %v943, %v939
        %v1008 = vpack.c.b16 %v944, %v940
        %v1009 = vpack.c.b16 %v949, %v945
        %v1010 = vpack.c.b16 %v950, %v946
        %v1011 = vpack.c.b16 %v951, %v947
        %v1012 = vpack.c.b16 %v952, %v948
        %v1013 = vpack.c.b16 %v957, %v953
        %v1014 = vpack.c.b16 %v958, %v954
        %v1015 = vpack.c.b16 %v959, %v955
        %v1016 = vpack.c.b16 %v960, %v956
        %v1017 = vpack.c.b16 %v961, %v961
        %v1018 = vpack.c.b16 %v962, %v962
        %v1019 = vpack.c.b16 %v963, %v963
        %v1020 = vpack.c.b16 %v964, %v964
        %vm1073 = vcmask 719872
        %v1075 = vsel %vm1073, %v798, 0
        %v1078 = vsel %vm1073, %v800, 0
        %vm1080 = vcmask 1043456
        %v1082 = vsel %vm1080, %v1017, 0
        %v1085 = vsel %vm1080, %v1018, 0
        %v1088 = vsel %vm1080, %v1019, 0
        %v1091 = vsel %vm1080, %v1020, 0
        %1093 = vmatpush.bf16.msra.mxu0 %v993
        %1094 = vmatpush.bf16.msra.mxu0 %v989
        %1095 = vmatpush.bf16.msra.mxu0 %v985
        %1096 = vmatpush.bf16.msra.mxu0 %v981
        %1097 = vmatpush.bf16.msra.mxu0 %v977
        %1098 = vmatpush.bf16.msra.mxu0 %v973
        %1099 = vmatpush.bf16.msra.mxu0 %v969
        %1100 = vmatpush.bf16.msra.mxu0 %v965
        %1101 = vmatmul.bf16.gmra.mxu0 %v797
        %v1102 = vpop.f32.mrf.mxu0
        %v1103 = vadd.f32 %v777, %v1102
        %v1104 = vpop.f32.mrf.mxu0
        %v1105 = vadd.f32 %v777, %v1104
        %1106 = vmatmul.bf16.gmra.mxu0 %v799
        %v1107 = vpop.f32.mrf.mxu0
        %v1108 = vadd.f32 %v777, %v1107
        %v1109 = vpop.f32.mrf.mxu0
        %v1110 = vadd.f32 %v777, %v1109
        %1111 = vdwg.mxu0
        %1112 = vmatpush.bf16.msra.mxu0 0
        %1113 = vmatpush.bf16.msra.mxu0 0
        %1114 = vmatpush.bf16.msra.mxu0 %v1082
        %1115 = vmatpush.bf16.msra.mxu0 %v1013
        %1116 = vmatpush.bf16.msra.mxu0 %v1009
        %1117 = vmatpush.bf16.msra.mxu0 %v1005
        %1118 = vmatpush.bf16.msra.mxu0 %v1001
        %1119 = vmatpush.bf16.msra.mxu0 %v997
        %1120 = vmatmul.bf16.gmra.mxu0 %v1075
        %v1121 = vpop.f32.mrf.mxu0
        %v1122 = vadd.f32 %v1103, %v1121
        %v1123 = vpop.f32.mrf.mxu0
        %v1124 = vadd.f32 %v1105, %v1123
        %1125 = vmatmul.bf16.gmra.mxu0 %v1078
        %v1126 = vpop.f32.mrf.mxu0
        %v1127 = vadd.f32 %v1108, %v1126
        %v1128 = vpop.f32.mrf.mxu0
        %v1129 = vadd.f32 %v1110, %v1128
        %1130 = vdwg.mxu0
        %1131 = vmatpush.bf16.msra.mxu0 %v994
        %1132 = vmatpush.bf16.msra.mxu0 %v990
        %1133 = vmatpush.bf16.msra.mxu0 %v986
        %1134 = vmatpush.bf16.msra.mxu0 %v982
        %1135 = vmatpush.bf16.msra.mxu0 %v978
        %1136 = vmatpush.bf16.msra.mxu0 %v974
        %1137 = vmatpush.bf16.msra.mxu0 %v970
        %1138 = vmatpush.bf16.msra.mxu0 %v966
        %1139 = vmatmul.bf16.gmra.mxu0 %v797
        %v1140 = vpop.f32.mrf.mxu0
        %v1141 = vadd.f32 %v778, %v1140
        %v1142 = vpop.f32.mrf.mxu0
        %v1143 = vadd.f32 %v778, %v1142
        %1144 = vmatmul.bf16.gmra.mxu0 %v799
        %v1145 = vpop.f32.mrf.mxu0
        %v1146 = vadd.f32 %v778, %v1145
        %v1147 = vpop.f32.mrf.mxu0
        %v1148 = vadd.f32 %v778, %v1147
        %1149 = vdwg.mxu0
        %1150 = vmatpush.bf16.msra.mxu0 0
        %1151 = vmatpush.bf16.msra.mxu0 0
        %1152 = vmatpush.bf16.msra.mxu0 %v1085
        %1153 = vmatpush.bf16.msra.mxu0 %v1014
        %1154 = vmatpush.bf16.msra.mxu0 %v1010
        %1155 = vmatpush.bf16.msra.mxu0 %v1006
        %1156 = vmatpush.bf16.msra.mxu0 %v1002
        %1157 = vmatpush.bf16.msra.mxu0 %v998
        %1158 = vmatmul.bf16.gmra.mxu0 %v1075
        %v1159 = vpop.f32.mrf.mxu0
        %v1160 = vadd.f32 %v1141, %v1159
        %v1161 = vpop.f32.mrf.mxu0
        %v1162 = vadd.f32 %v1143, %v1161
        %1163 = vmatmul.bf16.gmra.mxu0 %v1078
        %v1164 = vpop.f32.mrf.mxu0
        %v1165 = vadd.f32 %v1146, %v1164
        %v1166 = vpop.f32.mrf.mxu0
        %v1167 = vadd.f32 %v1148, %v1166
        %1168 = vdwg.mxu0
        %1169 = vmatpush.bf16.msra.mxu0 %v995
        %1170 = vmatpush.bf16.msra.mxu0 %v991
        %1171 = vmatpush.bf16.msra.mxu0 %v987
        %1172 = vmatpush.bf16.msra.mxu0 %v983
        %1173 = vmatpush.bf16.msra.mxu0 %v979
        %1174 = vmatpush.bf16.msra.mxu0 %v975
        %1175 = vmatpush.bf16.msra.mxu0 %v971
        %1176 = vmatpush.bf16.msra.mxu0 %v967
        %1177 = vmatmul.bf16.gmra.mxu0 %v797
        %v1178 = vpop.f32.mrf.mxu0
        %v1179 = vadd.f32 %v779, %v1178
        %v1180 = vpop.f32.mrf.mxu0
        %v1181 = vadd.f32 %v779, %v1180
        %1182 = vmatmul.bf16.gmra.mxu0 %v799
        %v1183 = vpop.f32.mrf.mxu0
        %v1184 = vadd.f32 %v779, %v1183
        %v1185 = vpop.f32.mrf.mxu0
        %v1186 = vadd.f32 %v779, %v1185
        %1187 = vdwg.mxu0
        %1188 = vmatpush.bf16.msra.mxu0 0
        %1189 = vmatpush.bf16.msra.mxu0 0
        %1190 = vmatpush.bf16.msra.mxu0 %v1088
        %1191 = vmatpush.bf16.msra.mxu0 %v1015
        %1192 = vmatpush.bf16.msra.mxu0 %v1011
        %1193 = vmatpush.bf16.msra.mxu0 %v1007
        %1194 = vmatpush.bf16.msra.mxu0 %v1003
        %1195 = vmatpush.bf16.msra.mxu0 %v999
        %1196 = vmatmul.bf16.gmra.mxu0 %v1075
        %v1197 = vpop.f32.mrf.mxu0
        %v1198 = vadd.f32 %v1179, %v1197
        %v1199 = vpop.f32.mrf.mxu0
        %v1200 = vadd.f32 %v1181, %v1199
        %1201 = vmatmul.bf16.gmra.mxu0 %v1078
        %v1202 = vpop.f32.mrf.mxu0
        %v1203 = vadd.f32 %v1184, %v1202
        %v1204 = vpop.f32.mrf.mxu0
        %v1205 = vadd.f32 %v1186, %v1204
        %1206 = vdwg.mxu0
        %1207 = vmatpush.bf16.msra.mxu0 %v996
        %1208 = vmatpush.bf16.msra.mxu0 %v992
        %1209 = vmatpush.bf16.msra.mxu0 %v988
        %1210 = vmatpush.bf16.msra.mxu0 %v984
        %1211 = vmatpush.bf16.msra.mxu0 %v980
        %1212 = vmatpush.bf16.msra.mxu0 %v976
        %1213 = vmatpush.bf16.msra.mxu0 %v972
        %1214 = vmatpush.bf16.msra.mxu0 %v968
        %1215 = vmatmul.bf16.gmra.mxu0 %v797
        %v1216 = vpop.f32.mrf.mxu0
        %v1217 = vadd.f32 %v780, %v1216
        %v1218 = vpop.f32.mrf.mxu0
        %v1219 = vadd.f32 %v780, %v1218
        %1220 = vmatmul.bf16.gmra.mxu0 %v799
        %v1221 = vpop.f32.mrf.mxu0
        %v1222 = vadd.f32 %v780, %v1221
        %v1223 = vpop.f32.mrf.mxu0
        %v1224 = vadd.f32 %v780, %v1223
        %1225 = vdwg.mxu0
        %1226 = vmatpush.bf16.msra.mxu0 0
        %1227 = vmatpush.bf16.msra.mxu0 0
        %1228 = vmatpush.bf16.msra.mxu0 %v1091
        %1229 = vmatpush.bf16.msra.mxu0 %v1016
        %1230 = vmatpush.bf16.msra.mxu0 %v1012
        %1231 = vmatpush.bf16.msra.mxu0 %v1008
        %1232 = vmatpush.bf16.msra.mxu0 %v1004
        %1233 = vmatpush.bf16.msra.mxu0 %v1000
        %1234 = vmatmul.bf16.gmra.mxu0 %v1075
        %v1235 = vpop.f32.mrf.mxu0
        %v1236 = vadd.f32 %v1217, %v1235
        %v1237 = vpop.f32.mrf.mxu0
        %v1238 = vadd.f32 %v1219, %v1237
        %1239 = vmatmul.bf16.gmra.mxu0 %v1078
        %v1240 = vpop.f32.mrf.mxu0
        %v1241 = vadd.f32 %v1222, %v1240
        %v1242 = vpop.f32.mrf.mxu0
        %v1243 = vadd.f32 %v1224, %v1242
        %1244 = vdwg.mxu0
        %v1245 = vmax.f32 %v1122, 0.0
        %v1246 = vmax.f32 %v1160, 0.0
        %v1247 = vmax.f32 %v1198, 0.0
        %v1248 = vmax.f32 %v1236, 0.0
        %v1249 = vmax.f32 %v1124, 0.0
        %v1250 = vmax.f32 %v1162, 0.0
        %v1251 = vmax.f32 %v1200, 0.0
        %v1252 = vmax.f32 %v1238, 0.0
        %v1253 = vmax.f32 %v1127, 0.0
        %v1254 = vmax.f32 %v1165, 0.0
        %v1255 = vmax.f32 %v1203, 0.0
        %v1256 = vmax.f32 %v1241, 0.0
        %v1257 = vmax.f32 %v1129, 0.0
        %v1258 = vmax.f32 %v1167, 0.0
        %v1259 = vmax.f32 %v1205, 0.0
        %v1260 = vmax.f32 %v1243, 0.0
        %v1261 = vlaneseq
        %vm1262 = vcmp.ge.s32.totalorder %v1261, 0
        %vm1263 = vcmp.lt.s32.totalorder %v1261, 672
        %vm1264 = vmand %vm1262, %vm1263
        %s1265 = scalar_lea.vmem [#allocation3], 7
        %1266 = vst.msk [vmem:[%s1265] ss:$8 sm:$0xf] %vm1264, 0.0
        %1267 = vst.msk [vmem:[%s1265] ss:$8 sm:$0x30] %vm1264, 0.0
        %s1268 = scalar_lea.vmem [#allocation3], 240
        %1269 = vst.msk [vmem:[%s1268] ss:$8 sm:$0xf] %vm1264, 0.0
        %1270 = vst.msk [vmem:[%s1268] ss:$8 sm:$0x30] %vm1264, 0.0
        %1271 = vst [vmem:[#allocation3 + $0x30] sm:$0xff] 0.0
        %1272 = vst [vmem:[#allocation3 + $0x60] sm:$0xff] 0.0
        %1273 = vst [vmem:[#allocation3 + $0x90] sm:$0xff] 0.0
        %1274 = vst [vmem:[#allocation3 + $0xc0] sm:$0xff] 0.0
        %vm1275 = vcmask 261120
        %1276 = vst.msk [vmem:[#allocation3 + $0x58] sm:$0xff] %vm1275, 0.0
        %1277 = vst.msk [vmem:[#allocation3 + $0x88] sm:$0xff] %vm1275, 0.0
        %1278 = vst.msk [vmem:[#allocation3 + $0xb8] sm:$0xff] %vm1275, 0.0
        %1279 = vst.msk [vmem:[#allocation3 + $0xe8] sm:$0xff] %vm1275, 0.0
        %1280 = vst [vmem:[#allocation3 + $0x38] sm:$0xff] %v1245
        %1281 = vst [vmem:[#allocation3 + $0x40] sm:$0xff] %v1246
        %1282 = vst [vmem:[#allocation3 + $0x48] sm:$0xff] %v1247
        %1283 = vst [vmem:[#allocation3 + $0x50] sm:$0xff] %v1248
        %1284 = vst [vmem:[#allocation3 + $0x68] sm:$0xff] %v1249
        %1285 = vst [vmem:[#allocation3 + $0x70] sm:$0xff] %v1250
        %1286 = vst [vmem:[#allocation3 + $0x78] sm:$0xff] %v1251
        %1287 = vst [vmem:[#allocation3 + $0x80] sm:$0xff] %v1252
        %1288 = vst [vmem:[#allocation3 + $0x98] sm:$0xff] %v1253
        %1289 = vst [vmem:[#allocation3 + $0xa0] sm:$0xff] %v1254
        %1290 = vst [vmem:[#allocation3 + $0xa8] sm:$0xff] %v1255
        %1291 = vst [vmem:[#allocation3 + $0xb0] sm:$0xff] %v1256
        %1292 = vst [vmem:[#allocation3 + $0xc8] sm:$0xff] %v1257
        %1293 = vst [vmem:[#allocation3 + $0xd0] sm:$0xff] %v1258
        %1294 = vst [vmem:[#allocation3 + $0xd8] sm:$0xff] %v1259
        %1295 = vst [vmem:[#allocation3 + $0xe0] sm:$0xff] %v1260
        %v1296 = vlaneseq
        %v1297 = vshrl.u32 %v1296, 7
        %v1298 = vadd.s32 %v1297, 8
        %v1299 = vadd.s32 %v1297, 16
        %v1300 = vadd.s32 %v1297, 24
        %vm1301 = vcmp.lt.s32.totalorder %v1297, 0
        %v1302 = vsub.s32 0, %v1297
        %v1303 = vsel %vm1301, %v1302, %v1297
        %v1304 = vshrl.u32 %v1303, 4
        %v1305 = vand.u32 %v1303, 15
        %v1306 = vsub.s32 0, %v1305
        %v1307 = vsel %vm1301, %v1306, %v1305
        %vm1308 = vcmp.lt.s32.totalorder %v1298, 0
        %v1309 = vsub.s32 0, %v1298
        %v1310 = vsel %vm1308, %v1309, %v1298
        %v1311 = vshrl.u32 %v1310, 4
        %v1312 = vand.u32 %v1310, 15
        %v1313 = vsub.s32 0, %v1312
        %v1314 = vsel %vm1308, %v1313, %v1312
        %vm1315 = vcmp.lt.s32.totalorder %v1299, 0
        %v1316 = vsub.s32 0, %v1299
        %v1317 = vsel %vm1315, %v1316, %v1299
        %v1318 = vshrl.u32 %v1317, 4
        %v1319 = vand.u32 %v1317, 15
        %v1320 = vsub.s32 0, %v1319
        %v1321 = vsel %vm1315, %v1320, %v1319
        %vm1322 = vcmp.lt.s32.totalorder %v1300, 0
        %v1323 = vsub.s32 0, %v1300
        %v1324 = vsel %vm1322, %v1323, %v1300
        %v1325 = vshrl.u32 %v1324, 4
        %v1326 = vand.u32 %v1324, 15
        %v1327 = vsub.s32 0, %v1326
        %v1328 = vsel %vm1322, %v1327, %v1326
        %vm1329 = vcmp.ne.s32.totalorder %v1307, 0
        %vm1330 = vcmp.ne.s32.totalorder %v1314, 0
        %vm1331 = vcmp.ne.s32.totalorder %v1321, 0
        %vm1332 = vcmp.ne.s32.totalorder %v1328, 0
        %vm1333 = vcmp.lt.s32.totalorder %v1307, 0
        %vm1334 = vcmp.lt.s32.totalorder %v1314, 0
        %vm1335 = vcmp.lt.s32.totalorder %v1321, 0
        %vm1336 = vcmp.lt.s32.totalorder %v1328, 0
        %vm1337 = vmand %vm1333, %vm1329
        %vm1338 = vmand %vm1334, %vm1330
        %vm1339 = vmand %vm1335, %vm1331
        %vm1340 = vmand %vm1336, %vm1332
        %v1341 = vadd.s32 %v1307, 16
        %v1342 = vadd.s32 %v1314, 16
        %v1343 = vadd.s32 %v1321, 16
        %v1344 = vadd.s32 %v1328, 16
        %v1345 = vsel %vm1337, %v1341, %v1307
        %v1346 = vsel %vm1338, %v1342, %v1314
        %v1347 = vsel %vm1339, %v1343, %v1321
        %v1348 = vsel %vm1340, %v1344, %v1328
        %s1349 = smul.u32 4, 3
        %s1350 = smul.u32 %s1349, 84
        %s1351 = smul.u32 %s1350, 2
        %s1352 = sshll.u32 %s1351, 4
        %1353 = dma.done [#allocation4], %s1352
        %v1354 = vld [vmem:[#allocation3] sm:$0x80]
        %v1355 = vld [vmem:[#allocation3 + $0x8] sm:$0x80]
        %v1356 = vld [vmem:[#allocation3 + $0x10] sm:$0x80]
        %v1357 = vld [vmem:[#allocation3 + $0x18] sm:$0x80]
        %v1358 = vld [vmem:[#allocation3 + $0x20] sm:$0x80]
        %v1359 = vld [vmem:[#allocation3 + $0x28] sm:$0x80]
        %v1360 = vld [vmem:[#allocation3 + $0x30] sm:$0xff]
        %v1361 = vld [vmem:[#allocation3 + $0x38] sm:$0xff]
        %v1362 = vld [vmem:[#allocation3 + $0x40] sm:$0xff]
        %v1363 = vld [vmem:[#allocation3 + $0x48] sm:$0xff]
        %v1364 = vld [vmem:[#allocation3 + $0x50] sm:$0xff]
        %v1365 = vld [vmem:[#allocation3 + $0x58] sm:$0xff]
        %v1366 = vld [vmem:[#allocation3 + $0x60] sm:$0xff]
        %v1367 = vld [vmem:[#allocation3 + $0x68] sm:$0xff]
        %v1368 = vld [vmem:[#allocation3 + $0x70] sm:$0xff]
        %v1369 = vld [vmem:[#allocation3 + $0x78] sm:$0xff]
        %v1370 = vld [vmem:[#allocation3 + $0x80] sm:$0xff]
        %v1371 = vld [vmem:[#allocation3 + $0x88] sm:$0xff]
        %v1372 = vld [vmem:[#allocation3 + $0x90] sm:$0xff]
        %v1373 = vld [vmem:[#allocation3 + $0x98] sm:$0xff]
        %v1374 = vld [vmem:[#allocation3 + $0xa0] sm:$0xff]
        %v1375 = vld [vmem:[#allocation3 + $0xa8] sm:$0xff]
        %v1376 = vld [vmem:[#allocation3 + $0xb0] sm:$0xff]
        %v1377 = vld [vmem:[#allocation3 + $0xb8] sm:$0xff]
        %v1378 = vld [vmem:[#allocation3 + $0xc0] sm:$0x7f]
        %v1379 = vld [vmem:[#allocation3 + $0xc8] sm:$0x7f]
        %v1380 = vld [vmem:[#allocation3 + $0xd0] sm:$0x7f]
        %v1381 = vld [vmem:[#allocation3 + $0xd8] sm:$0x7f]
        %v1382 = vld [vmem:[#allocation3 + $0xe0] sm:$0x7f]
        %v1383 = vld [vmem:[#allocation3 + $0xe8] sm:$0x7f]
        %vm1384 = vcmp.ge.s32.totalorder %v1345, 1
        %vm1385 = vcmp.ge.s32.totalorder %v1346, 1
        %vm1386 = vcmp.ge.s32.totalorder %v1347, 1
        %vm1387 = vcmp.ge.s32.totalorder %v1348, 1
        %vm1388 = vcmp.lt.s32.totalorder %v1345, 17
        %vm1389 = vcmp.lt.s32.totalorder %v1346, 17
        %vm1390 = vcmp.lt.s32.totalorder %v1347, 17
        %vm1391 = vcmp.lt.s32.totalorder %v1348, 17
        %vm1392 = vmand %vm1384, %vm1388
        %vm1393 = vmand %vm1385, %vm1389
        %vm1394 = vmand %vm1386, %vm1390
        %vm1395 = vmand %vm1387, %vm1391
        %vm1426 = vcmask 1040384
        %v1427 = vrot.slane %v1354, 7
        %v1428 = vrot.slane %v1360, 7
        %v1429 = vsel %vm1426, %v1427, %v1428
        %v1430 = vrot.slane %v1355, 7
        %v1431 = vrot.slane %v1361, 7
        %v1432 = vsel %vm1426, %v1430, %v1431
        %v1433 = vrot.slane %v1356, 7
        %v1434 = vrot.slane %v1362, 7
        %v1435 = vsel %vm1426, %v1433, %v1434
        %v1436 = vrot.slane %v1357, 7
        %v1437 = vrot.slane %v1363, 7
        %v1438 = vsel %vm1426, %v1436, %v1437
        %v1439 = vrot.slane %v1358, 7
        %v1440 = vrot.slane %v1364, 7
        %v1441 = vsel %vm1426, %v1439, %v1440
        %v1442 = vrot.slane %v1359, 7
        %v1443 = vrot.slane %v1365, 7
        %v1444 = vsel %vm1426, %v1442, %v1443
        %v1445 = vrot.slane %v1366, 7
        %v1446 = vsel %vm1426, %v1428, %v1445
        %v1447 = vrot.slane %v1367, 7
        %v1448 = vsel %vm1426, %v1431, %v1447
        %v1449 = vrot.slane %v1368, 7
        %v1450 = vsel %vm1426, %v1434, %v1449
        %v1451 = vrot.slane %v1369, 7
        %v1452 = vsel %vm1426, %v1437, %v1451
        %v1453 = vrot.slane %v1370, 7
        %v1454 = vsel %vm1426, %v1440, %v1453
        %v1455 = vrot.slane %v1371, 7
        %v1456 = vsel %vm1426, %v1443, %v1455
        %v1457 = vrot.slane %v1372, 7
        %v1458 = vsel %vm1426, %v1445, %v1457
        %v1459 = vrot.slane %v1373, 7
        %v1460 = vsel %vm1426, %v1447, %v1459
        %v1461 = vrot.slane %v1374, 7
        %v1462 = vsel %vm1426, %v1449, %v1461
        %v1463 = vrot.slane %v1375, 7
        %v1464 = vsel %vm1426, %v1451, %v1463
        %v1465 = vrot.slane %v1376, 7
        %v1466 = vsel %vm1426, %v1453, %v1465
        %v1467 = vrot.slane %v1377, 7
        %v1468 = vsel %vm1426, %v1455, %v1467
        %v1469 = vrot.slane %v1378, 7
        %v1470 = vsel %vm1426, %v1457, %v1469
        %v1471 = vrot.slane %v1379, 7
        %v1472 = vsel %vm1426, %v1459, %v1471
        %v1473 = vrot.slane %v1380, 7
        %v1474 = vsel %vm1426, %v1461, %v1473
        %v1475 = vrot.slane %v1381, 7
        %v1476 = vsel %vm1426, %v1463, %v1475
        %v1477 = vrot.slane %v1382, 7
        %v1478 = vsel %vm1426, %v1465, %v1477
        %v1479 = vrot.slane %v1383, 7
        %v1480 = vsel %vm1426, %v1467, %v1479
        %v1505 = vsel %vm1392, %v1429, 0.0
        %v1506 = vsel %vm1392, %v1432, 0.0
        %v1507 = vsel %vm1392, %v1435, 0.0
        %v1508 = vsel %vm1392, %v1438, 0.0
        %v1509 = vsel %vm1392, %v1441, 0.0
        %v1510 = vsel %vm1392, %v1444, 0.0
        %v1511 = vsel %vm1393, %v1446, 0.0
        %v1512 = vsel %vm1393, %v1448, 0.0
        %v1513 = vsel %vm1393, %v1450, 0.0
        %v1514 = vsel %vm1393, %v1452, 0.0
        %v1515 = vsel %vm1393, %v1454, 0.0
        %v1516 = vsel %vm1393, %v1456, 0.0
        %v1517 = vsel %vm1394, %v1458, 0.0
        %v1518 = vsel %vm1394, %v1460, 0.0
        %v1519 = vsel %vm1394, %v1462, 0.0
        %v1520 = vsel %vm1394, %v1464, 0.0
        %v1521 = vsel %vm1394, %v1466, 0.0
        %v1522 = vsel %vm1394, %v1468, 0.0
        %v1523 = vsel %vm1395, %v1470, 0.0
        %v1524 = vsel %vm1395, %v1472, 0.0
        %v1525 = vsel %vm1395, %v1474, 0.0
        %v1526 = vsel %vm1395, %v1476, 0.0
        %v1527 = vsel %vm1395, %v1478, 0.0
        %v1528 = vsel %vm1395, %v1480, 0.0
        %v1529 = vpack.c.bf16 %v1511, %v1505
        %v1530 = vpack.c.bf16 %v1512, %v1506
        %v1531 = vpack.c.bf16 %v1513, %v1507
        %v1532 = vpack.c.bf16 %v1514, %v1508
        %v1533 = vpack.c.bf16 %v1515, %v1509
        %v1534 = vpack.c.bf16 %v1516, %v1510
        %v1535 = vpack.c.bf16 %v1523, %v1517
        %v1536 = vpack.c.bf16 %v1524, %v1518
        %v1537 = vpack.c.bf16 %v1525, %v1519
        %v1538 = vpack.c.bf16 %v1526, %v1520
        %v1539 = vpack.c.bf16 %v1527, %v1521
        %v1540 = vpack.c.bf16 %v1528, %v1522
        %v1541 = vld [vmem:[#allocation2] sm:$0xff]
        %v1542 = vld [vmem:[#allocation2 + $0x8] sm:$0xff]
        %v1543 = vld [vmem:[#allocation2 + $0x10] sm:$0xff]
        %v1544 = vld [vmem:[#allocation2 + $0x18] sm:$0xff]
        %v1545 = vld [vmem:[#allocation2 + $0x20] sm:$0xff]
        %v1546 = vld [vmem:[#allocation2 + $0x28] sm:$0xff]
        %v1547 = vld [vmem:[#allocation2 + $0x30] sm:$0xff]
        %v1548 = vld [vmem:[#allocation2 + $0x38] sm:$0xff]
        %v1549 = vld [vmem:[#allocation2 + $0x40] sm:$0xff]
        %v1550 = vld [vmem:[#allocation2 + $0x48] sm:$0xff]
        %v1551 = vld [vmem:[#allocation2 + $0x50] sm:$0xff]
        %v1552 = vld [vmem:[#allocation2 + $0x58] sm:$0xff]
        %v1553 = vld [vmem:[#allocation2 + $0x60] sm:$0xff]
        %v1554 = vld [vmem:[#allocation2 + $0x68] sm:$0xff]
        %v1555 = vld [vmem:[#allocation2 + $0x70] sm:$0xff]
        %v1556 = vld [vmem:[#allocation2 + $0x78] sm:$0xff]
        %v1557 = vld [vmem:[#allocation2 + $0x80] sm:$0xff]
        %v1558 = vld [vmem:[#allocation2 + $0x88] sm:$0xff]
        %v1559 = vld [vmem:[#allocation2 + $0x90] sm:$0xff]
        %v1560 = vld [vmem:[#allocation2 + $0x98] sm:$0xff]
        %v1561 = vld [vmem:[#allocation2 + $0xa0] sm:$0xff]
        %v1562 = vld [vmem:[#allocation2 + $0xa8] sm:$0xff]
        %v1563 = vld [vmem:[#allocation2 + $0xb0] sm:$0xff]
        %v1564 = vld [vmem:[#allocation2 + $0xb8] sm:$0xff]
        %v1565 = vld [vmem:[#allocation2 + $0xc0] sm:$0xff]
        %v1566 = vld [vmem:[#allocation2 + $0xc8] sm:$0xff]
        %v1567 = vld [vmem:[#allocation2 + $0xd0] sm:$0xff]
        %v1568 = vld [vmem:[#allocation2 + $0xd8] sm:$0xff]
        %v1569 = vld [vmem:[#allocation2 + $0xe0] sm:$0xff]
        %v1570 = vld [vmem:[#allocation2 + $0xe8] sm:$0xff]
        %v1571 = vld [vmem:[#allocation2 + $0xf0] sm:$0xff]
        %v1572 = vld [vmem:[#allocation2 + $0xf8] sm:$0xff]
        %v1573 = vld [vmem:[#allocation2 + $0x100] sm:$0xff]
        %v1574 = vld [vmem:[#allocation2 + $0x108] sm:$0xff]
        %v1575 = vld [vmem:[#allocation2 + $0x110] sm:$0xff]
        %v1576 = vld [vmem:[#allocation2 + $0x118] sm:$0xff]
        %v1577 = vld [vmem:[#allocation2 + $0x120] sm:$0xff]
        %v1578 = vld [vmem:[#allocation2 + $0x128] sm:$0xff]
        %v1579 = vld [vmem:[#allocation2 + $0x130] sm:$0xff]
        %v1580 = vld [vmem:[#allocation2 + $0x138] sm:$0xff]
        %v1581 = vld [vmem:[#allocation2 + $0x140] sm:$0xff]
        %v1582 = vld [vmem:[#allocation2 + $0x148] sm:$0xff]
        %v1583 = vld [vmem:[#allocation2 + $0x150] sm:$0xff]
        %v1584 = vld [vmem:[#allocation2 + $0x158] sm:$0xff]
        %v1585 = vld [vmem:[#allocation2 + $0x160] sm:$0xff]
        %v1586 = vld [vmem:[#allocation2 + $0x168] sm:$0xff]
        %v1587 = vld [vmem:[#allocation2 + $0x170] sm:$0xff]
        %v1588 = vld [vmem:[#allocation2 + $0x178] sm:$0xff]
        %v1589 = vld [vmem:[#allocation2 + $0x180] sm:$0xff]
        %v1590 = vld [vmem:[#allocation2 + $0x188] sm:$0xff]
        %v1591 = vld [vmem:[#allocation2 + $0x190] sm:$0xff]
        %v1592 = vld [vmem:[#allocation2 + $0x198] sm:$0xff]
        %v1593 = vld [vmem:[#allocation2 + $0x1a0] sm:$0xff]
        %v1594 = vld [vmem:[#allocation2 + $0x1a8] sm:$0xff]
        %v1595 = vld [vmem:[#allocation2 + $0x1b0] sm:$0xff]
        %v1596 = vld [vmem:[#allocation2 + $0x1b8] sm:$0xff]
        %v1597 = vld [vmem:[#allocation2 + $0x1c0] sm:$0xff]
        %v1598 = vld [vmem:[#allocation2 + $0x1c8] sm:$0xff]
        %v1599 = vld [vmem:[#allocation2 + $0x1d0] sm:$0xff]
        %v1600 = vld [vmem:[#allocation2 + $0x1d8] sm:$0xff]
        %v1601 = vld [vmem:[#allocation2 + $0x1e0] sm:$0xff]
        %v1602 = vld [vmem:[#allocation2 + $0x1e8] sm:$0xff]
        %v1603 = vld [vmem:[#allocation2 + $0x1f0] sm:$0xff]
        %v1604 = vld [vmem:[#allocation2 + $0x1f8] sm:$0xff]
        %v1605 = vld [vmem:[#allocation2 + $0x200] sm:$0xff]
        %v1606 = vld [vmem:[#allocation2 + $0x208] sm:$0xff]
        %v1607 = vld [vmem:[#allocation2 + $0x210] sm:$0xff]
        %v1608 = vld [vmem:[#allocation2 + $0x218] sm:$0xff]
        %v1609 = vld [vmem:[#allocation2 + $0x220] sm:$0xff]
        %v1610 = vld [vmem:[#allocation2 + $0x228] sm:$0xff]
        %v1611 = vld [vmem:[#allocation2 + $0x230] sm:$0xff]
        %v1612 = vld [vmem:[#allocation2 + $0x238] sm:$0xff]
        %v1613 = vld [vmem:[#allocation2 + $0x240] sm:$0xff]
        %v1614 = vld [vmem:[#allocation2 + $0x248] sm:$0xff]
        %v1615 = vld [vmem:[#allocation2 + $0x250] sm:$0xff]
        %v1616 = vld [vmem:[#allocation2 + $0x258] sm:$0xff]
        %v1617 = vld [vmem:[#allocation2 + $0x260] sm:$0xff]
        %v1618 = vld [vmem:[#allocation2 + $0x268] sm:$0xff]
        %v1619 = vld [vmem:[#allocation2 + $0x270] sm:$0xff]
        %v1620 = vld [vmem:[#allocation2 + $0x278] sm:$0xff]
        %v1621 = vld [vmem:[#allocation2 + $0x280] sm:$0xff]
        %v1622 = vld [vmem:[#allocation2 + $0x288] sm:$0xff]
        %v1623 = vld [vmem:[#allocation2 + $0x290] sm:$0xff]
        %v1624 = vld [vmem:[#allocation2 + $0x298] sm:$0xff]
        %v1625 = vld [vmem:[#allocation3 + $0xc0] sm:$0xff]
        %v1626 = vld [vmem:[#allocation3 + $0xc8] sm:$0xff]
        %v1627 = vld [vmem:[#allocation3 + $0xd0] sm:$0xff]
        %v1628 = vld [vmem:[#allocation3 + $0xd8] sm:$0xff]
        %v1629 = vld [vmem:[#allocation3 + $0xe0] sm:$0xff]
        %v1630 = vld [vmem:[#allocation3 + $0xe8] sm:$0xff]
        %v1631 = vpack.c.bf16 %v1366, %v1360
        %v1632 = vpack.c.bf16 %v1367, %v1361
        %v1633 = vpack.c.bf16 %v1368, %v1362
        %v1634 = vpack.c.bf16 %v1369, %v1363
        %v1635 = vpack.c.bf16 %v1370, %v1364
        %v1636 = vpack.c.bf16 %v1371, %v1365
        %v1637 = vpack.c.bf16 %v1625, %v1372
        %v1638 = vpack.c.bf16 %v1626, %v1373
        %v1639 = vpack.c.bf16 %v1627, %v1374
        %v1640 = vpack.c.bf16 %v1628, %v1375
        %v1641 = vpack.c.bf16 %v1629, %v1376
        %v1642 = vpack.c.bf16 %v1630, %v1377
        %s1643 = scalar_lea.vmem [#allocation2], 672
        %v1644 = vld [vmem:[%s1643] sm:$0xff]
        %v1645 = vld [vmem:[%s1643 + $0x8] sm:$0xff]
        %v1646 = vld [vmem:[%s1643 + $0x10] sm:$0xff]
        %v1647 = vld [vmem:[%s1643 + $0x18] sm:$0xff]
        %v1648 = vld [vmem:[%s1643 + $0x20] sm:$0xff]
        %v1649 = vld [vmem:[%s1643 + $0x28] sm:$0xff]
        %v1650 = vld [vmem:[%s1643 + $0x30] sm:$0xff]
        %v1651 = vld [vmem:[%s1643 + $0x38] sm:$0xff]
        %v1652 = vld [vmem:[%s1643 + $0x40] sm:$0xff]
        %v1653 = vld [vmem:[%s1643 + $0x48] sm:$0xff]
        %v1654 = vld [vmem:[%s1643 + $0x50] sm:$0xff]
        %v1655 = vld [vmem:[%s1643 + $0x58] sm:$0xff]
        %v1656 = vld [vmem:[%s1643 + $0x60] sm:$0xff]
        %v1657 = vld [vmem:[%s1643 + $0x68] sm:$0xff]
        %v1658 = vld [vmem:[%s1643 + $0x70] sm:$0xff]
        %v1659 = vld [vmem:[%s1643 + $0x78] sm:$0xff]
        %v1660 = vld [vmem:[%s1643 + $0x80] sm:$0xff]
        %v1661 = vld [vmem:[%s1643 + $0x88] sm:$0xff]
        %v1662 = vld [vmem:[%s1643 + $0x90] sm:$0xff]
        %v1663 = vld [vmem:[%s1643 + $0x98] sm:$0xff]
        %v1664 = vld [vmem:[%s1643 + $0xa0] sm:$0xff]
        %v1665 = vld [vmem:[%s1643 + $0xa8] sm:$0xff]
        %v1666 = vld [vmem:[%s1643 + $0xb0] sm:$0xff]
        %v1667 = vld [vmem:[%s1643 + $0xb8] sm:$0xff]
        %v1668 = vld [vmem:[%s1643 + $0xc0] sm:$0xff]
        %v1669 = vld [vmem:[%s1643 + $0xc8] sm:$0xff]
        %v1670 = vld [vmem:[%s1643 + $0xd0] sm:$0xff]
        %v1671 = vld [vmem:[%s1643 + $0xd8] sm:$0xff]
        %v1672 = vld [vmem:[%s1643 + $0xe0] sm:$0xff]
        %v1673 = vld [vmem:[%s1643 + $0xe8] sm:$0xff]
        %v1674 = vld [vmem:[%s1643 + $0xf0] sm:$0xff]
        %v1675 = vld [vmem:[%s1643 + $0xf8] sm:$0xff]
        %v1676 = vld [vmem:[%s1643 + $0x100] sm:$0xff]
        %v1677 = vld [vmem:[%s1643 + $0x108] sm:$0xff]
        %v1678 = vld [vmem:[%s1643 + $0x110] sm:$0xff]
        %v1679 = vld [vmem:[%s1643 + $0x118] sm:$0xff]
        %v1680 = vld [vmem:[%s1643 + $0x120] sm:$0xff]
        %v1681 = vld [vmem:[%s1643 + $0x128] sm:$0xff]
        %v1682 = vld [vmem:[%s1643 + $0x130] sm:$0xff]
        %v1683 = vld [vmem:[%s1643 + $0x138] sm:$0xff]
        %v1684 = vld [vmem:[%s1643 + $0x140] sm:$0xff]
        %v1685 = vld [vmem:[%s1643 + $0x148] sm:$0xff]
        %v1686 = vld [vmem:[%s1643 + $0x150] sm:$0xff]
        %v1687 = vld [vmem:[%s1643 + $0x158] sm:$0xff]
        %v1688 = vld [vmem:[%s1643 + $0x160] sm:$0xff]
        %v1689 = vld [vmem:[%s1643 + $0x168] sm:$0xff]
        %v1690 = vld [vmem:[%s1643 + $0x170] sm:$0xff]
        %v1691 = vld [vmem:[%s1643 + $0x178] sm:$0xff]
        %v1692 = vld [vmem:[%s1643 + $0x180] sm:$0xff]
        %v1693 = vld [vmem:[%s1643 + $0x188] sm:$0xff]
        %v1694 = vld [vmem:[%s1643 + $0x190] sm:$0xff]
        %v1695 = vld [vmem:[%s1643 + $0x198] sm:$0xff]
        %v1696 = vld [vmem:[%s1643 + $0x1a0] sm:$0xff]
        %v1697 = vld [vmem:[%s1643 + $0x1a8] sm:$0xff]
        %v1698 = vld [vmem:[%s1643 + $0x1b0] sm:$0xff]
        %v1699 = vld [vmem:[%s1643 + $0x1b8] sm:$0xff]
        %v1700 = vld [vmem:[%s1643 + $0x1c0] sm:$0xff]
        %v1701 = vld [vmem:[%s1643 + $0x1c8] sm:$0xff]
        %v1702 = vld [vmem:[%s1643 + $0x1d0] sm:$0xff]
        %v1703 = vld [vmem:[%s1643 + $0x1d8] sm:$0xff]
        %v1704 = vld [vmem:[%s1643 + $0x1e0] sm:$0xff]
        %v1705 = vld [vmem:[%s1643 + $0x1e8] sm:$0xff]
        %v1706 = vld [vmem:[%s1643 + $0x1f0] sm:$0xff]
        %v1707 = vld [vmem:[%s1643 + $0x1f8] sm:$0xff]
        %v1708 = vld [vmem:[%s1643 + $0x200] sm:$0xff]
        %v1709 = vld [vmem:[%s1643 + $0x208] sm:$0xff]
        %v1710 = vld [vmem:[%s1643 + $0x210] sm:$0xff]
        %v1711 = vld [vmem:[%s1643 + $0x218] sm:$0xff]
        %v1712 = vld [vmem:[%s1643 + $0x220] sm:$0xff]
        %v1713 = vld [vmem:[%s1643 + $0x228] sm:$0xff]
        %v1714 = vld [vmem:[%s1643 + $0x230] sm:$0xff]
        %v1715 = vld [vmem:[%s1643 + $0x238] sm:$0xff]
        %v1716 = vld [vmem:[%s1643 + $0x240] sm:$0xff]
        %v1717 = vld [vmem:[%s1643 + $0x248] sm:$0xff]
        %v1718 = vld [vmem:[%s1643 + $0x250] sm:$0xff]
        %v1719 = vld [vmem:[%s1643 + $0x258] sm:$0xff]
        %v1720 = vld [vmem:[%s1643 + $0x260] sm:$0xff]
        %v1721 = vld [vmem:[%s1643 + $0x268] sm:$0xff]
        %v1722 = vld [vmem:[%s1643 + $0x270] sm:$0xff]
        %v1723 = vld [vmem:[%s1643 + $0x278] sm:$0xff]
        %v1724 = vld [vmem:[%s1643 + $0x280] sm:$0xff]
        %v1725 = vld [vmem:[%s1643 + $0x288] sm:$0xff]
        %v1726 = vld [vmem:[%s1643 + $0x290] sm:$0xff]
        %v1727 = vld [vmem:[%s1643 + $0x298] sm:$0xff]
        %v1812 = vunpack.c.l.b16 %v1644
        %v1813 = vunpack.c.h.b16 %v1644
        %v1814 = vunpack.c.l.b16 %v1645
        %v1815 = vunpack.c.h.b16 %v1645
        %v1816 = vunpack.c.l.b16 %v1646
        %v1817 = vunpack.c.h.b16 %v1646
        %v1818 = vunpack.c.l.b16 %v1647
        %v1819 = vunpack.c.h.b16 %v1647
        %v1820 = vunpack.c.l.b16 %v1648
        %v1821 = vunpack.c.h.b16 %v1648
        %v1822 = vunpack.c.l.b16 %v1649
        %v1823 = vunpack.c.h.b16 %v1649
        %v1824 = vunpack.c.l.b16 %v1650
        %v1825 = vunpack.c.h.b16 %v1650
        %v1826 = vunpack.c.l.b16 %v1651
        %v1827 = vunpack.c.h.b16 %v1651
        %v1828 = vunpack.c.l.b16 %v1652
        %v1829 = vunpack.c.h.b16 %v1652
        %v1830 = vunpack.c.l.b16 %v1653
        %v1831 = vunpack.c.h.b16 %v1653
        %v1832 = vunpack.c.l.b16 %v1654
        %v1833 = vunpack.c.h.b16 %v1654
        %v1834 = vunpack.c.l.b16 %v1655
        %v1835 = vunpack.c.h.b16 %v1655
        %v1836 = vunpack.c.l.b16 %v1656
        %v1837 = vunpack.c.h.b16 %v1656
        %v1838 = vunpack.c.l.b16 %v1657
        %v1839 = vunpack.c.h.b16 %v1657
        %v1840 = vunpack.c.l.b16 %v1658
        %v1841 = vunpack.c.h.b16 %v1658
        %v1842 = vunpack.c.l.b16 %v1659
        %v1843 = vunpack.c.h.b16 %v1659
        %v1844 = vunpack.c.l.b16 %v1660
        %v1845 = vunpack.c.h.b16 %v1660
        %v1846 = vunpack.c.l.b16 %v1661
        %v1847 = vunpack.c.h.b16 %v1661
        %v1848 = vunpack.c.l.b16 %v1662
        %v1849 = vunpack.c.h.b16 %v1662
        %v1850 = vunpack.c.l.b16 %v1663
        %v1851 = vunpack.c.h.b16 %v1663
        %v1852 = vunpack.c.l.b16 %v1664
        %v1853 = vunpack.c.h.b16 %v1664
        %v1854 = vunpack.c.l.b16 %v1665
        %v1855 = vunpack.c.h.b16 %v1665
        %v1856 = vunpack.c.l.b16 %v1666
        %v1857 = vunpack.c.h.b16 %v1666
        %v1858 = vunpack.c.l.b16 %v1667
        %v1859 = vunpack.c.h.b16 %v1667
        %v1860 = vunpack.c.l.b16 %v1668
        %v1861 = vunpack.c.h.b16 %v1668
        %v1862 = vunpack.c.l.b16 %v1669
        %v1863 = vunpack.c.h.b16 %v1669
        %v1864 = vunpack.c.l.b16 %v1670
        %v1865 = vunpack.c.h.b16 %v1670
        %v1866 = vunpack.c.l.b16 %v1671
        %v1867 = vunpack.c.h.b16 %v1671
        %v1868 = vunpack.c.l.b16 %v1672
        %v1869 = vunpack.c.h.b16 %v1672
        %v1870 = vunpack.c.l.b16 %v1673
        %v1871 = vunpack.c.h.b16 %v1673
        %v1872 = vunpack.c.l.b16 %v1674
        %v1873 = vunpack.c.h.b16 %v1674
        %v1874 = vunpack.c.l.b16 %v1675
        %v1875 = vunpack.c.h.b16 %v1675
        %v1876 = vunpack.c.l.b16 %v1676
        %v1877 = vunpack.c.h.b16 %v1676
        %v1878 = vunpack.c.l.b16 %v1677
        %v1879 = vunpack.c.h.b16 %v1677
        %v1880 = vunpack.c.l.b16 %v1678
        %v1881 = vunpack.c.h.b16 %v1678
        %v1882 = vunpack.c.l.b16 %v1679
        %v1883 = vunpack.c.h.b16 %v1679
        %v1884 = vunpack.c.l.b16 %v1680
        %v1885 = vunpack.c.h.b16 %v1680
        %v1886 = vunpack.c.l.b16 %v1681
        %v1887 = vunpack.c.h.b16 %v1681
        %v1888 = vunpack.c.l.b16 %v1682
        %v1889 = vunpack.c.h.b16 %v1682
        %v1890 = vunpack.c.l.b16 %v1683
        %v1891 = vunpack.c.h.b16 %v1683
        %v1892 = vunpack.c.l.b16 %v1684
        %v1893 = vunpack.c.h.b16 %v1684
        %v1894 = vunpack.c.l.b16 %v1685
        %v1895 = vunpack.c.h.b16 %v1685
        %v1896 = vunpack.c.l.b16 %v1686
        %v1897 = vunpack.c.h.b16 %v1686
        %v1898 = vunpack.c.l.b16 %v1687
        %v1899 = vunpack.c.h.b16 %v1687
        %v1900 = vunpack.c.l.b16 %v1688
        %v1901 = vunpack.c.h.b16 %v1688
        %v1902 = vunpack.c.l.b16 %v1689
        %v1903 = vunpack.c.h.b16 %v1689
        %v1904 = vunpack.c.l.b16 %v1690
        %v1905 = vunpack.c.h.b16 %v1690
        %v1906 = vunpack.c.l.b16 %v1691
        %v1907 = vunpack.c.h.b16 %v1691
        %v1908 = vunpack.c.l.b16 %v1692
        %v1909 = vunpack.c.h.b16 %v1692
        %v1910 = vunpack.c.l.b16 %v1693
        %v1911 = vunpack.c.h.b16 %v1693
        %v1912 = vunpack.c.l.b16 %v1694
        %v1913 = vunpack.c.h.b16 %v1694
        %v1914 = vunpack.c.l.b16 %v1695
        %v1915 = vunpack.c.h.b16 %v1695
        %v1916 = vunpack.c.l.b16 %v1696
        %v1917 = vunpack.c.h.b16 %v1696
        %v1918 = vunpack.c.l.b16 %v1697
        %v1919 = vunpack.c.h.b16 %v1697
        %v1920 = vunpack.c.l.b16 %v1698
        %v1921 = vunpack.c.h.b16 %v1698
        %v1922 = vunpack.c.l.b16 %v1699
        %v1923 = vunpack.c.h.b16 %v1699
        %v1924 = vunpack.c.l.b16 %v1700
        %v1925 = vunpack.c.h.b16 %v1700
        %v1926 = vunpack.c.l.b16 %v1701
        %v1927 = vunpack.c.h.b16 %v1701
        %v1928 = vunpack.c.l.b16 %v1702
        %v1929 = vunpack.c.h.b16 %v1702
        %v1930 = vunpack.c.l.b16 %v1703
        %v1931 = vunpack.c.h.b16 %v1703
        %v1932 = vunpack.c.l.b16 %v1704
        %v1933 = vunpack.c.h.b16 %v1704
        %v1934 = vunpack.c.l.b16 %v1705
        %v1935 = vunpack.c.h.b16 %v1705
        %v1936 = vunpack.c.l.b16 %v1706
        %v1937 = vunpack.c.h.b16 %v1706
        %v1938 = vunpack.c.l.b16 %v1707
        %v1939 = vunpack.c.h.b16 %v1707
        %v1940 = vunpack.c.l.b16 %v1708
        %v1941 = vunpack.c.h.b16 %v1708
        %v1942 = vunpack.c.l.b16 %v1709
        %v1943 = vunpack.c.h.b16 %v1709
        %v1944 = vunpack.c.l.b16 %v1710
        %v1945 = vunpack.c.h.b16 %v1710
        %v1946 = vunpack.c.l.b16 %v1711
        %v1947 = vunpack.c.h.b16 %v1711
        %v1948 = vunpack.c.l.b16 %v1712
        %v1949 = vunpack.c.h.b16 %v1712
        %v1950 = vunpack.c.l.b16 %v1713
        %v1951 = vunpack.c.h.b16 %v1713
        %v1952 = vunpack.c.l.b16 %v1714
        %v1953 = vunpack.c.h.b16 %v1714
        %v1954 = vunpack.c.l.b16 %v1715
        %v1955 = vunpack.c.h.b16 %v1715
        %v1956 = vunpack.c.l.b16 %v1716
        %v1957 = vunpack.c.h.b16 %v1716
        %v1958 = vunpack.c.l.b16 %v1717
        %v1959 = vunpack.c.h.b16 %v1717
        %v1960 = vunpack.c.l.b16 %v1718
        %v1961 = vunpack.c.h.b16 %v1718
        %v1962 = vunpack.c.l.b16 %v1719
        %v1963 = vunpack.c.h.b16 %v1719
        %v1964 = vunpack.c.l.b16 %v1720
        %v1965 = vunpack.c.h.b16 %v1720
        %v1966 = vunpack.c.l.b16 %v1721
        %v1967 = vunpack.c.h.b16 %v1721
        %v1968 = vunpack.c.l.b16 %v1722
        %v1969 = vunpack.c.h.b16 %v1722
        %v1970 = vunpack.c.l.b16 %v1723
        %v1971 = vunpack.c.h.b16 %v1723
        %v1972 = vunpack.c.l.b16 %v1724
        %v1973 = vunpack.c.h.b16 %v1724
        %v1974 = vunpack.c.l.b16 %v1725
        %v1975 = vunpack.c.h.b16 %v1725
        %v1976 = vunpack.c.l.b16 %v1726
        %v1977 = vunpack.c.h.b16 %v1726
        %v1978 = vunpack.c.l.b16 %v1727
        %v1979 = vunpack.c.h.b16 %v1727
        %v1980 = vpack.c.b16 %v1814, %v1812
        %v1981 = vpack.c.b16 %v1815, %v1813
        %v1982 = vpack.c.b16 %v1818, %v1816
        %v1983 = vpack.c.b16 %v1819, %v1817
        %v1984 = vpack.c.b16 %v1822, %v1820
        %v1985 = vpack.c.b16 %v1823, %v1821
        %v1986 = vpack.c.b16 %v1826, %v1824
        %v1987 = vpack.c.b16 %v1827, %v1825
        %v1988 = vpack.c.b16 %v1830, %v1828
        %v1989 = vpack.c.b16 %v1831, %v1829
        %v1990 = vpack.c.b16 %v1834, %v1832
        %v1991 = vpack.c.b16 %v1835, %v1833
        %v1992 = vpack.c.b16 %v1838, %v1836
        %v1993 = vpack.c.b16 %v1839, %v1837
        %v1994 = vpack.c.b16 %v1842, %v1840
        %v1995 = vpack.c.b16 %v1843, %v1841
        %v1996 = vpack.c.b16 %v1846, %v1844
        %v1997 = vpack.c.b16 %v1847, %v1845
        %v1998 = vpack.c.b16 %v1850, %v1848
        %v1999 = vpack.c.b16 %v1851, %v1849
        %v2000 = vpack.c.b16 %v1854, %v1852
        %v2001 = vpack.c.b16 %v1855, %v1853
        %v2002 = vpack.c.b16 %v1858, %v1856
        %v2003 = vpack.c.b16 %v1859, %v1857
        %v2004 = vpack.c.b16 %v1862, %v1860
        %v2005 = vpack.c.b16 %v1863, %v1861
        %v2006 = vpack.c.b16 %v1866, %v1864
        %v2007 = vpack.c.b16 %v1867, %v1865
        %v2008 = vpack.c.b16 %v1870, %v1868
        %v2009 = vpack.c.b16 %v1871, %v1869
        %v2010 = vpack.c.b16 %v1874, %v1872
        %v2011 = vpack.c.b16 %v1875, %v1873
        %v2012 = vpack.c.b16 %v1878, %v1876
        %v2013 = vpack.c.b16 %v1879, %v1877
        %v2014 = vpack.c.b16 %v1882, %v1880
        %v2015 = vpack.c.b16 %v1883, %v1881
        %v2016 = vpack.c.b16 %v1886, %v1884
        %v2017 = vpack.c.b16 %v1887, %v1885
        %v2018 = vpack.c.b16 %v1890, %v1888
        %v2019 = vpack.c.b16 %v1891, %v1889
        %v2020 = vpack.c.b16 %v1894, %v1892
        %v2021 = vpack.c.b16 %v1895, %v1893
        %v2022 = vpack.c.b16 %v1898, %v1896
        %v2023 = vpack.c.b16 %v1899, %v1897
        %v2024 = vpack.c.b16 %v1902, %v1900
        %v2025 = vpack.c.b16 %v1903, %v1901
        %v2026 = vpack.c.b16 %v1906, %v1904
        %v2027 = vpack.c.b16 %v1907, %v1905
        %v2028 = vpack.c.b16 %v1910, %v1908
        %v2029 = vpack.c.b16 %v1911, %v1909
        %v2030 = vpack.c.b16 %v1914, %v1912
        %v2031 = vpack.c.b16 %v1915, %v1913
        %v2032 = vpack.c.b16 %v1918, %v1916
        %v2033 = vpack.c.b16 %v1919, %v1917
        %v2034 = vpack.c.b16 %v1922, %v1920
        %v2035 = vpack.c.b16 %v1923, %v1921
        %v2036 = vpack.c.b16 %v1926, %v1924
        %v2037 = vpack.c.b16 %v1927, %v1925
        %v2038 = vpack.c.b16 %v1930, %v1928
        %v2039 = vpack.c.b16 %v1931, %v1929
        %v2040 = vpack.c.b16 %v1934, %v1932
        %v2041 = vpack.c.b16 %v1935, %v1933
        %v2042 = vpack.c.b16 %v1938, %v1936
        %v2043 = vpack.c.b16 %v1939, %v1937
        %v2044 = vpack.c.b16 %v1942, %v1940
        %v2045 = vpack.c.b16 %v1943, %v1941
        %v2046 = vpack.c.b16 %v1946, %v1944
        %v2047 = vpack.c.b16 %v1947, %v1945
        %v2048 = vpack.c.b16 %v1950, %v1948
        %v2049 = vpack.c.b16 %v1951, %v1949
        %v2050 = vpack.c.b16 %v1954, %v1952
        %v2051 = vpack.c.b16 %v1955, %v1953
        %v2052 = vpack.c.b16 %v1958, %v1956
        %v2053 = vpack.c.b16 %v1959, %v1957
        %v2054 = vpack.c.b16 %v1962, %v1960
        %v2055 = vpack.c.b16 %v1963, %v1961
        %v2056 = vpack.c.b16 %v1966, %v1964
        %v2057 = vpack.c.b16 %v1967, %v1965
        %v2058 = vpack.c.b16 %v1970, %v1968
        %v2059 = vpack.c.b16 %v1971, %v1969
        %v2060 = vpack.c.b16 %v1974, %v1972
        %v2061 = vpack.c.b16 %v1975, %v1973
        %v2062 = vpack.c.b16 %v1978, %v1976
        %v2063 = vpack.c.b16 %v1979, %v1977
        %v2149 = vsel %vm1275, %v1636, 0
        %v2152 = vsel %vm1275, %v1642, 0
        %2154 = vmatpush.bf16.msra.mxu0 %v1994
        %2155 = vmatpush.bf16.msra.mxu0 %v1992
        %2156 = vmatpush.bf16.msra.mxu0 %v1990
        %2157 = vmatpush.bf16.msra.mxu0 %v1988
        %2158 = vmatpush.bf16.msra.mxu0 %v1986
        %2159 = vmatpush.bf16.msra.mxu0 %v1984
        %2160 = vmatpush.bf16.msra.mxu0 %v1982
        %2161 = vmatpush.bf16.msra.mxu0 %v1980
        %2162 = vmatmul.bf16.gmra.mxu0 %v1631
        %v2163 = vpop.f32.mrf.mxu0
        %v2164 = vadd.f32 0.0, %v2163
        %v2165 = vpop.f32.mrf.mxu0
        %v2166 = vadd.f32 0.0, %v2165
        %2167 = vmatmul.bf16.gmra.mxu0 %v1637
        %v2168 = vpop.f32.mrf.mxu0
        %v2169 = vadd.f32 0.0, %v2168
        %v2170 = vpop.f32.mrf.mxu0
        %v2171 = vadd.f32 0.0, %v2170
        %2172 = vdwg.mxu0
        %2173 = vmatpush.bf16.msra.mxu0 %v2010
        %2174 = vmatpush.bf16.msra.mxu0 %v2008
        %2175 = vmatpush.bf16.msra.mxu0 %v2006
        %2176 = vmatpush.bf16.msra.mxu0 %v2004
        %2177 = vmatpush.bf16.msra.mxu0 %v2002
        %2178 = vmatpush.bf16.msra.mxu0 %v2000
        %2179 = vmatpush.bf16.msra.mxu0 %v1998
        %2180 = vmatpush.bf16.msra.mxu0 %v1996
        %2181 = vmatmul.bf16.gmra.mxu0 %v1632
        %v2182 = vpop.f32.mrf.mxu0
        %v2183 = vadd.f32 %v2164, %v2182
        %v2184 = vpop.f32.mrf.mxu0
        %v2185 = vadd.f32 %v2166, %v2184
        %2186 = vmatmul.bf16.gmra.mxu0 %v1638
        %v2187 = vpop.f32.mrf.mxu0
        %v2188 = vadd.f32 %v2169, %v2187
        %v2189 = vpop.f32.mrf.mxu0
        %v2190 = vadd.f32 %v2171, %v2189
        %2191 = vdwg.mxu0
        %2192 = vmatpush.bf16.msra.mxu0 %v2026
        %2193 = vmatpush.bf16.msra.mxu0 %v2024
        %2194 = vmatpush.bf16.msra.mxu0 %v2022
        %2195 = vmatpush.bf16.msra.mxu0 %v2020
        %2196 = vmatpush.bf16.msra.mxu0 %v2018
        %2197 = vmatpush.bf16.msra.mxu0 %v2016
        %2198 = vmatpush.bf16.msra.mxu0 %v2014
        %2199 = vmatpush.bf16.msra.mxu0 %v2012
        %2200 = vmatmul.bf16.gmra.mxu0 %v1633
        %v2201 = vpop.f32.mrf.mxu0
        %v2202 = vadd.f32 %v2183, %v2201
        %v2203 = vpop.f32.mrf.mxu0
        %v2204 = vadd.f32 %v2185, %v2203
        %2205 = vmatmul.bf16.gmra.mxu0 %v1639
        %v2206 = vpop.f32.mrf.mxu0
        %v2207 = vadd.f32 %v2188, %v2206
        %v2208 = vpop.f32.mrf.mxu0
        %v2209 = vadd.f32 %v2190, %v2208
        %2210 = vdwg.mxu0
        %2211 = vmatpush.bf16.msra.mxu0 %v2042
        %2212 = vmatpush.bf16.msra.mxu0 %v2040
        %2213 = vmatpush.bf16.msra.mxu0 %v2038
        %2214 = vmatpush.bf16.msra.mxu0 %v2036
        %2215 = vmatpush.bf16.msra.mxu0 %v2034
        %2216 = vmatpush.bf16.msra.mxu0 %v2032
        %2217 = vmatpush.bf16.msra.mxu0 %v2030
        %2218 = vmatpush.bf16.msra.mxu0 %v2028
        %2219 = vmatmul.bf16.gmra.mxu0 %v1634
        %v2220 = vpop.f32.mrf.mxu0
        %v2221 = vadd.f32 %v2202, %v2220
        %v2222 = vpop.f32.mrf.mxu0
        %v2223 = vadd.f32 %v2204, %v2222
        %2224 = vmatmul.bf16.gmra.mxu0 %v1640
        %v2225 = vpop.f32.mrf.mxu0
        %v2226 = vadd.f32 %v2207, %v2225
        %v2227 = vpop.f32.mrf.mxu0
        %v2228 = vadd.f32 %v2209, %v2227
        %2229 = vdwg.mxu0
        %2230 = vmatpush.bf16.msra.mxu0 %v2058
        %2231 = vmatpush.bf16.msra.mxu0 %v2056
        %2232 = vmatpush.bf16.msra.mxu0 %v2054
        %2233 = vmatpush.bf16.msra.mxu0 %v2052
        %2234 = vmatpush.bf16.msra.mxu0 %v2050
        %2235 = vmatpush.bf16.msra.mxu0 %v2048
        %2236 = vmatpush.bf16.msra.mxu0 %v2046
        %2237 = vmatpush.bf16.msra.mxu0 %v2044
        %2238 = vmatmul.bf16.gmra.mxu0 %v1635
        %v2239 = vpop.f32.mrf.mxu0
        %v2240 = vadd.f32 %v2221, %v2239
        %v2241 = vpop.f32.mrf.mxu0
        %v2242 = vadd.f32 %v2223, %v2241
        %2243 = vmatmul.bf16.gmra.mxu0 %v1641
        %v2244 = vpop.f32.mrf.mxu0
        %v2245 = vadd.f32 %v2226, %v2244
        %v2246 = vpop.f32.mrf.mxu0
        %v2247 = vadd.f32 %v2228, %v2246
        %2248 = vdwg.mxu0
        %2249 = vmatpush.bf16.msra.mxu0 0
        %2250 = vmatpush.bf16.msra.mxu0 0
        %2251 = vmatpush.bf16.msra.mxu0 0
        %2252 = vmatpush.bf16.msra.mxu0 0
        %2253 = vmatpush.bf16.msra.mxu0 0
        %2254 = vmatpush.bf16.msra.mxu0 0
        %2255 = vmatpush.bf16.msra.mxu0 %v2062
        %2256 = vmatpush.bf16.msra.mxu0 %v2060
        %2257 = vmatmul.bf16.gmra.mxu0 %v2149
        %v2258 = vpop.f32.mrf.mxu0
        %v2259 = vadd.f32 %v2240, %v2258
        %v2260 = vpop.f32.mrf.mxu0
        %v2261 = vadd.f32 %v2242, %v2260
        %2262 = vmatmul.bf16.gmra.mxu0 %v2152
        %v2263 = vpop.f32.mrf.mxu0
        %v2264 = vadd.f32 %v2245, %v2263
        %v2265 = vpop.f32.mrf.mxu0
        %v2266 = vadd.f32 %v2247, %v2265
        %2267 = vdwg.mxu0
        %2268 = vmatpush.bf16.msra.mxu0 %v1995
        %2269 = vmatpush.bf16.msra.mxu0 %v1993
        %2270 = vmatpush.bf16.msra.mxu0 %v1991
        %2271 = vmatpush.bf16.msra.mxu0 %v1989
        %2272 = vmatpush.bf16.msra.mxu0 %v1987
        %2273 = vmatpush.bf16.msra.mxu0 %v1985
        %2274 = vmatpush.bf16.msra.mxu0 %v1983
        %2275 = vmatpush.bf16.msra.mxu0 %v1981
        %2276 = vmatmul.bf16.gmra.mxu0 %v1631
        %v2277 = vpop.f32.mrf.mxu0
        %v2278 = vadd.f32 0.0, %v2277
        %v2279 = vpop.f32.mrf.mxu0
        %v2280 = vadd.f32 0.0, %v2279
        %2281 = vmatmul.bf16.gmra.mxu0 %v1637
        %v2282 = vpop.f32.mrf.mxu0
        %v2283 = vadd.f32 0.0, %v2282
        %v2284 = vpop.f32.mrf.mxu0
        %v2285 = vadd.f32 0.0, %v2284
        %2286 = vdwg.mxu0
        %2287 = vmatpush.bf16.msra.mxu0 %v2011
        %2288 = vmatpush.bf16.msra.mxu0 %v2009
        %2289 = vmatpush.bf16.msra.mxu0 %v2007
        %2290 = vmatpush.bf16.msra.mxu0 %v2005
        %2291 = vmatpush.bf16.msra.mxu0 %v2003
        %2292 = vmatpush.bf16.msra.mxu0 %v2001
        %2293 = vmatpush.bf16.msra.mxu0 %v1999
        %2294 = vmatpush.bf16.msra.mxu0 %v1997
        %2295 = vmatmul.bf16.gmra.mxu0 %v1632
        %v2296 = vpop.f32.mrf.mxu0
        %v2297 = vadd.f32 %v2278, %v2296
        %v2298 = vpop.f32.mrf.mxu0
        %v2299 = vadd.f32 %v2280, %v2298
        %2300 = vmatmul.bf16.gmra.mxu0 %v1638
        %v2301 = vpop.f32.mrf.mxu0
        %v2302 = vadd.f32 %v2283, %v2301
        %v2303 = vpop.f32.mrf.mxu0
        %v2304 = vadd.f32 %v2285, %v2303
        %2305 = vdwg.mxu0
        %2306 = vmatpush.bf16.msra.mxu0 %v2027
        %2307 = vmatpush.bf16.msra.mxu0 %v2025
        %2308 = vmatpush.bf16.msra.mxu0 %v2023
        %2309 = vmatpush.bf16.msra.mxu0 %v2021
        %2310 = vmatpush.bf16.msra.mxu0 %v2019
        %2311 = vmatpush.bf16.msra.mxu0 %v2017
        %2312 = vmatpush.bf16.msra.mxu0 %v2015
        %2313 = vmatpush.bf16.msra.mxu0 %v2013
        %2314 = vmatmul.bf16.gmra.mxu0 %v1633
        %v2315 = vpop.f32.mrf.mxu0
        %v2316 = vadd.f32 %v2297, %v2315
        %v2317 = vpop.f32.mrf.mxu0
        %v2318 = vadd.f32 %v2299, %v2317
        %2319 = vmatmul.bf16.gmra.mxu0 %v1639
        %v2320 = vpop.f32.mrf.mxu0
        %v2321 = vadd.f32 %v2302, %v2320
        %v2322 = vpop.f32.mrf.mxu0
        %v2323 = vadd.f32 %v2304, %v2322
        %2324 = vdwg.mxu0
        %2325 = vmatpush.bf16.msra.mxu0 %v2043
        %2326 = vmatpush.bf16.msra.mxu0 %v2041
        %2327 = vmatpush.bf16.msra.mxu0 %v2039
        %2328 = vmatpush.bf16.msra.mxu0 %v2037
        %2329 = vmatpush.bf16.msra.mxu0 %v2035
        %2330 = vmatpush.bf16.msra.mxu0 %v2033
        %2331 = vmatpush.bf16.msra.mxu0 %v2031
        %2332 = vmatpush.bf16.msra.mxu0 %v2029
        %2333 = vmatmul.bf16.gmra.mxu0 %v1634
        %v2334 = vpop.f32.mrf.mxu0
        %v2335 = vadd.f32 %v2316, %v2334
        %v2336 = vpop.f32.mrf.mxu0
        %v2337 = vadd.f32 %v2318, %v2336
        %2338 = vmatmul.bf16.gmra.mxu0 %v1640
        %v2339 = vpop.f32.mrf.mxu0
        %v2340 = vadd.f32 %v2321, %v2339
        %v2341 = vpop.f32.mrf.mxu0
        %v2342 = vadd.f32 %v2323, %v2341
        %2343 = vdwg.mxu0
        %2344 = vmatpush.bf16.msra.mxu0 %v2059
        %2345 = vmatpush.bf16.msra.mxu0 %v2057
        %2346 = vmatpush.bf16.msra.mxu0 %v2055
        %2347 = vmatpush.bf16.msra.mxu0 %v2053
        %2348 = vmatpush.bf16.msra.mxu0 %v2051
        %2349 = vmatpush.bf16.msra.mxu0 %v2049
        %2350 = vmatpush.bf16.msra.mxu0 %v2047
        %2351 = vmatpush.bf16.msra.mxu0 %v2045
        %2352 = vmatmul.bf16.gmra.mxu0 %v1635
        %v2353 = vpop.f32.mrf.mxu0
        %v2354 = vadd.f32 %v2335, %v2353
        %v2355 = vpop.f32.mrf.mxu0
        %v2356 = vadd.f32 %v2337, %v2355
        %2357 = vmatmul.bf16.gmra.mxu0 %v1641
        %v2358 = vpop.f32.mrf.mxu0
        %v2359 = vadd.f32 %v2340, %v2358
        %v2360 = vpop.f32.mrf.mxu0
        %v2361 = vadd.f32 %v2342, %v2360
        %2362 = vdwg.mxu0
        %2363 = vmatpush.bf16.msra.mxu0 0
        %2364 = vmatpush.bf16.msra.mxu0 0
        %2365 = vmatpush.bf16.msra.mxu0 0
        %2366 = vmatpush.bf16.msra.mxu0 0
        %2367 = vmatpush.bf16.msra.mxu0 0
        %2368 = vmatpush.bf16.msra.mxu0 0
        %2369 = vmatpush.bf16.msra.mxu0 %v2063
        %2370 = vmatpush.bf16.msra.mxu0 %v2061
        %2371 = vmatmul.bf16.gmra.mxu0 %v2149
        %v2372 = vpop.f32.mrf.mxu0
        %v2373 = vadd.f32 %v2354, %v2372
        %v2374 = vpop.f32.mrf.mxu0
        %v2375 = vadd.f32 %v2356, %v2374
        %2376 = vmatmul.bf16.gmra.mxu0 %v2152
        %v2377 = vpop.f32.mrf.mxu0
        %v2378 = vadd.f32 %v2359, %v2377
        %v2379 = vpop.f32.mrf.mxu0
        %v2380 = vadd.f32 %v2361, %v2379
        %2381 = vdwg.mxu0
        %v2466 = vunpack.c.l.b16 %v1541
        %v2467 = vunpack.c.h.b16 %v1541
        %v2468 = vunpack.c.l.b16 %v1542
        %v2469 = vunpack.c.h.b16 %v1542
        %v2470 = vunpack.c.l.b16 %v1543
        %v2471 = vunpack.c.h.b16 %v1543
        %v2472 = vunpack.c.l.b16 %v1544
        %v2473 = vunpack.c.h.b16 %v1544
        %v2474 = vunpack.c.l.b16 %v1545
        %v2475 = vunpack.c.h.b16 %v1545
        %v2476 = vunpack.c.l.b16 %v1546
        %v2477 = vunpack.c.h.b16 %v1546
        %v2478 = vunpack.c.l.b16 %v1547
        %v2479 = vunpack.c.h.b16 %v1547
        %v2480 = vunpack.c.l.b16 %v1548
        %v2481 = vunpack.c.h.b16 %v1548
        %v2482 = vunpack.c.l.b16 %v1549
        %v2483 = vunpack.c.h.b16 %v1549
        %v2484 = vunpack.c.l.b16 %v1550
        %v2485 = vunpack.c.h.b16 %v1550
        %v2486 = vunpack.c.l.b16 %v1551
        %v2487 = vunpack.c.h.b16 %v1551
        %v2488 = vunpack.c.l.b16 %v1552
        %v2489 = vunpack.c.h.b16 %v1552
        %v2490 = vunpack.c.l.b16 %v1553
        %v2491 = vunpack.c.h.b16 %v1553
        %v2492 = vunpack.c.l.b16 %v1554
        %v2493 = vunpack.c.h.b16 %v1554
        %v2494 = vunpack.c.l.b16 %v1555
        %v2495 = vunpack.c.h.b16 %v1555
        %v2496 = vunpack.c.l.b16 %v1556
        %v2497 = vunpack.c.h.b16 %v1556
        %v2498 = vunpack.c.l.b16 %v1557
        %v2499 = vunpack.c.h.b16 %v1557
        %v2500 = vunpack.c.l.b16 %v1558
        %v2501 = vunpack.c.h.b16 %v1558
        %v2502 = vunpack.c.l.b16 %v1559
        %v2503 = vunpack.c.h.b16 %v1559
        %v2504 = vunpack.c.l.b16 %v1560
        %v2505 = vunpack.c.h.b16 %v1560
        %v2506 = vunpack.c.l.b16 %v1561
        %v2507 = vunpack.c.h.b16 %v1561
        %v2508 = vunpack.c.l.b16 %v1562
        %v2509 = vunpack.c.h.b16 %v1562
        %v2510 = vunpack.c.l.b16 %v1563
        %v2511 = vunpack.c.h.b16 %v1563
        %v2512 = vunpack.c.l.b16 %v1564
        %v2513 = vunpack.c.h.b16 %v1564
        %v2514 = vunpack.c.l.b16 %v1565
        %v2515 = vunpack.c.h.b16 %v1565
        %v2516 = vunpack.c.l.b16 %v1566
        %v2517 = vunpack.c.h.b16 %v1566
        %v2518 = vunpack.c.l.b16 %v1567
        %v2519 = vunpack.c.h.b16 %v1567
        %v2520 = vunpack.c.l.b16 %v1568
        %v2521 = vunpack.c.h.b16 %v1568
        %v2522 = vunpack.c.l.b16 %v1569
        %v2523 = vunpack.c.h.b16 %v1569
        %v2524 = vunpack.c.l.b16 %v1570
        %v2525 = vunpack.c.h.b16 %v1570
        %v2526 = vunpack.c.l.b16 %v1571
        %v2527 = vunpack.c.h.b16 %v1571
        %v2528 = vunpack.c.l.b16 %v1572
        %v2529 = vunpack.c.h.b16 %v1572
        %v2530 = vunpack.c.l.b16 %v1573
        %v2531 = vunpack.c.h.b16 %v1573
        %v2532 = vunpack.c.l.b16 %v1574
        %v2533 = vunpack.c.h.b16 %v1574
        %v2534 = vunpack.c.l.b16 %v1575
        %v2535 = vunpack.c.h.b16 %v1575
        %v2536 = vunpack.c.l.b16 %v1576
        %v2537 = vunpack.c.h.b16 %v1576
        %v2538 = vunpack.c.l.b16 %v1577
        %v2539 = vunpack.c.h.b16 %v1577
        %v2540 = vunpack.c.l.b16 %v1578
        %v2541 = vunpack.c.h.b16 %v1578
        %v2542 = vunpack.c.l.b16 %v1579
        %v2543 = vunpack.c.h.b16 %v1579
        %v2544 = vunpack.c.l.b16 %v1580
        %v2545 = vunpack.c.h.b16 %v1580
        %v2546 = vunpack.c.l.b16 %v1581
        %v2547 = vunpack.c.h.b16 %v1581
        %v2548 = vunpack.c.l.b16 %v1582
        %v2549 = vunpack.c.h.b16 %v1582
        %v2550 = vunpack.c.l.b16 %v1583
        %v2551 = vunpack.c.h.b16 %v1583
        %v2552 = vunpack.c.l.b16 %v1584
        %v2553 = vunpack.c.h.b16 %v1584
        %v2554 = vunpack.c.l.b16 %v1585
        %v2555 = vunpack.c.h.b16 %v1585
        %v2556 = vunpack.c.l.b16 %v1586
        %v2557 = vunpack.c.h.b16 %v1586
        %v2558 = vunpack.c.l.b16 %v1587
        %v2559 = vunpack.c.h.b16 %v1587
        %v2560 = vunpack.c.l.b16 %v1588
        %v2561 = vunpack.c.h.b16 %v1588
        %v2562 = vunpack.c.l.b16 %v1589
        %v2563 = vunpack.c.h.b16 %v1589
        %v2564 = vunpack.c.l.b16 %v1590
        %v2565 = vunpack.c.h.b16 %v1590
        %v2566 = vunpack.c.l.b16 %v1591
        %v2567 = vunpack.c.h.b16 %v1591
        %v2568 = vunpack.c.l.b16 %v1592
        %v2569 = vunpack.c.h.b16 %v1592
        %v2570 = vunpack.c.l.b16 %v1593
        %v2571 = vunpack.c.h.b16 %v1593
        %v2572 = vunpack.c.l.b16 %v1594
        %v2573 = vunpack.c.h.b16 %v1594
        %v2574 = vunpack.c.l.b16 %v1595
        %v2575 = vunpack.c.h.b16 %v1595
        %v2576 = vunpack.c.l.b16 %v1596
        %v2577 = vunpack.c.h.b16 %v1596
        %v2578 = vunpack.c.l.b16 %v1597
        %v2579 = vunpack.c.h.b16 %v1597
        %v2580 = vunpack.c.l.b16 %v1598
        %v2581 = vunpack.c.h.b16 %v1598
        %v2582 = vunpack.c.l.b16 %v1599
        %v2583 = vunpack.c.h.b16 %v1599
        %v2584 = vunpack.c.l.b16 %v1600
        %v2585 = vunpack.c.h.b16 %v1600
        %v2586 = vunpack.c.l.b16 %v1601
        %v2587 = vunpack.c.h.b16 %v1601
        %v2588 = vunpack.c.l.b16 %v1602
        %v2589 = vunpack.c.h.b16 %v1602
        %v2590 = vunpack.c.l.b16 %v1603
        %v2591 = vunpack.c.h.b16 %v1603
        %v2592 = vunpack.c.l.b16 %v1604
        %v2593 = vunpack.c.h.b16 %v1604
        %v2594 = vunpack.c.l.b16 %v1605
        %v2595 = vunpack.c.h.b16 %v1605
        %v2596 = vunpack.c.l.b16 %v1606
        %v2597 = vunpack.c.h.b16 %v1606
        %v2598 = vunpack.c.l.b16 %v1607
        %v2599 = vunpack.c.h.b16 %v1607
        %v2600 = vunpack.c.l.b16 %v1608
        %v2601 = vunpack.c.h.b16 %v1608
        %v2602 = vunpack.c.l.b16 %v1609
        %v2603 = vunpack.c.h.b16 %v1609
        %v2604 = vunpack.c.l.b16 %v1610
        %v2605 = vunpack.c.h.b16 %v1610
        %v2606 = vunpack.c.l.b16 %v1611
        %v2607 = vunpack.c.h.b16 %v1611
        %v2608 = vunpack.c.l.b16 %v1612
        %v2609 = vunpack.c.h.b16 %v1612
        %v2610 = vunpack.c.l.b16 %v1613
        %v2611 = vunpack.c.h.b16 %v1613
        %v2612 = vunpack.c.l.b16 %v1614
        %v2613 = vunpack.c.h.b16 %v1614
        %v2614 = vunpack.c.l.b16 %v1615
        %v2615 = vunpack.c.h.b16 %v1615
        %v2616 = vunpack.c.l.b16 %v1616
        %v2617 = vunpack.c.h.b16 %v1616
        %v2618 = vunpack.c.l.b16 %v1617
        %v2619 = vunpack.c.h.b16 %v1617
        %v2620 = vunpack.c.l.b16 %v1618
        %v2621 = vunpack.c.h.b16 %v1618
        %v2622 = vunpack.c.l.b16 %v1619
        %v2623 = vunpack.c.h.b16 %v1619
        %v2624 = vunpack.c.l.b16 %v1620
        %v2625 = vunpack.c.h.b16 %v1620
        %v2626 = vunpack.c.l.b16 %v1621
        %v2627 = vunpack.c.h.b16 %v1621
        %v2628 = vunpack.c.l.b16 %v1622
        %v2629 = vunpack.c.h.b16 %v1622
        %v2630 = vunpack.c.l.b16 %v1623
        %v2631 = vunpack.c.h.b16 %v1623
        %v2632 = vunpack.c.l.b16 %v1624
        %v2633 = vunpack.c.h.b16 %v1624
        %v2634 = vpack.c.b16 %v2468, %v2466
        %v2635 = vpack.c.b16 %v2469, %v2467
        %v2636 = vpack.c.b16 %v2472, %v2470
        %v2637 = vpack.c.b16 %v2473, %v2471
        %v2638 = vpack.c.b16 %v2476, %v2474
        %v2639 = vpack.c.b16 %v2477, %v2475
        %v2640 = vpack.c.b16 %v2480, %v2478
        %v2641 = vpack.c.b16 %v2481, %v2479
        %v2642 = vpack.c.b16 %v2484, %v2482
        %v2643 = vpack.c.b16 %v2485, %v2483
        %v2644 = vpack.c.b16 %v2488, %v2486
        %v2645 = vpack.c.b16 %v2489, %v2487
        %v2646 = vpack.c.b16 %v2492, %v2490
        %v2647 = vpack.c.b16 %v2493, %v2491
        %v2648 = vpack.c.b16 %v2496, %v2494
        %v2649 = vpack.c.b16 %v2497, %v2495
        %v2650 = vpack.c.b16 %v2500, %v2498
        %v2651 = vpack.c.b16 %v2501, %v2499
        %v2652 = vpack.c.b16 %v2504, %v2502
        %v2653 = vpack.c.b16 %v2505, %v2503
        %v2654 = vpack.c.b16 %v2508, %v2506
        %v2655 = vpack.c.b16 %v2509, %v2507
        %v2656 = vpack.c.b16 %v2512, %v2510
        %v2657 = vpack.c.b16 %v2513, %v2511
        %v2658 = vpack.c.b16 %v2516, %v2514
        %v2659 = vpack.c.b16 %v2517, %v2515
        %v2660 = vpack.c.b16 %v2520, %v2518
        %v2661 = vpack.c.b16 %v2521, %v2519
        %v2662 = vpack.c.b16 %v2524, %v2522
        %v2663 = vpack.c.b16 %v2525, %v2523
        %v2664 = vpack.c.b16 %v2528, %v2526
        %v2665 = vpack.c.b16 %v2529, %v2527
        %v2666 = vpack.c.b16 %v2532, %v2530
        %v2667 = vpack.c.b16 %v2533, %v2531
        %v2668 = vpack.c.b16 %v2536, %v2534
        %v2669 = vpack.c.b16 %v2537, %v2535
        %v2670 = vpack.c.b16 %v2540, %v2538
        %v2671 = vpack.c.b16 %v2541, %v2539
        %v2672 = vpack.c.b16 %v2544, %v2542
        %v2673 = vpack.c.b16 %v2545, %v2543
        %v2674 = vpack.c.b16 %v2548, %v2546
        %v2675 = vpack.c.b16 %v2549, %v2547
        %v2676 = vpack.c.b16 %v2552, %v2550
        %v2677 = vpack.c.b16 %v2553, %v2551
        %v2678 = vpack.c.b16 %v2556, %v2554
        %v2679 = vpack.c.b16 %v2557, %v2555
        %v2680 = vpack.c.b16 %v2560, %v2558
        %v2681 = vpack.c.b16 %v2561, %v2559
        %v2682 = vpack.c.b16 %v2564, %v2562
        %v2683 = vpack.c.b16 %v2565, %v2563
        %v2684 = vpack.c.b16 %v2568, %v2566
        %v2685 = vpack.c.b16 %v2569, %v2567
        %v2686 = vpack.c.b16 %v2572, %v2570
        %v2687 = vpack.c.b16 %v2573, %v2571
        %v2688 = vpack.c.b16 %v2576, %v2574
        %v2689 = vpack.c.b16 %v2577, %v2575
        %v2690 = vpack.c.b16 %v2580, %v2578
        %v2691 = vpack.c.b16 %v2581, %v2579
        %v2692 = vpack.c.b16 %v2584, %v2582
        %v2693 = vpack.c.b16 %v2585, %v2583
        %v2694 = vpack.c.b16 %v2588, %v2586
        %v2695 = vpack.c.b16 %v2589, %v2587
        %v2696 = vpack.c.b16 %v2592, %v2590
        %v2697 = vpack.c.b16 %v2593, %v2591
        %v2698 = vpack.c.b16 %v2596, %v2594
        %v2699 = vpack.c.b16 %v2597, %v2595
        %v2700 = vpack.c.b16 %v2600, %v2598
        %v2701 = vpack.c.b16 %v2601, %v2599
        %v2702 = vpack.c.b16 %v2604, %v2602
        %v2703 = vpack.c.b16 %v2605, %v2603
        %v2704 = vpack.c.b16 %v2608, %v2606
        %v2705 = vpack.c.b16 %v2609, %v2607
        %v2706 = vpack.c.b16 %v2612, %v2610
        %v2707 = vpack.c.b16 %v2613, %v2611
        %v2708 = vpack.c.b16 %v2616, %v2614
        %v2709 = vpack.c.b16 %v2617, %v2615
        %v2710 = vpack.c.b16 %v2620, %v2618
        %v2711 = vpack.c.b16 %v2621, %v2619
        %v2712 = vpack.c.b16 %v2624, %v2622
        %v2713 = vpack.c.b16 %v2625, %v2623
        %v2714 = vpack.c.b16 %v2628, %v2626
        %v2715 = vpack.c.b16 %v2629, %v2627
        %v2716 = vpack.c.b16 %v2632, %v2630
        %v2717 = vpack.c.b16 %v2633, %v2631
        %v2803 = vsel %vm1275, %v1534, 0
        %v2806 = vsel %vm1275, %v1540, 0
        %2808 = vmatpush.bf16.msra.mxu0 %v2648
        %2809 = vmatpush.bf16.msra.mxu0 %v2646
        %2810 = vmatpush.bf16.msra.mxu0 %v2644
        %2811 = vmatpush.bf16.msra.mxu0 %v2642
        %2812 = vmatpush.bf16.msra.mxu0 %v2640
        %2813 = vmatpush.bf16.msra.mxu0 %v2638
        %2814 = vmatpush.bf16.msra.mxu0 %v2636
        %2815 = vmatpush.bf16.msra.mxu0 %v2634
        %2816 = vmatmul.bf16.gmra.mxu0 %v1529
        %v2817 = vpop.f32.mrf.mxu0
        %v2818 = vadd.f32 %v2259, %v2817
        %v2819 = vpop.f32.mrf.mxu0
        %v2820 = vadd.f32 %v2261, %v2819
        %2821 = vmatmul.bf16.gmra.mxu0 %v1535
        %v2822 = vpop.f32.mrf.mxu0
        %v2823 = vadd.f32 %v2264, %v2822
        %v2824 = vpop.f32.mrf.mxu0
        %v2825 = vadd.f32 %v2266, %v2824
        %2826 = vdwg.mxu0
        %2827 = vmatpush.bf16.msra.mxu0 %v2664
        %2828 = vmatpush.bf16.msra.mxu0 %v2662
        %2829 = vmatpush.bf16.msra.mxu0 %v2660
        %2830 = vmatpush.bf16.msra.mxu0 %v2658
        %2831 = vmatpush.bf16.msra.mxu0 %v2656
        %2832 = vmatpush.bf16.msra.mxu0 %v2654
        %2833 = vmatpush.bf16.msra.mxu0 %v2652
        %2834 = vmatpush.bf16.msra.mxu0 %v2650
        %2835 = vmatmul.bf16.gmra.mxu0 %v1530
        %v2836 = vpop.f32.mrf.mxu0
        %v2837 = vadd.f32 %v2818, %v2836
        %v2838 = vpop.f32.mrf.mxu0
        %v2839 = vadd.f32 %v2820, %v2838
        %2840 = vmatmul.bf16.gmra.mxu0 %v1536
        %v2841 = vpop.f32.mrf.mxu0
        %v2842 = vadd.f32 %v2823, %v2841
        %v2843 = vpop.f32.mrf.mxu0
        %v2844 = vadd.f32 %v2825, %v2843
        %2845 = vdwg.mxu0
        %2846 = vmatpush.bf16.msra.mxu0 %v2680
        %2847 = vmatpush.bf16.msra.mxu0 %v2678
        %2848 = vmatpush.bf16.msra.mxu0 %v2676
        %2849 = vmatpush.bf16.msra.mxu0 %v2674
        %2850 = vmatpush.bf16.msra.mxu0 %v2672
        %2851 = vmatpush.bf16.msra.mxu0 %v2670
        %2852 = vmatpush.bf16.msra.mxu0 %v2668
        %2853 = vmatpush.bf16.msra.mxu0 %v2666
        %2854 = vmatmul.bf16.gmra.mxu0 %v1531
        %v2855 = vpop.f32.mrf.mxu0
        %v2856 = vadd.f32 %v2837, %v2855
        %v2857 = vpop.f32.mrf.mxu0
        %v2858 = vadd.f32 %v2839, %v2857
        %2859 = vmatmul.bf16.gmra.mxu0 %v1537
        %v2860 = vpop.f32.mrf.mxu0
        %v2861 = vadd.f32 %v2842, %v2860
        %v2862 = vpop.f32.mrf.mxu0
        %v2863 = vadd.f32 %v2844, %v2862
        %2864 = vdwg.mxu0
        %2865 = vmatpush.bf16.msra.mxu0 %v2696
        %2866 = vmatpush.bf16.msra.mxu0 %v2694
        %2867 = vmatpush.bf16.msra.mxu0 %v2692
        %2868 = vmatpush.bf16.msra.mxu0 %v2690
        %2869 = vmatpush.bf16.msra.mxu0 %v2688
        %2870 = vmatpush.bf16.msra.mxu0 %v2686
        %2871 = vmatpush.bf16.msra.mxu0 %v2684
        %2872 = vmatpush.bf16.msra.mxu0 %v2682
        %2873 = vmatmul.bf16.gmra.mxu0 %v1532
        %v2874 = vpop.f32.mrf.mxu0
        %v2875 = vadd.f32 %v2856, %v2874
        %v2876 = vpop.f32.mrf.mxu0
        %v2877 = vadd.f32 %v2858, %v2876
        %2878 = vmatmul.bf16.gmra.mxu0 %v1538
        %v2879 = vpop.f32.mrf.mxu0
        %v2880 = vadd.f32 %v2861, %v2879
        %v2881 = vpop.f32.mrf.mxu0
        %v2882 = vadd.f32 %v2863, %v2881
        %2883 = vdwg.mxu0
        %2884 = vmatpush.bf16.msra.mxu0 %v2712
        %2885 = vmatpush.bf16.msra.mxu0 %v2710
        %2886 = vmatpush.bf16.msra.mxu0 %v2708
        %2887 = vmatpush.bf16.msra.mxu0 %v2706
        %2888 = vmatpush.bf16.msra.mxu0 %v2704
        %2889 = vmatpush.bf16.msra.mxu0 %v2702
        %2890 = vmatpush.bf16.msra.mxu0 %v2700
        %2891 = vmatpush.bf16.msra.mxu0 %v2698
        %2892 = vmatmul.bf16.gmra.mxu0 %v1533
        %v2893 = vpop.f32.mrf.mxu0
        %v2894 = vadd.f32 %v2875, %v2893
        %v2895 = vpop.f32.mrf.mxu0
        %v2896 = vadd.f32 %v2877, %v2895
        %2897 = vmatmul.bf16.gmra.mxu0 %v1539
        %v2898 = vpop.f32.mrf.mxu0
        %v2899 = vadd.f32 %v2880, %v2898
        %v2900 = vpop.f32.mrf.mxu0
        %v2901 = vadd.f32 %v2882, %v2900
        %2902 = vdwg.mxu0
        %2903 = vmatpush.bf16.msra.mxu0 0
        %2904 = vmatpush.bf16.msra.mxu0 0
        %2905 = vmatpush.bf16.msra.mxu0 0
        %2906 = vmatpush.bf16.msra.mxu0 0
        %2907 = vmatpush.bf16.msra.mxu0 0
        %2908 = vmatpush.bf16.msra.mxu0 0
        %2909 = vmatpush.bf16.msra.mxu0 %v2716
        %2910 = vmatpush.bf16.msra.mxu0 %v2714
        %2911 = vmatmul.bf16.gmra.mxu0 %v2803
        %v2912 = vpop.f32.mrf.mxu0
        %v2913 = vadd.f32 %v2894, %v2912
        %v2914 = vpop.f32.mrf.mxu0
        %v2915 = vadd.f32 %v2896, %v2914
        %2916 = vmatmul.bf16.gmra.mxu0 %v2806
        %v2917 = vpop.f32.mrf.mxu0
        %v2918 = vadd.f32 %v2899, %v2917
        %v2919 = vpop.f32.mrf.mxu0
        %v2920 = vadd.f32 %v2901, %v2919
        %2921 = vdwg.mxu0
        %2922 = vmatpush.bf16.msra.mxu0 %v2649
        %2923 = vmatpush.bf16.msra.mxu0 %v2647
        %2924 = vmatpush.bf16.msra.mxu0 %v2645
        %2925 = vmatpush.bf16.msra.mxu0 %v2643
        %2926 = vmatpush.bf16.msra.mxu0 %v2641
        %2927 = vmatpush.bf16.msra.mxu0 %v2639
        %2928 = vmatpush.bf16.msra.mxu0 %v2637
        %2929 = vmatpush.bf16.msra.mxu0 %v2635
        %2930 = vmatmul.bf16.gmra.mxu0 %v1529
        %v2931 = vpop.f32.mrf.mxu0
        %v2932 = vadd.f32 %v2373, %v2931
        %v2933 = vpop.f32.mrf.mxu0
        %v2934 = vadd.f32 %v2375, %v2933
        %2935 = vmatmul.bf16.gmra.mxu0 %v1535
        %v2936 = vpop.f32.mrf.mxu0
        %v2937 = vadd.f32 %v2378, %v2936
        %v2938 = vpop.f32.mrf.mxu0
        %v2939 = vadd.f32 %v2380, %v2938
        %2940 = vdwg.mxu0
        %2941 = vmatpush.bf16.msra.mxu0 %v2665
        %2942 = vmatpush.bf16.msra.mxu0 %v2663
        %2943 = vmatpush.bf16.msra.mxu0 %v2661
        %2944 = vmatpush.bf16.msra.mxu0 %v2659
        %2945 = vmatpush.bf16.msra.mxu0 %v2657
        %2946 = vmatpush.bf16.msra.mxu0 %v2655
        %2947 = vmatpush.bf16.msra.mxu0 %v2653
        %2948 = vmatpush.bf16.msra.mxu0 %v2651
        %2949 = vmatmul.bf16.gmra.mxu0 %v1530
        %v2950 = vpop.f32.mrf.mxu0
        %v2951 = vadd.f32 %v2932, %v2950
        %v2952 = vpop.f32.mrf.mxu0
        %v2953 = vadd.f32 %v2934, %v2952
        %2954 = vmatmul.bf16.gmra.mxu0 %v1536
        %v2955 = vpop.f32.mrf.mxu0
        %v2956 = vadd.f32 %v2937, %v2955
        %v2957 = vpop.f32.mrf.mxu0
        %v2958 = vadd.f32 %v2939, %v2957
        %2959 = vdwg.mxu0
        %2960 = vmatpush.bf16.msra.mxu0 %v2681
        %2961 = vmatpush.bf16.msra.mxu0 %v2679
        %2962 = vmatpush.bf16.msra.mxu0 %v2677
        %2963 = vmatpush.bf16.msra.mxu0 %v2675
        %2964 = vmatpush.bf16.msra.mxu0 %v2673
        %2965 = vmatpush.bf16.msra.mxu0 %v2671
        %2966 = vmatpush.bf16.msra.mxu0 %v2669
        %2967 = vmatpush.bf16.msra.mxu0 %v2667
        %2968 = vmatmul.bf16.gmra.mxu0 %v1531
        %v2969 = vpop.f32.mrf.mxu0
        %v2970 = vadd.f32 %v2951, %v2969
        %v2971 = vpop.f32.mrf.mxu0
        %v2972 = vadd.f32 %v2953, %v2971
        %2973 = vmatmul.bf16.gmra.mxu0 %v1537
        %v2974 = vpop.f32.mrf.mxu0
        %v2975 = vadd.f32 %v2956, %v2974
        %v2976 = vpop.f32.mrf.mxu0
        %v2977 = vadd.f32 %v2958, %v2976
        %2978 = vdwg.mxu0
        %2979 = vmatpush.bf16.msra.mxu0 %v2697
        %2980 = vmatpush.bf16.msra.mxu0 %v2695
        %2981 = vmatpush.bf16.msra.mxu0 %v2693
        %2982 = vmatpush.bf16.msra.mxu0 %v2691
        %2983 = vmatpush.bf16.msra.mxu0 %v2689
        %2984 = vmatpush.bf16.msra.mxu0 %v2687
        %2985 = vmatpush.bf16.msra.mxu0 %v2685
        %2986 = vmatpush.bf16.msra.mxu0 %v2683
        %2987 = vmatmul.bf16.gmra.mxu0 %v1532
        %v2988 = vpop.f32.mrf.mxu0
        %v2989 = vadd.f32 %v2970, %v2988
        %v2990 = vpop.f32.mrf.mxu0
        %v2991 = vadd.f32 %v2972, %v2990
        %2992 = vmatmul.bf16.gmra.mxu0 %v1538
        %v2993 = vpop.f32.mrf.mxu0
        %v2994 = vadd.f32 %v2975, %v2993
        %v2995 = vpop.f32.mrf.mxu0
        %v2996 = vadd.f32 %v2977, %v2995
        %2997 = vdwg.mxu0
        %2998 = vmatpush.bf16.msra.mxu0 %v2713
        %2999 = vmatpush.bf16.msra.mxu0 %v2711
        %3000 = vmatpush.bf16.msra.mxu0 %v2709
        %3001 = vmatpush.bf16.msra.mxu0 %v2707
        %3002 = vmatpush.bf16.msra.mxu0 %v2705
        %3003 = vmatpush.bf16.msra.mxu0 %v2703
        %3004 = vmatpush.bf16.msra.mxu0 %v2701
        %3005 = vmatpush.bf16.msra.mxu0 %v2699
        %3006 = vmatmul.bf16.gmra.mxu0 %v1533
        %v3007 = vpop.f32.mrf.mxu0
        %v3008 = vadd.f32 %v2989, %v3007
        %v3009 = vpop.f32.mrf.mxu0
        %v3010 = vadd.f32 %v2991, %v3009
        %3011 = vmatmul.bf16.gmra.mxu0 %v1539
        %v3012 = vpop.f32.mrf.mxu0
        %v3013 = vadd.f32 %v2994, %v3012
        %v3014 = vpop.f32.mrf.mxu0
        %v3015 = vadd.f32 %v2996, %v3014
        %3016 = vdwg.mxu0
        %3017 = vmatpush.bf16.msra.mxu0 0
        %3018 = vmatpush.bf16.msra.mxu0 0
        %3019 = vmatpush.bf16.msra.mxu0 0
        %3020 = vmatpush.bf16.msra.mxu0 0
        %3021 = vmatpush.bf16.msra.mxu0 0
        %3022 = vmatpush.bf16.msra.mxu0 0
        %3023 = vmatpush.bf16.msra.mxu0 %v2717
        %3024 = vmatpush.bf16.msra.mxu0 %v2715
        %3025 = vmatmul.bf16.gmra.mxu0 %v2803
        %v3026 = vpop.f32.mrf.mxu0
        %v3027 = vadd.f32 %v3008, %v3026
        %v3028 = vpop.f32.mrf.mxu0
        %v3029 = vadd.f32 %v3010, %v3028
        %3030 = vmatmul.bf16.gmra.mxu0 %v2806
        %v3031 = vpop.f32.mrf.mxu0
        %v3032 = vadd.f32 %v3013, %v3031
        %v3033 = vpop.f32.mrf.mxu0
        %v3034 = vadd.f32 %v3015, %v3033
        %3035 = vdwg.mxu0
        %v3036 = vld [vmem:[#allocation3 + $0x30] sm:$0xfe]
        %v3037 = vld [vmem:[#allocation3 + $0x38] sm:$0xfe]
        %v3038 = vld [vmem:[#allocation3 + $0x40] sm:$0xfe]
        %v3039 = vld [vmem:[#allocation3 + $0x48] sm:$0xfe]
        %v3040 = vld [vmem:[#allocation3 + $0x50] sm:$0xfe]
        %v3041 = vld [vmem:[#allocation3 + $0x58] sm:$0xfe]
        %v3042 = vld [vmem:[#allocation3 + $0x60] sm:$0xff]
        %v3043 = vld [vmem:[#allocation3 + $0x68] sm:$0xff]
        %v3044 = vld [vmem:[#allocation3 + $0x70] sm:$0xff]
        %v3045 = vld [vmem:[#allocation3 + $0x78] sm:$0xff]
        %v3046 = vld [vmem:[#allocation3 + $0x80] sm:$0xff]
        %v3047 = vld [vmem:[#allocation3 + $0x88] sm:$0xff]
        %v3048 = vld [vmem:[#allocation3 + $0x90] sm:$0xff]
        %v3049 = vld [vmem:[#allocation3 + $0x98] sm:$0xff]
        %v3050 = vld [vmem:[#allocation3 + $0xa0] sm:$0xff]
        %v3051 = vld [vmem:[#allocation3 + $0xa8] sm:$0xff]
        %v3052 = vld [vmem:[#allocation3 + $0xb0] sm:$0xff]
        %v3053 = vld [vmem:[#allocation3 + $0xb8] sm:$0xff]
        %v3054 = vld [vmem:[#allocation3 + $0xc0] sm:$0xff]
        %v3055 = vld [vmem:[#allocation3 + $0xc8] sm:$0xff]
        %v3056 = vld [vmem:[#allocation3 + $0xd0] sm:$0xff]
        %v3057 = vld [vmem:[#allocation3 + $0xd8] sm:$0xff]
        %v3058 = vld [vmem:[#allocation3 + $0xe0] sm:$0xff]
        %v3059 = vld [vmem:[#allocation3 + $0xe8] sm:$0xff]
        %v3060 = vld [vmem:[#allocation3 + $0xf0] sm:$0x1]
        %v3061 = vld [vmem:[#allocation3 + $0xf8] sm:$0x1]
        %v3062 = vld [vmem:[#allocation3 + $0x100] sm:$0x1]
        %v3063 = vld [vmem:[#allocation3 + $0x108] sm:$0x1]
        %v3064 = vld [vmem:[#allocation3 + $0x110] sm:$0x1]
        %v3065 = vld [vmem:[#allocation3 + $0x118] sm:$0x1]
        %vm3066 = vcmp.ge.s32.totalorder %v1345, 4294967295
        %vm3067 = vcmp.ge.s32.totalorder %v1346, 4294967295
        %vm3068 = vcmp.ge.s32.totalorder %v1347, 4294967295
        %vm3069 = vcmp.ge.s32.totalorder %v1348, 4294967295
        %vm3070 = vcmp.lt.s32.totalorder %v1345, 15
        %vm3071 = vcmp.lt.s32.totalorder %v1346, 15
        %vm3072 = vcmp.lt.s32.totalorder %v1347, 15
        %vm3073 = vcmp.lt.s32.totalorder %v1348, 15
        %vm3074 = vmand %vm3066, %vm3070
        %vm3075 = vmand %vm3067, %vm3071
        %vm3076 = vmand %vm3068, %vm3072
        %vm3077 = vmand %vm3069, %vm3073
        %vm3108 = vcmask 1046528
        %v3109 = vrot.slane %v3036, 1
        %v3110 = vrot.slane %v3042, 1
        %v3111 = vsel %vm3108, %v3109, %v3110
        %v3112 = vrot.slane %v3037, 1
        %v3113 = vrot.slane %v3043, 1
        %v3114 = vsel %vm3108, %v3112, %v3113
        %v3115 = vrot.slane %v3038, 1
        %v3116 = vrot.slane %v3044, 1
        %v3117 = vsel %vm3108, %v3115, %v3116
        %v3118 = vrot.slane %v3039, 1
        %v3119 = vrot.slane %v3045, 1
        %v3120 = vsel %vm3108, %v3118, %v3119
        %v3121 = vrot.slane %v3040, 1
        %v3122 = vrot.slane %v3046, 1
        %v3123 = vsel %vm3108, %v3121, %v3122
        %v3124 = vrot.slane %v3041, 1
        %v3125 = vrot.slane %v3047, 1
        %v3126 = vsel %vm3108, %v3124, %v3125
        %v3127 = vrot.slane %v3048, 1
        %v3128 = vsel %vm3108, %v3110, %v3127
        %v3129 = vrot.slane %v3049, 1
        %v3130 = vsel %vm3108, %v3113, %v3129
        %v3131 = vrot.slane %v3050, 1
        %v3132 = vsel %vm3108, %v3116, %v3131
        %v3133 = vrot.slane %v3051, 1
        %v3134 = vsel %vm3108, %v3119, %v3133
        %v3135 = vrot.slane %v3052, 1
        %v3136 = vsel %vm3108, %v3122, %v3135
        %v3137 = vrot.slane %v3053, 1
        %v3138 = vsel %vm3108, %v3125, %v3137
        %v3139 = vrot.slane %v3054, 1
        %v3140 = vsel %vm3108, %v3127, %v3139
        %v3141 = vrot.slane %v3055, 1
        %v3142 = vsel %vm3108, %v3129, %v3141
        %v3143 = vrot.slane %v3056, 1
        %v3144 = vsel %vm3108, %v3131, %v3143
        %v3145 = vrot.slane %v3057, 1
        %v3146 = vsel %vm3108, %v3133, %v3145
        %v3147 = vrot.slane %v3058, 1
        %v3148 = vsel %vm3108, %v3135, %v3147
        %v3149 = vrot.slane %v3059, 1
        %v3150 = vsel %vm3108, %v3137, %v3149
        %v3151 = vrot.slane %v3060, 1
        %v3152 = vsel %vm3108, %v3139, %v3151
        %v3153 = vrot.slane %v3061, 1
        %v3154 = vsel %vm3108, %v3141, %v3153
        %v3155 = vrot.slane %v3062, 1
        %v3156 = vsel %vm3108, %v3143, %v3155
        %v3157 = vrot.slane %v3063, 1
        %v3158 = vsel %vm3108, %v3145, %v3157
        %v3159 = vrot.slane %v3064, 1
        %v3160 = vsel %vm3108, %v3147, %v3159
        %v3161 = vrot.slane %v3065, 1
        %v3162 = vsel %vm3108, %v3149, %v3161
        %v3187 = vsel %vm3074, %v3111, 0.0
        %v3188 = vsel %vm3074, %v3114, 0.0
        %v3189 = vsel %vm3074, %v3117, 0.0
        %v3190 = vsel %vm3074, %v3120, 0.0
        %v3191 = vsel %vm3074, %v3123, 0.0
        %v3192 = vsel %vm3074, %v3126, 0.0
        %v3193 = vsel %vm3075, %v3128, 0.0
        %v3194 = vsel %vm3075, %v3130, 0.0
        %v3195 = vsel %vm3075, %v3132, 0.0
        %v3196 = vsel %vm3075, %v3134, 0.0
        %v3197 = vsel %vm3075, %v3136, 0.0
        %v3198 = vsel %vm3075, %v3138, 0.0
        %v3199 = vsel %vm3076, %v3140, 0.0
        %v3200 = vsel %vm3076, %v3142, 0.0
        %v3201 = vsel %vm3076, %v3144, 0.0
        %v3202 = vsel %vm3076, %v3146, 0.0
        %v3203 = vsel %vm3076, %v3148, 0.0
        %v3204 = vsel %vm3076, %v3150, 0.0
        %v3205 = vsel %vm3077, %v3152, 0.0
        %v3206 = vsel %vm3077, %v3154, 0.0
        %v3207 = vsel %vm3077, %v3156, 0.0
        %v3208 = vsel %vm3077, %v3158, 0.0
        %v3209 = vsel %vm3077, %v3160, 0.0
        %v3210 = vsel %vm3077, %v3162, 0.0
        %v3211 = vpack.c.bf16 %v3193, %v3187
        %v3212 = vpack.c.bf16 %v3194, %v3188
        %v3213 = vpack.c.bf16 %v3195, %v3189
        %v3214 = vpack.c.bf16 %v3196, %v3190
        %v3215 = vpack.c.bf16 %v3197, %v3191
        %v3216 = vpack.c.bf16 %v3198, %v3192
        %v3217 = vpack.c.bf16 %v3205, %v3199
        %v3218 = vpack.c.bf16 %v3206, %v3200
        %v3219 = vpack.c.bf16 %v3207, %v3201
        %v3220 = vpack.c.bf16 %v3208, %v3202
        %v3221 = vpack.c.bf16 %v3209, %v3203
        %v3222 = vpack.c.bf16 %v3210, %v3204
        %s3223 = scalar_lea.vmem [#allocation2], 1344
        %v3224 = vld [vmem:[%s3223] sm:$0xff]
        %v3225 = vld [vmem:[%s3223 + $0x8] sm:$0xff]
        %v3226 = vld [vmem:[%s3223 + $0x10] sm:$0xff]
        %v3227 = vld [vmem:[%s3223 + $0x18] sm:$0xff]
        %v3228 = vld [vmem:[%s3223 + $0x20] sm:$0xff]
        %v3229 = vld [vmem:[%s3223 + $0x28] sm:$0xff]
        %v3230 = vld [vmem:[%s3223 + $0x30] sm:$0xff]
        %v3231 = vld [vmem:[%s3223 + $0x38] sm:$0xff]
        %v3232 = vld [vmem:[%s3223 + $0x40] sm:$0xff]
        %v3233 = vld [vmem:[%s3223 + $0x48] sm:$0xff]
        %v3234 = vld [vmem:[%s3223 + $0x50] sm:$0xff]
        %v3235 = vld [vmem:[%s3223 + $0x58] sm:$0xff]
        %v3236 = vld [vmem:[%s3223 + $0x60] sm:$0xff]
        %v3237 = vld [vmem:[%s3223 + $0x68] sm:$0xff]
        %v3238 = vld [vmem:[%s3223 + $0x70] sm:$0xff]
        %v3239 = vld [vmem:[%s3223 + $0x78] sm:$0xff]
        %v3240 = vld [vmem:[%s3223 + $0x80] sm:$0xff]
        %v3241 = vld [vmem:[%s3223 + $0x88] sm:$0xff]
        %v3242 = vld [vmem:[%s3223 + $0x90] sm:$0xff]
        %v3243 = vld [vmem:[%s3223 + $0x98] sm:$0xff]
        %v3244 = vld [vmem:[%s3223 + $0xa0] sm:$0xff]
        %v3245 = vld [vmem:[%s3223 + $0xa8] sm:$0xff]
        %v3246 = vld [vmem:[%s3223 + $0xb0] sm:$0xff]
        %v3247 = vld [vmem:[%s3223 + $0xb8] sm:$0xff]
        %v3248 = vld [vmem:[%s3223 + $0xc0] sm:$0xff]
        %v3249 = vld [vmem:[%s3223 + $0xc8] sm:$0xff]
        %v3250 = vld [vmem:[%s3223 + $0xd0] sm:$0xff]
        %v3251 = vld [vmem:[%s3223 + $0xd8] sm:$0xff]
        %v3252 = vld [vmem:[%s3223 + $0xe0] sm:$0xff]
        %v3253 = vld [vmem:[%s3223 + $0xe8] sm:$0xff]
        %v3254 = vld [vmem:[%s3223 + $0xf0] sm:$0xff]
        %v3255 = vld [vmem:[%s3223 + $0xf8] sm:$0xff]
        %v3256 = vld [vmem:[%s3223 + $0x100] sm:$0xff]
        %v3257 = vld [vmem:[%s3223 + $0x108] sm:$0xff]
        %v3258 = vld [vmem:[%s3223 + $0x110] sm:$0xff]
        %v3259 = vld [vmem:[%s3223 + $0x118] sm:$0xff]
        %v3260 = vld [vmem:[%s3223 + $0x120] sm:$0xff]
        %v3261 = vld [vmem:[%s3223 + $0x128] sm:$0xff]
        %v3262 = vld [vmem:[%s3223 + $0x130] sm:$0xff]
        %v3263 = vld [vmem:[%s3223 + $0x138] sm:$0xff]
        %v3264 = vld [vmem:[%s3223 + $0x140] sm:$0xff]
        %v3265 = vld [vmem:[%s3223 + $0x148] sm:$0xff]
        %v3266 = vld [vmem:[%s3223 + $0x150] sm:$0xff]
        %v3267 = vld [vmem:[%s3223 + $0x158] sm:$0xff]
        %v3268 = vld [vmem:[%s3223 + $0x160] sm:$0xff]
        %v3269 = vld [vmem:[%s3223 + $0x168] sm:$0xff]
        %v3270 = vld [vmem:[%s3223 + $0x170] sm:$0xff]
        %v3271 = vld [vmem:[%s3223 + $0x178] sm:$0xff]
        %v3272 = vld [vmem:[%s3223 + $0x180] sm:$0xff]
        %v3273 = vld [vmem:[%s3223 + $0x188] sm:$0xff]
        %v3274 = vld [vmem:[%s3223 + $0x190] sm:$0xff]
        %v3275 = vld [vmem:[%s3223 + $0x198] sm:$0xff]
        %v3276 = vld [vmem:[%s3223 + $0x1a0] sm:$0xff]
        %v3277 = vld [vmem:[%s3223 + $0x1a8] sm:$0xff]
        %v3278 = vld [vmem:[%s3223 + $0x1b0] sm:$0xff]
        %v3279 = vld [vmem:[%s3223 + $0x1b8] sm:$0xff]
        %v3280 = vld [vmem:[%s3223 + $0x1c0] sm:$0xff]
        %v3281 = vld [vmem:[%s3223 + $0x1c8] sm:$0xff]
        %v3282 = vld [vmem:[%s3223 + $0x1d0] sm:$0xff]
        %v3283 = vld [vmem:[%s3223 + $0x1d8] sm:$0xff]
        %v3284 = vld [vmem:[%s3223 + $0x1e0] sm:$0xff]
        %v3285 = vld [vmem:[%s3223 + $0x1e8] sm:$0xff]
        %v3286 = vld [vmem:[%s3223 + $0x1f0] sm:$0xff]
        %v3287 = vld [vmem:[%s3223 + $0x1f8] sm:$0xff]
        %v3288 = vld [vmem:[%s3223 + $0x200] sm:$0xff]
        %v3289 = vld [vmem:[%s3223 + $0x208] sm:$0xff]
        %v3290 = vld [vmem:[%s3223 + $0x210] sm:$0xff]
        %v3291 = vld [vmem:[%s3223 + $0x218] sm:$0xff]
        %v3292 = vld [vmem:[%s3223 + $0x220] sm:$0xff]
        %v3293 = vld [vmem:[%s3223 + $0x228] sm:$0xff]
        %v3294 = vld [vmem:[%s3223 + $0x230] sm:$0xff]
        %v3295 = vld [vmem:[%s3223 + $0x238] sm:$0xff]
        %v3296 = vld [vmem:[%s3223 + $0x240] sm:$0xff]
        %v3297 = vld [vmem:[%s3223 + $0x248] sm:$0xff]
        %v3298 = vld [vmem:[%s3223 + $0x250] sm:$0xff]
        %v3299 = vld [vmem:[%s3223 + $0x258] sm:$0xff]
        %v3300 = vld [vmem:[%s3223 + $0x260] sm:$0xff]
        %v3301 = vld [vmem:[%s3223 + $0x268] sm:$0xff]
        %v3302 = vld [vmem:[%s3223 + $0x270] sm:$0xff]
        %v3303 = vld [vmem:[%s3223 + $0x278] sm:$0xff]
        %v3304 = vld [vmem:[%s3223 + $0x280] sm:$0xff]
        %v3305 = vld [vmem:[%s3223 + $0x288] sm:$0xff]
        %v3306 = vld [vmem:[%s3223 + $0x290] sm:$0xff]
        %v3307 = vld [vmem:[%s3223 + $0x298] sm:$0xff]
        %v3392 = vunpack.c.l.b16 %v3224
        %v3393 = vunpack.c.h.b16 %v3224
        %v3394 = vunpack.c.l.b16 %v3225
        %v3395 = vunpack.c.h.b16 %v3225
        %v3396 = vunpack.c.l.b16 %v3226
        %v3397 = vunpack.c.h.b16 %v3226
        %v3398 = vunpack.c.l.b16 %v3227
        %v3399 = vunpack.c.h.b16 %v3227
        %v3400 = vunpack.c.l.b16 %v3228
        %v3401 = vunpack.c.h.b16 %v3228
        %v3402 = vunpack.c.l.b16 %v3229
        %v3403 = vunpack.c.h.b16 %v3229
        %v3404 = vunpack.c.l.b16 %v3230
        %v3405 = vunpack.c.h.b16 %v3230
        %v3406 = vunpack.c.l.b16 %v3231
        %v3407 = vunpack.c.h.b16 %v3231
        %v3408 = vunpack.c.l.b16 %v3232
        %v3409 = vunpack.c.h.b16 %v3232
        %v3410 = vunpack.c.l.b16 %v3233
        %v3411 = vunpack.c.h.b16 %v3233
        %v3412 = vunpack.c.l.b16 %v3234
        %v3413 = vunpack.c.h.b16 %v3234
        %v3414 = vunpack.c.l.b16 %v3235
        %v3415 = vunpack.c.h.b16 %v3235
        %v3416 = vunpack.c.l.b16 %v3236
        %v3417 = vunpack.c.h.b16 %v3236
        %v3418 = vunpack.c.l.b16 %v3237
        %v3419 = vunpack.c.h.b16 %v3237
        %v3420 = vunpack.c.l.b16 %v3238
        %v3421 = vunpack.c.h.b16 %v3238
        %v3422 = vunpack.c.l.b16 %v3239
        %v3423 = vunpack.c.h.b16 %v3239
        %v3424 = vunpack.c.l.b16 %v3240
        %v3425 = vunpack.c.h.b16 %v3240
        %v3426 = vunpack.c.l.b16 %v3241
        %v3427 = vunpack.c.h.b16 %v3241
        %v3428 = vunpack.c.l.b16 %v3242
        %v3429 = vunpack.c.h.b16 %v3242
        %v3430 = vunpack.c.l.b16 %v3243
        %v3431 = vunpack.c.h.b16 %v3243
        %v3432 = vunpack.c.l.b16 %v3244
        %v3433 = vunpack.c.h.b16 %v3244
        %v3434 = vunpack.c.l.b16 %v3245
        %v3435 = vunpack.c.h.b16 %v3245
        %v3436 = vunpack.c.l.b16 %v3246
        %v3437 = vunpack.c.h.b16 %v3246
        %v3438 = vunpack.c.l.b16 %v3247
        %v3439 = vunpack.c.h.b16 %v3247
        %v3440 = vunpack.c.l.b16 %v3248
        %v3441 = vunpack.c.h.b16 %v3248
        %v3442 = vunpack.c.l.b16 %v3249
        %v3443 = vunpack.c.h.b16 %v3249
        %v3444 = vunpack.c.l.b16 %v3250
        %v3445 = vunpack.c.h.b16 %v3250
        %v3446 = vunpack.c.l.b16 %v3251
        %v3447 = vunpack.c.h.b16 %v3251
        %v3448 = vunpack.c.l.b16 %v3252
        %v3449 = vunpack.c.h.b16 %v3252
        %v3450 = vunpack.c.l.b16 %v3253
        %v3451 = vunpack.c.h.b16 %v3253
        %v3452 = vunpack.c.l.b16 %v3254
        %v3453 = vunpack.c.h.b16 %v3254
        %v3454 = vunpack.c.l.b16 %v3255
        %v3455 = vunpack.c.h.b16 %v3255
        %v3456 = vunpack.c.l.b16 %v3256
        %v3457 = vunpack.c.h.b16 %v3256
        %v3458 = vunpack.c.l.b16 %v3257
        %v3459 = vunpack.c.h.b16 %v3257
        %v3460 = vunpack.c.l.b16 %v3258
        %v3461 = vunpack.c.h.b16 %v3258
        %v3462 = vunpack.c.l.b16 %v3259
        %v3463 = vunpack.c.h.b16 %v3259
        %v3464 = vunpack.c.l.b16 %v3260
        %v3465 = vunpack.c.h.b16 %v3260
        %v3466 = vunpack.c.l.b16 %v3261
        %v3467 = vunpack.c.h.b16 %v3261
        %v3468 = vunpack.c.l.b16 %v3262
        %v3469 = vunpack.c.h.b16 %v3262
        %v3470 = vunpack.c.l.b16 %v3263
        %v3471 = vunpack.c.h.b16 %v3263
        %v3472 = vunpack.c.l.b16 %v3264
        %v3473 = vunpack.c.h.b16 %v3264
        %v3474 = vunpack.c.l.b16 %v3265
        %v3475 = vunpack.c.h.b16 %v3265
        %v3476 = vunpack.c.l.b16 %v3266
        %v3477 = vunpack.c.h.b16 %v3266
        %v3478 = vunpack.c.l.b16 %v3267
        %v3479 = vunpack.c.h.b16 %v3267
        %v3480 = vunpack.c.l.b16 %v3268
        %v3481 = vunpack.c.h.b16 %v3268
        %v3482 = vunpack.c.l.b16 %v3269
        %v3483 = vunpack.c.h.b16 %v3269
        %v3484 = vunpack.c.l.b16 %v3270
        %v3485 = vunpack.c.h.b16 %v3270
        %v3486 = vunpack.c.l.b16 %v3271
        %v3487 = vunpack.c.h.b16 %v3271
        %v3488 = vunpack.c.l.b16 %v3272
        %v3489 = vunpack.c.h.b16 %v3272
        %v3490 = vunpack.c.l.b16 %v3273
        %v3491 = vunpack.c.h.b16 %v3273
        %v3492 = vunpack.c.l.b16 %v3274
        %v3493 = vunpack.c.h.b16 %v3274
        %v3494 = vunpack.c.l.b16 %v3275
        %v3495 = vunpack.c.h.b16 %v3275
        %v3496 = vunpack.c.l.b16 %v3276
        %v3497 = vunpack.c.h.b16 %v3276
        %v3498 = vunpack.c.l.b16 %v3277
        %v3499 = vunpack.c.h.b16 %v3277
        %v3500 = vunpack.c.l.b16 %v3278
        %v3501 = vunpack.c.h.b16 %v3278
        %v3502 = vunpack.c.l.b16 %v3279
        %v3503 = vunpack.c.h.b16 %v3279
        %v3504 = vunpack.c.l.b16 %v3280
        %v3505 = vunpack.c.h.b16 %v3280
        %v3506 = vunpack.c.l.b16 %v3281
        %v3507 = vunpack.c.h.b16 %v3281
        %v3508 = vunpack.c.l.b16 %v3282
        %v3509 = vunpack.c.h.b16 %v3282
        %v3510 = vunpack.c.l.b16 %v3283
        %v3511 = vunpack.c.h.b16 %v3283
        %v3512 = vunpack.c.l.b16 %v3284
        %v3513 = vunpack.c.h.b16 %v3284
        %v3514 = vunpack.c.l.b16 %v3285
        %v3515 = vunpack.c.h.b16 %v3285
        %v3516 = vunpack.c.l.b16 %v3286
        %v3517 = vunpack.c.h.b16 %v3286
        %v3518 = vunpack.c.l.b16 %v3287
        %v3519 = vunpack.c.h.b16 %v3287
        %v3520 = vunpack.c.l.b16 %v3288
        %v3521 = vunpack.c.h.b16 %v3288
        %v3522 = vunpack.c.l.b16 %v3289
        %v3523 = vunpack.c.h.b16 %v3289
        %v3524 = vunpack.c.l.b16 %v3290
        %v3525 = vunpack.c.h.b16 %v3290
        %v3526 = vunpack.c.l.b16 %v3291
        %v3527 = vunpack.c.h.b16 %v3291
        %v3528 = vunpack.c.l.b16 %v3292
        %v3529 = vunpack.c.h.b16 %v3292
        %v3530 = vunpack.c.l.b16 %v3293
        %v3531 = vunpack.c.h.b16 %v3293
        %v3532 = vunpack.c.l.b16 %v3294
        %v3533 = vunpack.c.h.b16 %v3294
        %v3534 = vunpack.c.l.b16 %v3295
        %v3535 = vunpack.c.h.b16 %v3295
        %v3536 = vunpack.c.l.b16 %v3296
        %v3537 = vunpack.c.h.b16 %v3296
        %v3538 = vunpack.c.l.b16 %v3297
        %v3539 = vunpack.c.h.b16 %v3297
        %v3540 = vunpack.c.l.b16 %v3298
        %v3541 = vunpack.c.h.b16 %v3298
        %v3542 = vunpack.c.l.b16 %v3299
        %v3543 = vunpack.c.h.b16 %v3299
        %v3544 = vunpack.c.l.b16 %v3300
        %v3545 = vunpack.c.h.b16 %v3300
        %v3546 = vunpack.c.l.b16 %v3301
        %v3547 = vunpack.c.h.b16 %v3301
        %v3548 = vunpack.c.l.b16 %v3302
        %v3549 = vunpack.c.h.b16 %v3302
        %v3550 = vunpack.c.l.b16 %v3303
        %v3551 = vunpack.c.h.b16 %v3303
        %v3552 = vunpack.c.l.b16 %v3304
        %v3553 = vunpack.c.h.b16 %v3304
        %v3554 = vunpack.c.l.b16 %v3305
        %v3555 = vunpack.c.h.b16 %v3305
        %v3556 = vunpack.c.l.b16 %v3306
        %v3557 = vunpack.c.h.b16 %v3306
        %v3558 = vunpack.c.l.b16 %v3307
        %v3559 = vunpack.c.h.b16 %v3307
        %v3560 = vpack.c.b16 %v3394, %v3392
        %v3561 = vpack.c.b16 %v3395, %v3393
        %v3562 = vpack.c.b16 %v3398, %v3396
        %v3563 = vpack.c.b16 %v3399, %v3397
        %v3564 = vpack.c.b16 %v3402, %v3400
        %v3565 = vpack.c.b16 %v3403, %v3401
        %v3566 = vpack.c.b16 %v3406, %v3404
        %v3567 = vpack.c.b16 %v3407, %v3405
        %v3568 = vpack.c.b16 %v3410, %v3408
        %v3569 = vpack.c.b16 %v3411, %v3409
        %v3570 = vpack.c.b16 %v3414, %v3412
        %v3571 = vpack.c.b16 %v3415, %v3413
        %v3572 = vpack.c.b16 %v3418, %v3416
        %v3573 = vpack.c.b16 %v3419, %v3417
        %v3574 = vpack.c.b16 %v3422, %v3420
        %v3575 = vpack.c.b16 %v3423, %v3421
        %v3576 = vpack.c.b16 %v3426, %v3424
        %v3577 = vpack.c.b16 %v3427, %v3425
        %v3578 = vpack.c.b16 %v3430, %v3428
        %v3579 = vpack.c.b16 %v3431, %v3429
        %v3580 = vpack.c.b16 %v3434, %v3432
        %v3581 = vpack.c.b16 %v3435, %v3433
        %v3582 = vpack.c.b16 %v3438, %v3436
        %v3583 = vpack.c.b16 %v3439, %v3437
        %v3584 = vpack.c.b16 %v3442, %v3440
        %v3585 = vpack.c.b16 %v3443, %v3441
        %v3586 = vpack.c.b16 %v3446, %v3444
        %v3587 = vpack.c.b16 %v3447, %v3445
        %v3588 = vpack.c.b16 %v3450, %v3448
        %v3589 = vpack.c.b16 %v3451, %v3449
        %v3590 = vpack.c.b16 %v3454, %v3452
        %v3591 = vpack.c.b16 %v3455, %v3453
        %v3592 = vpack.c.b16 %v3458, %v3456
        %v3593 = vpack.c.b16 %v3459, %v3457
        %v3594 = vpack.c.b16 %v3462, %v3460
        %v3595 = vpack.c.b16 %v3463, %v3461
        %v3596 = vpack.c.b16 %v3466, %v3464
        %v3597 = vpack.c.b16 %v3467, %v3465
        %v3598 = vpack.c.b16 %v3470, %v3468
        %v3599 = vpack.c.b16 %v3471, %v3469
        %v3600 = vpack.c.b16 %v3474, %v3472
        %v3601 = vpack.c.b16 %v3475, %v3473
        %v3602 = vpack.c.b16 %v3478, %v3476
        %v3603 = vpack.c.b16 %v3479, %v3477
        %v3604 = vpack.c.b16 %v3482, %v3480
        %v3605 = vpack.c.b16 %v3483, %v3481
        %v3606 = vpack.c.b16 %v3486, %v3484
        %v3607 = vpack.c.b16 %v3487, %v3485
        %v3608 = vpack.c.b16 %v3490, %v3488
        %v3609 = vpack.c.b16 %v3491, %v3489
        %v3610 = vpack.c.b16 %v3494, %v3492
        %v3611 = vpack.c.b16 %v3495, %v3493
        %v3612 = vpack.c.b16 %v3498, %v3496
        %v3613 = vpack.c.b16 %v3499, %v3497
        %v3614 = vpack.c.b16 %v3502, %v3500
        %v3615 = vpack.c.b16 %v3503, %v3501
        %v3616 = vpack.c.b16 %v3506, %v3504
        %v3617 = vpack.c.b16 %v3507, %v3505
        %v3618 = vpack.c.b16 %v3510, %v3508
        %v3619 = vpack.c.b16 %v3511, %v3509
        %v3620 = vpack.c.b16 %v3514, %v3512
        %v3621 = vpack.c.b16 %v3515, %v3513
        %v3622 = vpack.c.b16 %v3518, %v3516
        %v3623 = vpack.c.b16 %v3519, %v3517
        %v3624 = vpack.c.b16 %v3522, %v3520
        %v3625 = vpack.c.b16 %v3523, %v3521
        %v3626 = vpack.c.b16 %v3526, %v3524
        %v3627 = vpack.c.b16 %v3527, %v3525
        %v3628 = vpack.c.b16 %v3530, %v3528
        %v3629 = vpack.c.b16 %v3531, %v3529
        %v3630 = vpack.c.b16 %v3534, %v3532
        %v3631 = vpack.c.b16 %v3535, %v3533
        %v3632 = vpack.c.b16 %v3538, %v3536
        %v3633 = vpack.c.b16 %v3539, %v3537
        %v3634 = vpack.c.b16 %v3542, %v3540
        %v3635 = vpack.c.b16 %v3543, %v3541
        %v3636 = vpack.c.b16 %v3546, %v3544
        %v3637 = vpack.c.b16 %v3547, %v3545
        %v3638 = vpack.c.b16 %v3550, %v3548
        %v3639 = vpack.c.b16 %v3551, %v3549
        %v3640 = vpack.c.b16 %v3554, %v3552
        %v3641 = vpack.c.b16 %v3555, %v3553
        %v3642 = vpack.c.b16 %v3558, %v3556
        %v3643 = vpack.c.b16 %v3559, %v3557
        %v3729 = vsel %vm1275, %v3216, 0
        %v3732 = vsel %vm1275, %v3222, 0
        %3734 = vmatpush.bf16.msra.mxu0 %v3574
        %3735 = vmatpush.bf16.msra.mxu0 %v3572
        %3736 = vmatpush.bf16.msra.mxu0 %v3570
        %3737 = vmatpush.bf16.msra.mxu0 %v3568
        %3738 = vmatpush.bf16.msra.mxu0 %v3566
        %3739 = vmatpush.bf16.msra.mxu0 %v3564
        %3740 = vmatpush.bf16.msra.mxu0 %v3562
        %3741 = vmatpush.bf16.msra.mxu0 %v3560
        %3742 = vmatmul.bf16.gmra.mxu0 %v3211
        %v3743 = vpop.f32.mrf.mxu0
        %v3744 = vadd.f32 0.0, %v3743
        %v3745 = vpop.f32.mrf.mxu0
        %v3746 = vadd.f32 0.0, %v3745
        %3747 = vmatmul.bf16.gmra.mxu0 %v3217
        %v3748 = vpop.f32.mrf.mxu0
        %v3749 = vadd.f32 0.0, %v3748
        %v3750 = vpop.f32.mrf.mxu0
        %v3751 = vadd.f32 0.0, %v3750
        %3752 = vdwg.mxu0
        %3753 = vmatpush.bf16.msra.mxu0 %v3590
        %3754 = vmatpush.bf16.msra.mxu0 %v3588
        %3755 = vmatpush.bf16.msra.mxu0 %v3586
        %3756 = vmatpush.bf16.msra.mxu0 %v3584
        %3757 = vmatpush.bf16.msra.mxu0 %v3582
        %3758 = vmatpush.bf16.msra.mxu0 %v3580
        %3759 = vmatpush.bf16.msra.mxu0 %v3578
        %3760 = vmatpush.bf16.msra.mxu0 %v3576
        %3761 = vmatmul.bf16.gmra.mxu0 %v3212
        %v3762 = vpop.f32.mrf.mxu0
        %v3763 = vadd.f32 %v3744, %v3762
        %v3764 = vpop.f32.mrf.mxu0
        %v3765 = vadd.f32 %v3746, %v3764
        %3766 = vmatmul.bf16.gmra.mxu0 %v3218
        %v3767 = vpop.f32.mrf.mxu0
        %v3768 = vadd.f32 %v3749, %v3767
        %v3769 = vpop.f32.mrf.mxu0
        %v3770 = vadd.f32 %v3751, %v3769
        %3771 = vdwg.mxu0
        %3772 = vmatpush.bf16.msra.mxu0 %v3606
        %3773 = vmatpush.bf16.msra.mxu0 %v3604
        %3774 = vmatpush.bf16.msra.mxu0 %v3602
        %3775 = vmatpush.bf16.msra.mxu0 %v3600
        %3776 = vmatpush.bf16.msra.mxu0 %v3598
        %3777 = vmatpush.bf16.msra.mxu0 %v3596
        %3778 = vmatpush.bf16.msra.mxu0 %v3594
        %3779 = vmatpush.bf16.msra.mxu0 %v3592
        %3780 = vmatmul.bf16.gmra.mxu0 %v3213
        %v3781 = vpop.f32.mrf.mxu0
        %v3782 = vadd.f32 %v3763, %v3781
        %v3783 = vpop.f32.mrf.mxu0
        %v3784 = vadd.f32 %v3765, %v3783
        %3785 = vmatmul.bf16.gmra.mxu0 %v3219
        %v3786 = vpop.f32.mrf.mxu0
        %v3787 = vadd.f32 %v3768, %v3786
        %v3788 = vpop.f32.mrf.mxu0
        %v3789 = vadd.f32 %v3770, %v3788
        %3790 = vdwg.mxu0
        %3791 = vmatpush.bf16.msra.mxu0 %v3622
        %3792 = vmatpush.bf16.msra.mxu0 %v3620
        %3793 = vmatpush.bf16.msra.mxu0 %v3618
        %3794 = vmatpush.bf16.msra.mxu0 %v3616
        %3795 = vmatpush.bf16.msra.mxu0 %v3614
        %3796 = vmatpush.bf16.msra.mxu0 %v3612
        %3797 = vmatpush.bf16.msra.mxu0 %v3610
        %3798 = vmatpush.bf16.msra.mxu0 %v3608
        %3799 = vmatmul.bf16.gmra.mxu0 %v3214
        %v3800 = vpop.f32.mrf.mxu0
        %v3801 = vadd.f32 %v3782, %v3800
        %v3802 = vpop.f32.mrf.mxu0
        %v3803 = vadd.f32 %v3784, %v3802
        %3804 = vmatmul.bf16.gmra.mxu0 %v3220
        %v3805 = vpop.f32.mrf.mxu0
        %v3806 = vadd.f32 %v3787, %v3805
        %v3807 = vpop.f32.mrf.mxu0
        %v3808 = vadd.f32 %v3789, %v3807
        %3809 = vdwg.mxu0
        %3810 = vmatpush.bf16.msra.mxu0 %v3638
        %3811 = vmatpush.bf16.msra.mxu0 %v3636
        %3812 = vmatpush.bf16.msra.mxu0 %v3634
        %3813 = vmatpush.bf16.msra.mxu0 %v3632
        %3814 = vmatpush.bf16.msra.mxu0 %v3630
        %3815 = vmatpush.bf16.msra.mxu0 %v3628
        %3816 = vmatpush.bf16.msra.mxu0 %v3626
        %3817 = vmatpush.bf16.msra.mxu0 %v3624
        %3818 = vmatmul.bf16.gmra.mxu0 %v3215
        %v3819 = vpop.f32.mrf.mxu0
        %v3820 = vadd.f32 %v3801, %v3819
        %v3821 = vpop.f32.mrf.mxu0
        %v3822 = vadd.f32 %v3803, %v3821
        %3823 = vmatmul.bf16.gmra.mxu0 %v3221
        %v3824 = vpop.f32.mrf.mxu0
        %v3825 = vadd.f32 %v3806, %v3824
        %v3826 = vpop.f32.mrf.mxu0
        %v3827 = vadd.f32 %v3808, %v3826
        %3828 = vdwg.mxu0
        %3829 = vmatpush.bf16.msra.mxu0 0
        %3830 = vmatpush.bf16.msra.mxu0 0
        %3831 = vmatpush.bf16.msra.mxu0 0
        %3832 = vmatpush.bf16.msra.mxu0 0
        %3833 = vmatpush.bf16.msra.mxu0 0
        %3834 = vmatpush.bf16.msra.mxu0 0
        %3835 = vmatpush.bf16.msra.mxu0 %v3642
        %3836 = vmatpush.bf16.msra.mxu0 %v3640
        %3837 = vmatmul.bf16.gmra.mxu0 %v3729
        %v3838 = vpop.f32.mrf.mxu0
        %v3839 = vadd.f32 %v3820, %v3838
        %v3840 = vpop.f32.mrf.mxu0
        %v3841 = vadd.f32 %v3822, %v3840
        %3842 = vmatmul.bf16.gmra.mxu0 %v3732
        %v3843 = vpop.f32.mrf.mxu0
        %v3844 = vadd.f32 %v3825, %v3843
        %v3845 = vpop.f32.mrf.mxu0
        %v3846 = vadd.f32 %v3827, %v3845
        %3847 = vdwg.mxu0
        %3848 = vmatpush.bf16.msra.mxu0 %v3575
        %3849 = vmatpush.bf16.msra.mxu0 %v3573
        %3850 = vmatpush.bf16.msra.mxu0 %v3571
        %3851 = vmatpush.bf16.msra.mxu0 %v3569
        %3852 = vmatpush.bf16.msra.mxu0 %v3567
        %3853 = vmatpush.bf16.msra.mxu0 %v3565
        %3854 = vmatpush.bf16.msra.mxu0 %v3563
        %3855 = vmatpush.bf16.msra.mxu0 %v3561
        %3856 = vmatmul.bf16.gmra.mxu0 %v3211
        %v3857 = vpop.f32.mrf.mxu0
        %v3858 = vadd.f32 0.0, %v3857
        %v3859 = vpop.f32.mrf.mxu0
        %v3860 = vadd.f32 0.0, %v3859
        %3861 = vmatmul.bf16.gmra.mxu0 %v3217
        %v3862 = vpop.f32.mrf.mxu0
        %v3863 = vadd.f32 0.0, %v3862
        %v3864 = vpop.f32.mrf.mxu0
        %v3865 = vadd.f32 0.0, %v3864
        %3866 = vdwg.mxu0
        %3867 = vmatpush.bf16.msra.mxu0 %v3591
        %3868 = vmatpush.bf16.msra.mxu0 %v3589
        %3869 = vmatpush.bf16.msra.mxu0 %v3587
        %3870 = vmatpush.bf16.msra.mxu0 %v3585
        %3871 = vmatpush.bf16.msra.mxu0 %v3583
        %3872 = vmatpush.bf16.msra.mxu0 %v3581
        %3873 = vmatpush.bf16.msra.mxu0 %v3579
        %3874 = vmatpush.bf16.msra.mxu0 %v3577
        %3875 = vmatmul.bf16.gmra.mxu0 %v3212
        %v3876 = vpop.f32.mrf.mxu0
        %v3877 = vadd.f32 %v3858, %v3876
        %v3878 = vpop.f32.mrf.mxu0
        %v3879 = vadd.f32 %v3860, %v3878
        %3880 = vmatmul.bf16.gmra.mxu0 %v3218
        %v3881 = vpop.f32.mrf.mxu0
        %v3882 = vadd.f32 %v3863, %v3881
        %v3883 = vpop.f32.mrf.mxu0
        %v3884 = vadd.f32 %v3865, %v3883
        %3885 = vdwg.mxu0
        %3886 = vmatpush.bf16.msra.mxu0 %v3607
        %3887 = vmatpush.bf16.msra.mxu0 %v3605
        %3888 = vmatpush.bf16.msra.mxu0 %v3603
        %3889 = vmatpush.bf16.msra.mxu0 %v3601
        %3890 = vmatpush.bf16.msra.mxu0 %v3599
        %3891 = vmatpush.bf16.msra.mxu0 %v3597
        %3892 = vmatpush.bf16.msra.mxu0 %v3595
        %3893 = vmatpush.bf16.msra.mxu0 %v3593
        %3894 = vmatmul.bf16.gmra.mxu0 %v3213
        %v3895 = vpop.f32.mrf.mxu0
        %v3896 = vadd.f32 %v3877, %v3895
        %v3897 = vpop.f32.mrf.mxu0
        %v3898 = vadd.f32 %v3879, %v3897
        %3899 = vmatmul.bf16.gmra.mxu0 %v3219
        %v3900 = vpop.f32.mrf.mxu0
        %v3901 = vadd.f32 %v3882, %v3900
        %v3902 = vpop.f32.mrf.mxu0
        %v3903 = vadd.f32 %v3884, %v3902
        %3904 = vdwg.mxu0
        %3905 = vmatpush.bf16.msra.mxu0 %v3623
        %3906 = vmatpush.bf16.msra.mxu0 %v3621
        %3907 = vmatpush.bf16.msra.mxu0 %v3619
        %3908 = vmatpush.bf16.msra.mxu0 %v3617
        %3909 = vmatpush.bf16.msra.mxu0 %v3615
        %3910 = vmatpush.bf16.msra.mxu0 %v3613
        %3911 = vmatpush.bf16.msra.mxu0 %v3611
        %3912 = vmatpush.bf16.msra.mxu0 %v3609
        %3913 = vmatmul.bf16.gmra.mxu0 %v3214
        %v3914 = vpop.f32.mrf.mxu0
        %v3915 = vadd.f32 %v3896, %v3914
        %v3916 = vpop.f32.mrf.mxu0
        %v3917 = vadd.f32 %v3898, %v3916
        %3918 = vmatmul.bf16.gmra.mxu0 %v3220
        %v3919 = vpop.f32.mrf.mxu0
        %v3920 = vadd.f32 %v3901, %v3919
        %v3921 = vpop.f32.mrf.mxu0
        %v3922 = vadd.f32 %v3903, %v3921
        %3923 = vdwg.mxu0
        %3924 = vmatpush.bf16.msra.mxu0 %v3639
        %3925 = vmatpush.bf16.msra.mxu0 %v3637
        %3926 = vmatpush.bf16.msra.mxu0 %v3635
        %3927 = vmatpush.bf16.msra.mxu0 %v3633
        %3928 = vmatpush.bf16.msra.mxu0 %v3631
        %3929 = vmatpush.bf16.msra.mxu0 %v3629
        %3930 = vmatpush.bf16.msra.mxu0 %v3627
        %3931 = vmatpush.bf16.msra.mxu0 %v3625
        %3932 = vmatmul.bf16.gmra.mxu0 %v3215
        %v3933 = vpop.f32.mrf.mxu0
        %v3934 = vadd.f32 %v3915, %v3933
        %v3935 = vpop.f32.mrf.mxu0
        %v3936 = vadd.f32 %v3917, %v3935
        %3937 = vmatmul.bf16.gmra.mxu0 %v3221
        %v3938 = vpop.f32.mrf.mxu0
        %v3939 = vadd.f32 %v3920, %v3938
        %v3940 = vpop.f32.mrf.mxu0
        %v3941 = vadd.f32 %v3922, %v3940
        %3942 = vdwg.mxu0
        %3943 = vmatpush.bf16.msra.mxu0 0
        %3944 = vmatpush.bf16.msra.mxu0 0
        %3945 = vmatpush.bf16.msra.mxu0 0
        %3946 = vmatpush.bf16.msra.mxu0 0
        %3947 = vmatpush.bf16.msra.mxu0 0
        %3948 = vmatpush.bf16.msra.mxu0 0
        %3949 = vmatpush.bf16.msra.mxu0 %v3643
        %3950 = vmatpush.bf16.msra.mxu0 %v3641
        %3951 = vmatmul.bf16.gmra.mxu0 %v3729
        %v3952 = vpop.f32.mrf.mxu0
        %v3953 = vadd.f32 %v3934, %v3952
        %v3954 = vpop.f32.mrf.mxu0
        %v3955 = vadd.f32 %v3936, %v3954
        %3956 = vmatmul.bf16.gmra.mxu0 %v3732
        %v3957 = vpop.f32.mrf.mxu0
        %v3958 = vadd.f32 %v3939, %v3957
        %v3959 = vpop.f32.mrf.mxu0
        %v3960 = vadd.f32 %v3941, %v3959
        %3961 = vdwg.mxu0
        %v3962 = vadd.f32 %v2913, %v3839
        %v3963 = vadd.f32 %v3027, %v3953
        %v3964 = vadd.f32 %v2915, %v3841
        %v3965 = vadd.f32 %v3029, %v3955
        %v3966 = vadd.f32 %v2918, %v3844
        %v3967 = vadd.f32 %v3032, %v3958
        %v3968 = vadd.f32 %v2920, %v3846
        %v3969 = vadd.f32 %v3034, %v3960
        %v3970 = vld [vmem:[%s190] sm:$0x3]
        %v3972 = vperm.slane %v3970, 0
        %v3973 = vperm.slane %v3970, 1
        %v3976 = vadd.f32 %v3962, %v3972
        %v3977 = vadd.f32 %v3963, %v3973
        %v3978 = vadd.f32 %v3964, %v3972
        %v3979 = vadd.f32 %v3965, %v3973
        %v3980 = vadd.f32 %v3966, %v3972
        %v3981 = vadd.f32 %v3967, %v3973
        %v3982 = vadd.f32 %v3968, %v3972
        %v3983 = vadd.f32 %v3969, %v3973
        %v3984 = vmax.f32 %v3976, 0.0
        %v3985 = vmax.f32 %v3977, 0.0
        %v3986 = vmax.f32 %v3978, 0.0
        %v3987 = vmax.f32 %v3979, 0.0
        %v3988 = vmax.f32 %v3980, 0.0
        %v3989 = vmax.f32 %v3981, 0.0
        %v3990 = vmax.f32 %v3982, 0.0
        %v3991 = vmax.f32 %v3983, 0.0
        %3992 = vst [vmem:[%s186] sm:$0xff] %v3984
        %3993 = vst [vmem:[%s186 + $0x8] sm:$0xff] %v3985
        %3994 = vst [vmem:[%s186 + $0x10] sm:$0xff] %v3986
        %3995 = vst [vmem:[%s186 + $0x18] sm:$0xff] %v3987
        %3996 = vst [vmem:[%s186 + $0x20] sm:$0xff] %v3988
        %3997 = vst [vmem:[%s186 + $0x28] sm:$0xff] %v3989
        %3998 = vst [vmem:[%s186 + $0x30] sm:$0xff] %v3990
        %3999 = vst [vmem:[%s186 + $0x38] sm:$0xff] %v3991
        %s4000 = sand.u32 %s113, 1
        %s4001 = sand.u32 %s113, 1
        %s4002 = smul.addr %s4001, 64
        %s4003 = scalar_lea.vmem [#allocation5], %s4002
        // Predicated region
        $region56: #{inconv_forward.1} parent=35 // pred_check
          %p4004 = pneg %p123
        $region57: #{inconv_forward.1} parent=35 // pred_check_branch
          %4006 = sbr.rel (%p4004) target = $region59
        $region58: #{inconv_forward.1} parent=35 // pred_region
          %s4007 = smul.u32 2, %s16
          %s4008 = smul.addr %s4007, 8
          %s4009 = scalar_lea.vmem %s5, %s4008
          // Predicated region
          $region60: #{inconv_forward.1} parent=58 // pred_check
            _
          $region61: #{inconv_forward.1} parent=58 // pred_check_branch
            %4011 = sbr.rel (0) target = $region63
          $region62: #{inconv_forward.1} parent=58 // pred_region
            // Predicated region
            $region64: #{inconv_forward.1} parent=62 // pred_check
              _
            $region65: #{inconv_forward.1} parent=62 // pred_check_branch
              %4013 = sbr.rel (0) target = $region67
            $region66: #{inconv_forward.1} parent=62 // pred_region
              loop: start=0, step=1, limit=1
              $region68: #{inconv_forward.1} parent=66 // loop_pre_header
                _
              $region69: #{inconv_forward.1} parent=66 // loop_header
                %s4015 = sphi 0, %s4019
                %p4016 = scmp.ge.s32.totalorder %s4015, 1
                %s4020 = sphi %s4003, %s4003
                %s4021 = sphi %s4009, %s4009
              $region70: #{inconv_forward.1} parent=66 // loop_header_branch
                %4018 = sbr.rel (%p4016) target = $region74
              $region71: #{inconv_forward.1} parent=66 // loop_body
                %v4022 = vld [vmem:[%s4020] sm:$0xff]
                %4023 = vst [vmem:[%s4021] sm:$0xff] %v4022
                %v4024 = vld [vmem:[%s4020 + $0x8] sm:$0xff]
                %4025 = vst [vmem:[%s4021 + $0x8] sm:$0xff] %v4024
                %v4026 = vld [vmem:[%s4020 + $0x10] sm:$0xff]
                %4027 = vst [vmem:[%s4021 + $0x20] sm:$0xff] %v4026
                %v4028 = vld [vmem:[%s4020 + $0x18] sm:$0xff]
                %4029 = vst [vmem:[%s4021 + $0x28] sm:$0xff] %v4028
                %v4030 = vld [vmem:[%s4020 + $0x20] sm:$0xff]
                %4031 = vst [vmem:[%s4021 + $0x40] sm:$0xff] %v4030
                %v4032 = vld [vmem:[%s4020 + $0x28] sm:$0xff]
                %4033 = vst [vmem:[%s4021 + $0x48] sm:$0xff] %v4032
                %v4034 = vld [vmem:[%s4020 + $0x30] sm:$0xff]
                %4035 = vst [vmem:[%s4021 + $0x60] sm:$0xff] %v4034
                %v4036 = vld [vmem:[%s4020 + $0x38] sm:$0xff]
                %4037 = vst [vmem:[%s4021 + $0x68] sm:$0xff] %v4036
              $region72: #{inconv_forward.1} parent=66 // loop_footer
                %s4019 = sadd.s32 1, %s4015
              $region73: #{inconv_forward.1} parent=66 // loop_footer_branch
                %4014 = sbr.rel target = $region69
              $region74: #{inconv_forward.1} parent=66 // loop_exit
                _
            $region67: #{inconv_forward.1} parent=62 // pred_fallthru
              _
            // Predicated region
            $region75: #{inconv_forward.1} parent=62 // pred_check
              _
            $region76: #{inconv_forward.1} parent=62 // pred_check_branch
              %4039 = sbr.rel target = $region78
            $region77: #{inconv_forward.1} parent=62 // pred_region
              _
            $region78: #{inconv_forward.1} parent=62 // pred_fallthru
              _
          $region63: #{inconv_forward.1} parent=58 // pred_fallthru
            _
          %4040 = vnop
        $region59: #{inconv_forward.1} parent=35 // pred_fallthru
          _
      $region36: #{inconv_forward.1} parent=5 // pred_fallthru
        _
      %p4041 = scmp.le.s32.totalorder 2, %s11
      // Predicated region
      $region79: #{inconv_forward.1} parent=5 // pred_check
        %p4042 = pneg %p4041
      $region80: #{inconv_forward.1} parent=5 // pred_check_branch
        %4044 = sbr.rel (%p4042) target = $region82
      $region81: #{inconv_forward.1} parent=5 // pred_region
        %s4045 = ssub.s32 %s11, 2
        // Predicated region
        $region83: #{inconv_forward.1} parent=81 // pred_check
          %p4046 = pneg %p129
        $region84: #{inconv_forward.1} parent=81 // pred_check_branch
          %4048 = sbr.rel (%p4046) target = $region86
        $region85: #{inconv_forward.1} parent=81 // pred_region
          %s4049 = sand.u32 %s114, 1
          %s4050 = sand.u32 %s114, 1
          %s4051 = smul.addr %s4050, 64
          %s4052 = scalar_lea.vmem [#allocation5], %s4051
        $region86: #{inconv_forward.1} parent=81 // pred_fallthru
          _
      $region82: #{inconv_forward.1} parent=5 // pred_fallthru
        _
    $region6: #{inconv_forward.1} parent=1 // loop_footer
      %s15 = sadd.s32 1, %s11
    $region7: #{inconv_forward.1} parent=1 // loop_footer_branch
      %10 = sbr.rel target = $region3
    $region8: #{inconv_forward.1} parent=1 // loop_exit
      _
  %4053 = vsyncmov [#allocation4]
  %s4054 = vpop.sfrf %4053
  %p4055 = scmp.eq.s32.totalorder %s4054, 0
  %p4056 = pneg %p4055
  %4058 = shalt.err (%p4056)

</llo_original>
